<compile_context>
chip_gen: v5e
topology: v5e:2x2
jax: 0.10.0
libtpu: 0.0.40
codegen_flags: <defaults>
</compile_context>

<pallas_src>
import functools
import numpy as np
import jax
import jax.numpy as jnp
from jax import lax
from jax.experimental import pallas as pl
from jax.experimental.pallas import tpu as pltpu


def mrconv_att_kernel(x_ref,     # (1, C, N)        bf16 per-batch feature slab (resident over n-blocks)
                      idx_ref,   # (1, 1, 2, K*TN)  int32: [...,0,:]=centres (edge_index[1]), [...,1,:]=neighbours
                      att_ref,   # (H, C)           bf16 attention parameter (transposed)
                      w_ref,     # (Cout, 2C)       bf16 fused 1x1 conv weight
                      b_ref,     # (Cout, 1)        f32 conv bias
                      o_ref,     # (1, Cout, TN)    f32 lane-dense output block
                      diff_scr,  # (C, K*TN)        f32 VMEM scratch holding raw neighbour differences
                      *, kg):    # static group size for the batched gather/att dots
    C, N = x_ref.shape[1], x_ref.shape[2]
    H = att_ref.shape[0]
    TN = o_ref.shape[2]
    K = idx_ref.shape[3] // TN

    xb = x_ref[0]            # (C, N)  bf16
    att = att_ref[...]       # (H, C)  bf16

    # ---- pass 1: grouped difference-gather + attention logits ---------------
    # TODO(synk): for very large N replace the one-hot matmul gather with a
    # linear-in-N row gather (x stored (B, N, C), scalar-prefetched indices,
    # per-row DMA / dynamic gather); the kg-grouping below only bounds its VMEM.
    iota_n = lax.broadcasted_iota(jnp.int32, (N, kg * TN), 0)   # hoisted, reused per group
    lgt_parts = []
    for k0 in range(0, K, kg):                                  # static, unrolled
        k1 = min(K, k0 + kg)
        L = (k1 - k0) * TN
        lo = k0 * TN
        ii = idx_ref[0, 0, 0:1, lo:lo + L]                      # (1, L) centre indices
        jj = idx_ref[0, 0, 1:2, lo:lo + L]                      # (1, L) neighbour indices
        io = iota_n if L == kg * TN else iota_n[:, :L]
        # difference one-hot in bf16 (values 0/+1/-1 exact; i == j -> 0)
        oh = (io == jj).astype(jnp.bfloat16) - (io == ii).astype(jnp.bfloat16)   # (N, L)
        d = jnp.dot(xb, oh, preferred_element_type=jnp.float32)                  # (C, L) = x_j - x_i
        diff_scr[:, lo:lo + L] = d
        xd = jnp.where(d >= 0.0, d, 0.2 * d).astype(jnp.bfloat16)                # leaky_relu(0.2)
        lgt_parts.append(jnp.dot(att, xd, preferred_element_type=jnp.float32))   # (H, L)
    lgt = lgt_parts[0] if len(lgt_parts) == 1 else jnp.concatenate(lgt_parts, axis=1)  # (H, K*TN)

    # ---- exact softmax over the K neighbour slots (tiny (H, TN) tensors) -----
    m = lgt[:, 0:TN]
    for k in range(1, K):
        m = jnp.maximum(m, lgt[:, k * TN:(k + 1) * TN])
    exps = [jnp.exp(lgt[:, k * TN:(k + 1) * TN] - m) for k in range(K)]
    s = exps[0]
    for k in range(1, K):
        s = s + exps[k]
    inv_s = 1.0 / s                      # exact reciprocal: (H, TN) is tiny, restores f32 softmax accuracy
    inv_h = float(1.0 / H)
    # per-slot attention weight, already averaged over heads: (1, TN) each
    wk = [jnp.sum(e * inv_s, axis=0, keepdims=True) * inv_h for e in exps]

    # ---- pass 2: streamed weighted max over k (one (C, TN) chunk live) -------
    x_max = diff_scr[:, 0:TN] * wk[0]
    for k in range(1, K):
        x_max = jnp.maximum(x_max, diff_scr[:, k * TN:(k + 1) * TN] * wk[k])

    # ---- fused 1x1 conv on [x ; x_max] (bias, act=None, norm=None) -----------
    n0 = pl.multiple_of(pl.program_id(1) * TN, TN)
    x_c = x_ref[0, :, pl.ds(n0, TN)]                                    # (C, TN) bf16, from resident slab
    feat = jnp.concatenate([x_c, x_max.astype(jnp.bfloat16)], axis=0)   # (2C, TN) bf16
    out = jnp.dot(w_ref[...], feat, preferred_element_type=jnp.float32) + b_ref[...]
    o_ref[0] = out.astype(o_ref.dtype)


def _pick_block_n(n):
    # TN=256 is safe on every generation (incl. 64 MiB-VMEM v7x); fall back to
    # 128 / 512 / full N depending on divisibility.
    for tn in (256, 128, 512):
        if n % tn == 0:
            return tn
    return n


def mrconv_att(x, edge_index, att, conv_w, conv_b, *, block_n=None):
    """Pallas implementation of MRConvAtt.forward (y=None path).

    x:          (B, C, N, 1) float32
    edge_index: (2, B, N, K) int32
    att:        (1, C, H, 1, 1) float32
    conv_w:     (Cout, 2C, 1, 1) float32
    conv_b:     (Cout,) float32
    returns     (B, Cout, N, 1) float32
    """
    B, C, N, _ = x.shape
    K = edge_index.shape[-1]
    H = att.shape[2]
    Cout = conv_w.shape[0]

    TN = _pick_block_n(N) if block_n is None else block_n
    assert N % TN == 0, (N, TN)
    NB = N // TN

    # group size for the batched gather/att matmuls: keep the transient
    # (N, kg*TN) bf16 difference one-hot around <=4 MiB (v7x VMEM headroom)
    kg = int(max(1, min(K, (4 << 20) // max(1, 2 * N * TN))))

    # ---- layout plumbing (plain JAX) -----------------------------------------
    x3 = x[..., 0].astype(jnp.bfloat16)                                 # (B, C, N) bf16 slab
    # fused edge tensor, lane-dense per node-block: (B, NB, 2, K*TN),
    # lanes ordered k-major then node-within-block
    e = jnp.stack([edge_index[1], edge_index[0]], axis=1).astype(jnp.int32)   # (B, 2, N, K)
    e = e.reshape(B, 2, NB, TN, K)
    e = jnp.transpose(e, (0, 2, 1, 4, 3)).reshape(B, NB, 2, K * TN)
    att_hc = jnp.transpose(att[0, :, :, 0, 0], (1, 0)).astype(jnp.bfloat16)   # (H, C)
    w2d = conv_w[:, :, 0, 0].astype(jnp.bfloat16)                       # (Cout, 2C), single fused dot
    b2d = conv_b.reshape(Cout, 1).astype(jnp.float32)

    # ---- VMEM budget: double-buffered blocks + scratch + transients ----------
    need = (2 * C * N * 2                       # x slab (bf16), double-buffered
            + 2 * 2 * K * TN * 4                # edge block
            + 2 * (H * C * 2 + Cout * 2 * C * 2 + Cout * 4)   # params
            + 2 * Cout * TN * 4                 # output block
            + C * K * TN * 4                    # diff scratch
            + 3 * N * kg * TN * 2               # one-hot transient (+ compare temps)
            + 8 * K * TN * 4)                   # logits / softmax temporaries
    vmem_limit = int(min(48 << 20, max(32 << 20, 2 * need)))   # <=48 MiB keeps v7x headroom

    flops = int(B * NB * (2 * C * N * K * TN + 2 * H * C * K * TN
                          + 2 * Cout * 2 * C * TN))
    cost = pl.CostEstimate(
        flops=flops, transcendentals=int(B * N * H * K),
        bytes_accessed=int(x3.size * 2 + e.size * 4 + att_hc.size * 2
                           + w2d.size * 2 + b2d.size * 4 + B * Cout * N * 4))

    out = pl.pallas_call(
        functools.partial(mrconv_att_kernel, kg=kg),
        out_shape=jax.ShapeDtypeStruct((B, Cout, N), jnp.float32),
        grid_spec=pltpu.PrefetchScalarGridSpec(
            num_scalar_prefetch=0,
            grid=(B, NB),
            in_specs=[
                # TODO(synk): pipeline_mode=pl.Buffered(1) on the resident x
                # slab / constant param specs would halve their double-buffer
                # footprint; left at defaults for compile safety.
                pl.BlockSpec((1, C, N), lambda b, n: (b, 0, 0)),            # x slab (per batch)
                pl.BlockSpec((1, 1, 2, K * TN), lambda b, n: (b, n, 0, 0)),  # fused edge indices
                pl.BlockSpec((H, C), lambda b, n: (0, 0)),                  # att
                pl.BlockSpec((Cout, 2 * C), lambda b, n: (0, 0)),           # fused conv weight
                pl.BlockSpec((Cout, 1), lambda b, n: (0, 0)),               # bias
            ],
            out_specs=pl.BlockSpec((1, Cout, TN), lambda b, n: (b, 0, n)),
            scratch_shapes=[pltpu.VMEM((C, K * TN), jnp.float32)],
        ),
        compiler_params=pltpu.CompilerParams(
            # b "parallel": shards batches over v7x's two TensorCores while the
            # per-batch x slab stays resident; n sequential within a batch.
            dimension_semantics=("parallel", "arbitrary"),
            vmem_limit_bytes=vmem_limit),
        cost_estimate=cost,
    )(x3, e, att_hc, w2d, b2d)

    return out[..., None]                                               # (B, Cout, N, 1)


def mrconv_att_ref(x, edge_index, att, conv_w, conv_b):
    """Pure-JAX f32 reference matching the PyTorch forward."""
    B, C, N, _ = x.shape
    x3 = x[..., 0]                                        # (B, C, N)

    def gather(idx):                                      # idx: (B, N, K) -> (B, C, N, K)
        return jnp.take_along_axis(x3[:, :, :, None], idx[:, None, :, :], axis=2)

    x_i = gather(edge_index[1])
    x_j = gather(edge_index[0])
    diff = x_j - x_i
    x_d = jnp.where(diff >= 0, diff, 0.2 * diff)
    att3 = att[0, :, :, 0, 0]                             # (C, H)
    alpha = jnp.einsum('bcnk,ch->bhnk', x_d, att3)
    alpha = jax.nn.softmax(alpha, axis=-1)
    x_m = jnp.max(jnp.mean(diff[:, None] * alpha[:, :, None], axis=1),
                  axis=-1, keepdims=True)                 # (B, C, N, 1)
    feat = jnp.concatenate([x, x_m], axis=1)              # (B, 2C, N, 1)
    out = jnp.einsum('oc,bcn->bon', conv_w[:, :, 0, 0], feat[..., 0]) \
        + conv_b[None, :, None]
    return out[..., None]


if __name__ == "__main__":
    # small shapes consistent with the module's forward (N = 16x16 patches)
    B, C, Cout, N, K, H = 2, 16, 32, 256, 8, 2

    key = jax.random.PRNGKey(0)
    k1, k2, k3, k4, k5 = jax.random.split(key, 5)

    x = jax.random.normal(k1, (B, C, N, 1), jnp.float32)
    edge_index = jax.random.randint(k2, (2, B, N, K), 0, N, jnp.int32)

    # att: xavier_normal_ on (1, C, H, 1, 1)  (fan_in = C*H, fan_out = 1*H)
    att_std = float(np.sqrt(2.0 / (C * H + 1 * H)))
    att = att_std * jax.random.normal(k3, (1, C, H, 1, 1), jnp.float32)

    # BasicConv([2C, Cout], act=None, norm=None, bias=True): plain 1x1 Conv2d + bias.
    # TODO(synk): BasicConv norm/act variants are not reproduced (defaults assumed).
    conv_w = jax.random.normal(k4, (Cout, 2 * C, 1, 1), jnp.float32) / np.sqrt(2 * C)
    conv_b = 0.1 * jax.random.normal(k5, (Cout,), jnp.float32)

    # block_n=128 -> two node-blocks per batch, exercising the blocked grid
    out = jax.block_until_ready(
        mrconv_att(x, edge_index, att, conv_w, conv_b, block_n=128))
    ref = jax.block_until_ready(mrconv_att_ref(x, edge_index, att, conv_w, conv_b))

    assert out.shape == (B, Cout, N, 1), out.shape
    err = float(np.max(np.abs(np.asarray(out) - np.asarray(ref))))
    # Tolerance documents the bf16 MXU path (x / one-hot / weights fed to the
    # MXU in bf16 with f32 accumulation), per the perf review.
    assert np.allclose(np.asarray(out), np.asarray(ref), rtol=5e-2, atol=5e-2), err
    print("KERNEL_OK")
</pallas_src>

<mosaic_0001>
module attributes {stable_mosaic.version = 11 : i64} {
  func.func @mrconv_att_kernel(%arg0: i32, %arg1: i32, %arg2: memref<1x16x256xbf16, #tpu.memory_space<vmem>>, %arg3: memref<1x1x2x1024xi32, #tpu.memory_space<vmem>>, %arg4: memref<2x16xbf16, #tpu.memory_space<vmem>>, %arg5: memref<32x32xbf16, #tpu.memory_space<vmem>>, %arg6: memref<32x1xf32, #tpu.memory_space<vmem>>, %arg7: memref<1x32x128xf32, #tpu.memory_space<vmem>>, %arg8: memref<16x1024xf32, #tpu.memory_space<vmem>>) attributes {dimension_semantics = [#tpu.dimension_semantics<parallel>, #tpu.dimension_semantics<arbitrary>], iteration_bounds = array<i64: 2, 2>, scalar_prefetch = 0 : i64, scratch_operands = 1 : i64, tpu.core_type = #tpu.core_type<tc>, window_params = [{transform_indices = @transform_0, window_bounds = array<i64: 1, 16, 256>}, {transform_indices = @transform_1, window_bounds = array<i64: 1, 1, 2, 1024>}, {pipeline_mode = #tpu.pipeline_mode<synchronous>, transform_indices = @transform_2, window_bounds = array<i64: 2, 16>}, {pipeline_mode = #tpu.pipeline_mode<synchronous>, transform_indices = @transform_3, window_bounds = array<i64: 32, 32>}, {pipeline_mode = #tpu.pipeline_mode<synchronous>, transform_indices = @transform_4, window_bounds = array<i64: 32, 1>}, {transform_indices = @transform_5, window_bounds = array<i64: 1, 32, 128>}]} {
    %c0 = arith.constant 0 : index
    %c0_0 = arith.constant 0 : index
    %c0_1 = arith.constant 0 : index
    %0 = vector.load %arg2[%c0, %c0_0, %c0_1] : memref<1x16x256xbf16, #tpu.memory_space<vmem>>, vector<1x16x256xbf16>
    %1 = vector.shape_cast %0 : vector<1x16x256xbf16> to vector<16x256xbf16>
    %c0_2 = arith.constant 0 : index
    %c0_3 = arith.constant 0 : index
    %2 = vector.load %arg4[%c0_2, %c0_3] : memref<2x16xbf16, #tpu.memory_space<vmem>>, vector<2x16xbf16>
    %3 = tpu.iota {dimensions = array<i32: 0>} : vector<256x1024xi32>
    %c0_4 = arith.constant 0 : index
    %c0_5 = arith.constant 0 : index
    %c0_6 = arith.constant 0 : index
    %c0_7 = arith.constant 0 : index
    %4 = vector.load %arg3[%c0_4, %c0_5, %c0_6, %c0_7] : memref<1x1x2x1024xi32, #tpu.memory_space<vmem>>, vector<1x1x1x1024xi32>
    %5 = vector.shape_cast %4 : vector<1x1x1x1024xi32> to vector<1x1024xi32>
    %c0_8 = arith.constant 0 : index
    %c0_9 = arith.constant 0 : index
    %c1 = arith.constant 1 : index
    %c0_10 = arith.constant 0 : index
    %6 = vector.load %arg3[%c0_8, %c0_9, %c1, %c0_10] : memref<1x1x2x1024xi32, #tpu.memory_space<vmem>>, vector<1x1x1x1024xi32>
    %7 = vector.shape_cast %6 : vector<1x1x1x1024xi32> to vector<1x1024xi32>
    %8 = vector.broadcast %7 : vector<1x1024xi32> to vector<256x1024xi32>
    %9 = arith.cmpi eq, %3, %8 : vector<256x1024xi32>
    %10 = arith.extui %9 : vector<256x1024xi1> to vector<256x1024xi32>
    %11 = arith.sitofp %10 : vector<256x1024xi32> to vector<256x1024xf32>
    %12 = arith.truncf %11 : vector<256x1024xf32> to vector<256x1024xbf16>
    %13 = vector.broadcast %5 : vector<1x1024xi32> to vector<256x1024xi32>
    %14 = arith.cmpi eq, %3, %13 : vector<256x1024xi32>
    %15 = arith.extui %14 : vector<256x1024xi1> to vector<256x1024xi32>
    %16 = arith.sitofp %15 : vector<256x1024xi32> to vector<256x1024xf32>
    %17 = arith.truncf %16 : vector<256x1024xf32> to vector<256x1024xbf16>
    %18 = arith.subf %12, %17 : vector<256x1024xbf16>
    %cst = arith.constant dense<0.000000e+00> : vector<16x1024xf32>
    %19 = tpu.matmul %1, %18, %cst {dimension_numbers = #tpu.dot_dimension_numbers<[1], [0], [0], [1], [0, 0, 1, 1], [], []>} : vector<16x256xbf16>, vector<256x1024xbf16>, vector<16x1024xf32> -> vector<16x1024xf32>
    %c0_11 = arith.constant 0 : index
    %c0_12 = arith.constant 0 : index
    %20 = vector.load %arg8[%c0_11, %c0_12] : memref<16x1024xf32, #tpu.memory_space<vmem>>, vector<16x1024xf32>
    tpu.vector_store %arg8[%c0_11, %c0_12], %19 {strides = array<i32>} : memref<16x1024xf32, #tpu.memory_space<vmem>>, vector<16x1024xf32>,
    %cst_13 = arith.constant 0.000000e+00 : f32
    %21 = vector.broadcast %cst_13 : f32 to vector<16x1024xf32>
    %22 = arith.cmpf oge, %19, %21 : vector<16x1024xf32>
    %cst_14 = arith.constant 2.000000e-01 : f32
    %23 = vector.broadcast %cst_14 : f32 to vector<16x1024xf32>
    %24 = arith.mulf %23, %19 : vector<16x1024xf32>
    %25 = arith.select %22, %19, %24 : vector<16x1024xi1>, vector<16x1024xf32>
    %26 = arith.truncf %25 : vector<16x1024xf32> to vector<16x1024xbf16>
    %cst_15 = arith.constant dense<0.000000e+00> : vector<2x1024xf32>
    %27 = tpu.matmul %2, %26, %cst_15 {dimension_numbers = #tpu.dot_dimension_numbers<[1], [0], [0], [1], [0, 0, 1, 1], [], []>} : vector<2x16xbf16>, vector<16x1024xbf16>, vector<2x1024xf32> -> vector<2x1024xf32>
    %28 = vector.extract_strided_slice %27 {offsets = [0, 0], sizes = [2, 128], strides = [1, 1]} : vector<2x1024xf32> to vector<2x128xf32>
    %29 = vector.extract_strided_slice %27 {offsets = [0, 128], sizes = [2, 128], strides = [1, 1]} : vector<2x1024xf32> to vector<2x128xf32>
    %30 = arith.maximumf %28, %29 : vector<2x128xf32>
    %31 = vector.extract_strided_slice %27 {offsets = [0, 256], sizes = [2, 128], strides = [1, 1]} : vector<2x1024xf32> to vector<2x128xf32>
    %32 = arith.maximumf %30, %31 : vector<2x128xf32>
    %33 = vector.extract_strided_slice %27 {offsets = [0, 384], sizes = [2, 128], strides = [1, 1]} : vector<2x1024xf32> to vector<2x128xf32>
    %34 = arith.maximumf %32, %33 : vector<2x128xf32>
    %35 = vector.extract_strided_slice %27 {offsets = [0, 512], sizes = [2, 128], strides = [1, 1]} : vector<2x1024xf32> to vector<2x128xf32>
    %36 = arith.maximumf %34, %35 : vector<2x128xf32>
    %37 = vector.extract_strided_slice %27 {offsets = [0, 640], sizes = [2, 128], strides = [1, 1]} : vector<2x1024xf32> to vector<2x128xf32>
    %38 = arith.maximumf %36, %37 : vector<2x128xf32>
    %39 = vector.extract_strided_slice %27 {offsets = [0, 768], sizes = [2, 128], strides = [1, 1]} : vector<2x1024xf32> to vector<2x128xf32>
    %40 = arith.maximumf %38, %39 : vector<2x128xf32>
    %41 = vector.extract_strided_slice %27 {offsets = [0, 896], sizes = [2, 128], strides = [1, 1]} : vector<2x1024xf32> to vector<2x128xf32>
    %42 = arith.maximumf %40, %41 : vector<2x128xf32>
    %43 = vector.extract_strided_slice %27 {offsets = [0, 0], sizes = [2, 128], strides = [1, 1]} : vector<2x1024xf32> to vector<2x128xf32>
    %44 = arith.subf %43, %42 : vector<2x128xf32>
    %45 = math.exp %44 : vector<2x128xf32>
    %46 = vector.extract_strided_slice %27 {offsets = [0, 128], sizes = [2, 128], strides = [1, 1]} : vector<2x1024xf32> to vector<2x128xf32>
    %47 = arith.subf %46, %42 : vector<2x128xf32>
    %48 = math.exp %47 : vector<2x128xf32>
    %49 = vector.extract_strided_slice %27 {offsets = [0, 256], sizes = [2, 128], strides = [1, 1]} : vector<2x1024xf32> to vector<2x128xf32>
    %50 = arith.subf %49, %42 : vector<2x128xf32>
    %51 = math.exp %50 : vector<2x128xf32>
    %52 = vector.extract_strided_slice %27 {offsets = [0, 384], sizes = [2, 128], strides = [1, 1]} : vector<2x1024xf32> to vector<2x128xf32>
    %53 = arith.subf %52, %42 : vector<2x128xf32>
    %54 = math.exp %53 : vector<2x128xf32>
    %55 = vector.extract_strided_slice %27 {offsets = [0, 512], sizes = [2, 128], strides = [1, 1]} : vector<2x1024xf32> to vector<2x128xf32>
    %56 = arith.subf %55, %42 : vector<2x128xf32>
    %57 = math.exp %56 : vector<2x128xf32>
    %58 = vector.extract_strided_slice %27 {offsets = [0, 640], sizes = [2, 128], strides = [1, 1]} : vector<2x1024xf32> to vector<2x128xf32>
    %59 = arith.subf %58, %42 : vector<2x128xf32>
    %60 = math.exp %59 : vector<2x128xf32>
    %61 = vector.extract_strided_slice %27 {offsets = [0, 768], sizes = [2, 128], strides = [1, 1]} : vector<2x1024xf32> to vector<2x128xf32>
    %62 = arith.subf %61, %42 : vector<2x128xf32>
    %63 = math.exp %62 : vector<2x128xf32>
    %64 = vector.extract_strided_slice %27 {offsets = [0, 896], sizes = [2, 128], strides = [1, 1]} : vector<2x1024xf32> to vector<2x128xf32>
    %65 = arith.subf %64, %42 : vector<2x128xf32>
    %66 = math.exp %65 : vector<2x128xf32>
    %67 = arith.addf %45, %48 : vector<2x128xf32>
    %68 = arith.addf %67, %51 : vector<2x128xf32>
    %69 = arith.addf %68, %54 : vector<2x128xf32>
    %70 = arith.addf %69, %57 : vector<2x128xf32>
    %71 = arith.addf %70, %60 : vector<2x128xf32>
    %72 = arith.addf %71, %63 : vector<2x128xf32>
    %73 = arith.addf %72, %66 : vector<2x128xf32>
    %cst_16 = arith.constant 1.000000e+00 : f32
    %74 = vector.broadcast %cst_16 : f32 to vector<2x128xf32>
    %75 = arith.divf %74, %73 : vector<2x128xf32>
    %76 = arith.mulf %45, %75 : vector<2x128xf32>
    %cst_17 = arith.constant dense<0.000000e+00> : vector<128xf32>
    %77 = vector.multi_reduction <add>, %76, %cst_17 [0] : vector<2x128xf32> to vector<128xf32>
    %78 = vector.shape_cast %77 : vector<128xf32> to vector<1x128xf32>
    %cst_18 = arith.constant 5.000000e-01 : f32
    %79 = vector.broadcast %cst_18 : f32 to vector<1x128xf32>
    %80 = arith.mulf %78, %79 : vector<1x128xf32>
    %81 = arith.mulf %48, %75 : vector<2x128xf32>
    %cst_19 = arith.constant dense<0.000000e+00> : vector<128xf32>
    %82 = vector.multi_reduction <add>, %81, %cst_19 [0] : vector<2x128xf32> to vector<128xf32>
    %83 = vector.shape_cast %82 : vector<128xf32> to vector<1x128xf32>
    %cst_20 = arith.constant 5.000000e-01 : f32
    %84 = vector.broadcast %cst_20 : f32 to vector<1x128xf32>
    %85 = arith.mulf %83, %84 : vector<1x128xf32>
    %86 = arith.mulf %51, %75 : vector<2x128xf32>
    %cst_21 = arith.constant dense<0.000000e+00> : vector<128xf32>
    %87 = vector.multi_reduction <add>, %86, %cst_21 [0] : vector<2x128xf32> to vector<128xf32>
    %88 = vector.shape_cast %87 : vector<128xf32> to vector<1x128xf32>
    %cst_22 = arith.constant 5.000000e-01 : f32
    %89 = vector.broadcast %cst_22 : f32 to vector<1x128xf32>
    %90 = arith.mulf %88, %89 : vector<1x128xf32>
    %91 = arith.mulf %54, %75 : vector<2x128xf32>
    %cst_23 = arith.constant dense<0.000000e+00> : vector<128xf32>
    %92 = vector.multi_reduction <add>, %91, %cst_23 [0] : vector<2x128xf32> to vector<128xf32>
    %93 = vector.shape_cast %92 : vector<128xf32> to vector<1x128xf32>
    %cst_24 = arith.constant 5.000000e-01 : f32
    %94 = vector.broadcast %cst_24 : f32 to vector<1x128xf32>
    %95 = arith.mulf %93, %94 : vector<1x128xf32>
    %96 = arith.mulf %57, %75 : vector<2x128xf32>
    %cst_25 = arith.constant dense<0.000000e+00> : vector<128xf32>
    %97 = vector.multi_reduction <add>, %96, %cst_25 [0] : vector<2x128xf32> to vector<128xf32>
    %98 = vector.shape_cast %97 : vector<128xf32> to vector<1x128xf32>
    %cst_26 = arith.constant 5.000000e-01 : f32
    %99 = vector.broadcast %cst_26 : f32 to vector<1x128xf32>
    %100 = arith.mulf %98, %99 : vector<1x128xf32>
    %101 = arith.mulf %60, %75 : vector<2x128xf32>
    %cst_27 = arith.constant dense<0.000000e+00> : vector<128xf32>
    %102 = vector.multi_reduction <add>, %101, %cst_27 [0] : vector<2x128xf32> to vector<128xf32>
    %103 = vector.shape_cast %102 : vector<128xf32> to vector<1x128xf32>
    %cst_28 = arith.constant 5.000000e-01 : f32
    %104 = vector.broadcast %cst_28 : f32 to vector<1x128xf32>
    %105 = arith.mulf %103, %104 : vector<1x128xf32>
    %106 = arith.mulf %63, %75 : vector<2x128xf32>
    %cst_29 = arith.constant dense<0.000000e+00> : vector<128xf32>
    %107 = vector.multi_reduction <add>, %106, %cst_29 [0] : vector<2x128xf32> to vector<128xf32>
    %108 = vector.shape_cast %107 : vector<128xf32> to vector<1x128xf32>
    %cst_30 = arith.constant 5.000000e-01 : f32
    %109 = vector.broadcast %cst_30 : f32 to vector<1x128xf32>
    %110 = arith.mulf %108, %109 : vector<1x128xf32>
    %111 = arith.mulf %66, %75 : vector<2x128xf32>
    %cst_31 = arith.constant dense<0.000000e+00> : vector<128xf32>
    %112 = vector.multi_reduction <add>, %111, %cst_31 [0] : vector<2x128xf32> to vector<128xf32>
    %113 = vector.shape_cast %112 : vector<128xf32> to vector<1x128xf32>
    %cst_32 = arith.constant 5.000000e-01 : f32
    %114 = vector.broadcast %cst_32 : f32 to vector<1x128xf32>
    %115 = arith.mulf %113, %114 : vector<1x128xf32>
    %c0_33 = arith.constant 0 : index
    %c0_34 = arith.constant 0 : index
    %116 = vector.load %arg8[%c0_33, %c0_34] : memref<16x1024xf32, #tpu.memory_space<vmem>>, vector<16x128xf32>
    %117 = vector.broadcast %80 : vector<1x128xf32> to vector<16x128xf32>
    %118 = arith.mulf %116, %117 : vector<16x128xf32>
    %c0_35 = arith.constant 0 : index
    %c128 = arith.constant 128 : index
    %119 = vector.load %arg8[%c0_35, %c128] : memref<16x1024xf32, #tpu.memory_space<vmem>>, vector<16x128xf32>
    %120 = vector.broadcast %85 : vector<1x128xf32> to vector<16x128xf32>
    %121 = arith.mulf %119, %120 : vector<16x128xf32>
    %122 = arith.maximumf %118, %121 : vector<16x128xf32>
    %c0_36 = arith.constant 0 : index
    %c256 = arith.constant 256 : index
    %123 = vector.load %arg8[%c0_36, %c256] : memref<16x1024xf32, #tpu.memory_space<vmem>>, vector<16x128xf32>
    %124 = vector.broadcast %90 : vector<1x128xf32> to vector<16x128xf32>
    %125 = arith.mulf %123, %124 : vector<16x128xf32>
    %126 = arith.maximumf %122, %125 : vector<16x128xf32>
    %c0_37 = arith.constant 0 : index
    %c384 = arith.constant 384 : index
    %127 = vector.load %arg8[%c0_37, %c384] : memref<16x1024xf32, #tpu.memory_space<vmem>>, vector<16x128xf32>
    %128 = vector.broadcast %95 : vector<1x128xf32> to vector<16x128xf32>
    %129 = arith.mulf %127, %128 : vector<16x128xf32>
    %130 = arith.maximumf %126, %129 : vector<16x128xf32>
    %c0_38 = arith.constant 0 : index
    %c512 = arith.constant 512 : index
    %131 = vector.load %arg8[%c0_38, %c512] : memref<16x1024xf32, #tpu.memory_space<vmem>>, vector<16x128xf32>
    %132 = vector.broadcast %100 : vector<1x128xf32> to vector<16x128xf32>
    %133 = arith.mulf %131, %132 : vector<16x128xf32>
    %134 = arith.maximumf %130, %133 : vector<16x128xf32>
    %c0_39 = arith.constant 0 : index
    %c640 = arith.constant 640 : index
    %135 = vector.load %arg8[%c0_39, %c640] : memref<16x1024xf32, #tpu.memory_space<vmem>>, vector<16x128xf32>
    %136 = vector.broadcast %105 : vector<1x128xf32> to vector<16x128xf32>
    %137 = arith.mulf %135, %136 : vector<16x128xf32>
    %138 = arith.maximumf %134, %137 : vector<16x128xf32>
    %c0_40 = arith.constant 0 : index
    %c768 = arith.constant 768 : index
    %139 = vector.load %arg8[%c0_40, %c768] : memref<16x1024xf32, #tpu.memory_space<vmem>>, vector<16x128xf32>
    %140 = vector.broadcast %110 : vector<1x128xf32> to vector<16x128xf32>
    %141 = arith.mulf %139, %140 : vector<16x128xf32>
    %142 = arith.maximumf %138, %141 : vector<16x128xf32>
    %c0_41 = arith.constant 0 : index
    %c896 = arith.constant 896 : index
    %143 = vector.load %arg8[%c0_41, %c896] : memref<16x1024xf32, #tpu.memory_space<vmem>>, vector<16x128xf32>
    %144 = vector.broadcast %115 : vector<1x128xf32> to vector<16x128xf32>
    %145 = arith.mulf %143, %144 : vector<16x128xf32>
    %146 = arith.maximumf %142, %145 : vector<16x128xf32>
    %c128_i32 = arith.constant 128 : i32
    %147 = arith.muli %arg1, %c128_i32 : i32
    %148 = tpu.assume_multiple %147, 128 : i32
    %c0_42 = arith.constant 0 : index
    %c0_43 = arith.constant 0 : index
    %149 = arith.index_cast %148 : i32 to index
    %150 = vector.load %arg2[%c0_42, %c0_43, %149] : memref<1x16x256xbf16, #tpu.memory_space<vmem>>, vector<1x16x128xbf16>
    %151 = vector.shape_cast %150 : vector<1x16x128xbf16> to vector<16x128xbf16>
    %152 = arith.truncf %146 : vector<16x128xf32> to vector<16x128xbf16>
    %153 = tpu.concatenate %151, %152 in 0 : vector<16x128xbf16>, vector<16x128xbf16> -> vector<32x128xbf16>
    %c0_44 = arith.constant 0 : index
    %c0_45 = arith.constant 0 : index
    %154 = vector.load %arg5[%c0_44, %c0_45] : memref<32x32xbf16, #tpu.memory_space<vmem>>, vector<32x32xbf16>
    %cst_46 = arith.constant dense<0.000000e+00> : vector<32x128xf32>
    %155 = tpu.matmul %154, %153, %cst_46 {dimension_numbers = #tpu.dot_dimension_numbers<[1], [0], [0], [1], [0, 0, 1, 1], [], []>} : vector<32x32xbf16>, vector<32x128xbf16>, vector<32x128xf32> -> vector<32x128xf32>
    %c0_47 = arith.constant 0 : index
    %c0_48 = arith.constant 0 : index
    %156 = vector.load %arg6[%c0_47, %c0_48] : memref<32x1xf32, #tpu.memory_space<vmem>>, vector<32x1xf32>
    %157 = vector.broadcast %156 : vector<32x1xf32> to vector<32x128xf32>
    %158 = arith.addf %155, %157 : vector<32x128xf32>
    %c0_49 = arith.constant 0 : index
    %c0_50 = arith.constant 0 : index
    %c0_51 = arith.constant 0 : index
    %159 = vector.load %arg7[%c0_49, %c0_50, %c0_51] : memref<1x32x128xf32, #tpu.memory_space<vmem>>, vector<1x32x128xf32>
    %160 = vector.shape_cast %159 : vector<1x32x128xf32> to vector<32x128xf32>
    %161 = vector.shape_cast %158 : vector<32x128xf32> to vector<1x32x128xf32>
    tpu.vector_store %arg7[%c0_49, %c0_50, %c0_51], %161 {strides = array<i32>} : memref<1x32x128xf32, #tpu.memory_space<vmem>>, vector<1x32x128xf32>,
    return
  }
  func.func @transform_0(%arg0: i32, %arg1: i32) -> (i32, i32, i32) {
    %c0_i32 = arith.constant 0 : i32
    %c0_i32_0 = arith.constant 0 : i32
    %c0_i32_1 = arith.constant 0 : i32
    return %arg0, %c0_i32, %c0_i32_0 : i32, i32, i32
  }
  func.func @transform_1(%arg0: i32, %arg1: i32) -> (i32, i32, i32, i32) {
    %c0_i32 = arith.constant 0 : i32
    %c0_i32_0 = arith.constant 0 : i32
    %c0_i32_1 = arith.constant 0 : i32
    return %arg0, %arg1, %c0_i32, %c0_i32_0 : i32, i32, i32, i32
  }
  func.func @transform_2(%arg0: i32, %arg1: i32) -> (i32, i32) {
    %c0_i32 = arith.constant 0 : i32
    %c0_i32_0 = arith.constant 0 : i32
    %c0_i32_1 = arith.constant 0 : i32
    return %c0_i32, %c0_i32_0 : i32, i32
  }
  func.func @transform_3(%arg0: i32, %arg1: i32) -> (i32, i32) {
    %c0_i32 = arith.constant 0 : i32
    %c0_i32_0 = arith.constant 0 : i32
    %c0_i32_1 = arith.constant 0 : i32
    return %c0_i32, %c0_i32_0 : i32, i32
  }
  func.func @transform_4(%arg0: i32, %arg1: i32) -> (i32, i32) {
    %c0_i32 = arith.constant 0 : i32
    %c0_i32_0 = arith.constant 0 : i32
    %c0_i32_1 = arith.constant 0 : i32
    return %c0_i32, %c0_i32_0 : i32, i32
  }
  func.func @transform_5(%arg0: i32, %arg1: i32) -> (i32, i32, i32) {
    %c0_i32 = arith.constant 0 : i32
    %c0_i32_0 = arith.constant 0 : i32
    return %arg0, %c0_i32, %arg1 : i32, i32, i32
  }
}

</mosaic_0001>

<llo_original>
// kernel: tpu_custom_call.1
$region0: #{tpu_custom_call.1}
  #allocation0 [shape = 'u32[]', space=smem, size = 0x4, offset = 0x4, fixed_abs, tag = 'smem constant byte address 0x4 - core index']
  #allocation1 [shape = 'u32[72,128]{1,0:T(1,128)}', space=vmem, size = 0x9000, scoped, tag = 'internal scratch']
  #allocation2 [shape = 'f32[16,1024]{1,0:T(8,128)}', space=vmem, size = 0x10000, scoped, tag = 'scratch operand']
  %s0 = inlined_call_operand.vmem [shape: bf16[2,16,256], index: 0, kind: input, shape index: {}]
  %s1 = inlined_call_operand.hbm [shape: s32[2,2,2,1024], index: 1, kind: input, shape index: {}]
  %s2 = inlined_call_operand.vmem [shape: bf16[2,16], index: 2, kind: input, shape index: {}]
  %s3 = inlined_call_operand.hbm [shape: bf16[32,32], index: 3, kind: input, shape index: {}]
  %s4 = inlined_call_operand.vmem [shape: f32[32,1], index: 4, kind: input, shape index: {}]
  %s5 = inlined_call_operand.hbm [shape: f32[2,32,256], index: 5, kind: output, shape index: {}]
  %s6 = sld [smem:[#allocation0]]
  $region61: #{tpu_custom_call.1} parent=0
    _
  %s8 = ssub.s32 1, %s6
  %s9 = scalar_select 0, %s8, %s6
  $region1: #{tpu_custom_call.1} parent=0
    #allocation3 [shape = 'u8[16384]{0}', space=vmem, size = 0x4000, scoped, tag = 'input window, operand 1']
    #allocation4 [shape = 's32[2]{0}', space=sflag, size = 0x8, scoped, tag = 'scoped memory for tpu_custom_call.1']
    #allocation5 [shape = 's32[2]{0}', space=sflag, size = 0x8, scoped, tag = 'scoped memory for tpu_custom_call.1']
    #allocation6 [shape = 'u8[8192]{0}', space=vmem, size = 0x2000, scoped, tag = 'input window, operand 3, single buffered']
    #allocation7 [shape = 's32[1]{0}', space=sflag, size = 0x4, scoped, tag = 'scoped memory for tpu_custom_call.1']
    #allocation8 [shape = 'u8[32768]{0}', space=vmem, size = 0x8000, scoped, tag = 'output window, operand 0']
    %10 = vsyncpa [#allocation4], 0
    %s11 = scalar_lea.sflag [#allocation4], 1
    %12 = vsyncpa %s11, 0
    %13 = vsyncpa [#allocation7], 0
    %14 = vsyncpa [#allocation5], 0
    %s15 = scalar_lea.sflag [#allocation5], 1
    %16 = vsyncpa %s15, 0
    loop: start=0, step=1, limit=6
    $region2: #{tpu_custom_call.1} parent=1 // loop_pre_header
      _
    $region3: #{tpu_custom_call.1} parent=1 // loop_header
      %s18 = sphi 0, %s22
      %p19 = scmp.ge.s32.totalorder %s18, 6
      %s25 = sphi 0, %s37
      %s26 = sphi 0, %s33
      %s27 = sphi 0, %s25
      %s28 = sphi 0, %s26
      %s29 = sphi 0, %s27
      %s30 = sphi 0, %s28
      %s40 = sphi 0, %s42
      %s43 = sphi 0, %s40
      %s44 = sphi 0, %s43
      %s60 = sphi 0, %s44
      %s68 = sphi 0, %s70
      %s71 = sphi 0, %s68
      %s72 = sphi 0, %s71
      %s88 = sphi 0, %s72
      %s92 = sphi 0, %s92
      %s94 = sphi 0, %s92
      %s95 = sphi 0, %s94
      %s109 = sphi 0, %s95
      %s113 = sphi 0, %s113
      %s115 = sphi 0, %s113
      %s116 = sphi 0, %s115
      %s130 = sphi 0, %s116
      %s134 = sphi 0, %s134
      %s136 = sphi 0, %s134
      %s137 = sphi 0, %s136
      %s151 = sphi 0, %s137
      %s159 = sphi 0, %s161
      %s162 = sphi 0, %s159
      %s163 = sphi 0, %s162
      %s179 = sphi 0, %s163
    $region4: #{tpu_custom_call.1} parent=1 // loop_header_branch
      %21 = sbr.rel (%p19) target = $region8
    $region5: #{tpu_custom_call.1} parent=1 // loop_body
      %s23 = ssub.s32 %s18, 1
      %s24 = ssub.s32 %s18, 2
      %s31 = sadd.s32 1, %s26
      %p32 = scmp.ge.s32.totalorder %s31, 2
      %s33 = scalar_select %p32, 0, %s31
      %s34 = sadd.s32 1, %s25
      %s35 = scalar_select %p32, %s34, %s25
      %p36 = scmp.ge.s32.totalorder %s35, 2
      %s37 = scalar_select %p36, 0, %s35
      %s38 = ssub.s32 %s25, %s37
      %p39 = scmp.eq.s32.totalorder %s38, 0
      %s41 = sadd.s32 %s40, 1
      %s42 = scalar_select %p39, %s40, %s41
      %p45 = pneg %p39
      %p46 = scmp.eq.s32.totalorder %s18, 3
      %p47 = por %p45, %p46
      %p48 = scmp.ne.s32.totalorder %s40, %s43
      %p49 = scmp.eq.s32.totalorder %s18, 0
      %p50 = por %p48, %p49
      %p51 = scmp.ne.s32.totalorder %s40, %s43
      %p52 = scmp.eq.s32.totalorder %s23, 3
      %p53 = por %p51, %p52
      %p54 = scmp.ne.s32.totalorder %s43, %s44
      %p55 = scmp.eq.s32.totalorder %s23, 0
      %p56 = por %p54, %p55
      %p57 = scmp.ne.s32.totalorder %s43, %s44
      %p58 = scmp.eq.s32.totalorder %s24, 3
      %p59 = por %p57, %p58
      %p61 = scmp.ne.s32.totalorder %s44, %s60
      %p62 = scmp.eq.s32.totalorder %s24, 0
      %p63 = por %p61, %p62
      %s64 = ssub.s32 %s25, %s37
      %s65 = ssub.s32 %s26, %s33
      %s66 = sor.u32 %s64, %s65
      %p67 = scmp.eq.s32.totalorder %s66, 0
      %s69 = sadd.s32 %s68, 1
      %s70 = scalar_select %p67, %s68, %s69
      %p73 = pneg %p67
      %p74 = scmp.eq.s32.totalorder %s18, 3
      %p75 = por %p73, %p74
      %p76 = scmp.ne.s32.totalorder %s68, %s71
      %p77 = scmp.eq.s32.totalorder %s18, 0
      %p78 = por %p76, %p77
      %p79 = scmp.ne.s32.totalorder %s68, %s71
      %p80 = scmp.eq.s32.totalorder %s23, 3
      %p81 = por %p79, %p80
      %p82 = scmp.ne.s32.totalorder %s71, %s72
      %p83 = scmp.eq.s32.totalorder %s23, 0
      %p84 = por %p82, %p83
      %p85 = scmp.ne.s32.totalorder %s71, %s72
      %p86 = scmp.eq.s32.totalorder %s24, 3
      %p87 = por %p85, %p86
      %p89 = scmp.ne.s32.totalorder %s72, %s88
      %p90 = scmp.eq.s32.totalorder %s24, 0
      %p91 = por %p89, %p90
      %s93 = sadd.s32 %s92, 1
      %p96 = scmp.eq.s32.totalorder %s18, 3
      %p97 = scmp.ne.s32.totalorder %s92, %s94
      %p98 = scmp.eq.s32.totalorder %s18, 0
      %p99 = por %p97, %p98
      %p100 = scmp.ne.s32.totalorder %s92, %s94
      %p101 = scmp.eq.s32.totalorder %s23, 3
      %p102 = por %p100, %p101
      %p103 = scmp.ne.s32.totalorder %s94, %s95
      %p104 = scmp.eq.s32.totalorder %s23, 0
      %p105 = por %p103, %p104
      %p106 = scmp.ne.s32.totalorder %s94, %s95
      %p107 = scmp.eq.s32.totalorder %s24, 3
      %p108 = por %p106, %p107
      %p110 = scmp.ne.s32.totalorder %s95, %s109
      %p111 = scmp.eq.s32.totalorder %s24, 0
      %p112 = por %p110, %p111
      %s114 = sadd.s32 %s113, 1
      %p117 = scmp.eq.s32.totalorder %s18, 3
      %p118 = scmp.ne.s32.totalorder %s113, %s115
      %p119 = scmp.eq.s32.totalorder %s18, 0
      %p120 = por %p118, %p119
      %p121 = scmp.ne.s32.totalorder %s113, %s115
      %p122 = scmp.eq.s32.totalorder %s23, 3
      %p123 = por %p121, %p122
      %p124 = scmp.ne.s32.totalorder %s115, %s116
      %p125 = scmp.eq.s32.totalorder %s23, 0
      %p126 = por %p124, %p125
      %p127 = scmp.ne.s32.totalorder %s115, %s116
      %p128 = scmp.eq.s32.totalorder %s24, 3
      %p129 = por %p127, %p128
      %p131 = scmp.ne.s32.totalorder %s116, %s130
      %p132 = scmp.eq.s32.totalorder %s24, 0
      %p133 = por %p131, %p132
      %s135 = sadd.s32 %s134, 1
      %p138 = scmp.eq.s32.totalorder %s18, 3
      %p139 = scmp.ne.s32.totalorder %s134, %s136
      %p140 = scmp.eq.s32.totalorder %s18, 0
      %p141 = por %p139, %p140
      %p142 = scmp.ne.s32.totalorder %s134, %s136
      %p143 = scmp.eq.s32.totalorder %s23, 3
      %p144 = por %p142, %p143
      %p145 = scmp.ne.s32.totalorder %s136, %s137
      %p146 = scmp.eq.s32.totalorder %s23, 0
      %p147 = por %p145, %p146
      %p148 = scmp.ne.s32.totalorder %s136, %s137
      %p149 = scmp.eq.s32.totalorder %s24, 3
      %p150 = por %p148, %p149
      %p152 = scmp.ne.s32.totalorder %s137, %s151
      %p153 = scmp.eq.s32.totalorder %s24, 0
      %p154 = por %p152, %p153
      %s155 = ssub.s32 %s25, %s37
      %s156 = ssub.s32 %s26, %s33
      %s157 = sor.u32 %s155, %s156
      %p158 = scmp.eq.s32.totalorder %s157, 0
      %s160 = sadd.s32 %s159, 1
      %s161 = scalar_select %p158, %s159, %s160
      %p164 = pneg %p158
      %p165 = scmp.eq.s32.totalorder %s18, 3
      %p166 = por %p164, %p165
      %p167 = scmp.ne.s32.totalorder %s159, %s162
      %p168 = scmp.eq.s32.totalorder %s18, 0
      %p169 = por %p167, %p168
      %p170 = scmp.ne.s32.totalorder %s159, %s162
      %p171 = scmp.eq.s32.totalorder %s23, 3
      %p172 = por %p170, %p171
      %p173 = scmp.ne.s32.totalorder %s162, %s163
      %p174 = scmp.eq.s32.totalorder %s23, 0
      %p175 = por %p173, %p174
      %p176 = scmp.ne.s32.totalorder %s162, %s163
      %p177 = scmp.eq.s32.totalorder %s24, 3
      %p178 = por %p176, %p177
      %p180 = scmp.ne.s32.totalorder %s163, %s179
      %p181 = scmp.eq.s32.totalorder %s24, 0
      %p182 = por %p180, %p181
      %p183 = scmp.le.s32.totalorder 1, %s18
      %p184 = scmp.lt.s32.totalorder %s18, 5
      %p185 = pnand %p183, %p184
      %p186 = pneg %p185
      // Predicated region
      $region9: #{tpu_custom_call.1} parent=5 // pred_check
        _
      $region10: #{tpu_custom_call.1} parent=5 // pred_check_branch
        %188 = sbr.rel (%p185) target = $region12
      $region11: #{tpu_custom_call.1} parent=5 // pred_region
        %s189 = ssub.s32 %s18, 1
        // Predicated region
        $region13: #{tpu_custom_call.1} parent=11 // pred_check
          %p190 = pneg %p105
        $region14: #{tpu_custom_call.1} parent=11 // pred_check_branch
          %192 = sbr.rel (%p190) target = $region16
        $region15: #{tpu_custom_call.1} parent=11 // pred_region
          _
        $region16: #{tpu_custom_call.1} parent=11 // pred_fallthru
          _
        // Predicated region
        $region17: #{tpu_custom_call.1} parent=11 // pred_check
          %p193 = pneg %p126
        $region18: #{tpu_custom_call.1} parent=11 // pred_check_branch
          %195 = sbr.rel (%p193) target = $region20
        $region19: #{tpu_custom_call.1} parent=11 // pred_region
          %197 = vsyncadd [#allocation7], 0
          %s198 = sshll.u32 %s3, 4
          %s199 = int_to_ptr.hbm [resolvable:$true] %s198
          %s200 = sshll.u32 [#allocation6], 4
          %s201 = int_to_ptr.vmem [resolvable:$true] %s200
          %206 = dma.hbm_to_vmem [thread:$0]  %s199, 256, %s201, [#allocation7], 64, 64, 4
        $region20: #{tpu_custom_call.1} parent=11 // pred_fallthru
          _
        // Predicated region
        $region21: #{tpu_custom_call.1} parent=11 // pred_check
          %p207 = pneg %p147
        $region22: #{tpu_custom_call.1} parent=11 // pred_check_branch
          %209 = sbr.rel (%p207) target = $region24
        $region23: #{tpu_custom_call.1} parent=11 // pred_region
          _
        $region24: #{tpu_custom_call.1} parent=11 // pred_fallthru
          _
      $region12: #{tpu_custom_call.1} parent=5 // pred_fallthru
        _
      %p210 = scmp.lt.s32.totalorder %s18, 4
      // Predicated region
      $region25: #{tpu_custom_call.1} parent=5 // pred_check
        %p211 = pneg %p210
      $region26: #{tpu_custom_call.1} parent=5 // pred_check_branch
        %213 = sbr.rel (%p211) target = $region28
      $region27: #{tpu_custom_call.1} parent=5 // pred_region
        // Predicated region
        $region29: #{tpu_custom_call.1} parent=27 // pred_check
          %p214 = pneg %p50
        $region30: #{tpu_custom_call.1} parent=27 // pred_check_branch
          %216 = sbr.rel (%p214) target = $region32
        $region31: #{tpu_custom_call.1} parent=27 // pred_region
          %p217 = scmp.lt.s32.totalorder %s25, 1
          %s218 = scalar_select %p217, %s25, 1
          %s219 = smul.addr %s218, 4
          %s220 = smul.addr %s219, 4
          %s221 = scalar_lea.vmem %s0, %s220
        $region32: #{tpu_custom_call.1} parent=27 // pred_fallthru
          _
        // Predicated region
        $region33: #{tpu_custom_call.1} parent=27 // pred_check
          %p222 = pneg %p78
        $region34: #{tpu_custom_call.1} parent=27 // pred_check_branch
          %224 = sbr.rel (%p222) target = $region36
        $region35: #{tpu_custom_call.1} parent=27 // pred_region
          %s225 = sand.u32 %s68, 1
          %s226 = scalar_lea.sflag [#allocation4], %s225
          %s227 = sand.u32 %s68, 1
          %s228 = smul.addr %s227, 16
          %s229 = scalar_lea.vmem [#allocation3], %s228
          %231 = vsyncadd %s226, 0
          %s232 = smul.addr %s26, 8
          %s233 = smul.addr %s25, 16
          %s234 = sadd.s32 %s232, %s233
          %s235 = smul.addr %s234, 2
          %s236 = scalar_lea.hbm %s1, %s235
          %s238 = sshll.u32 %s236, 4
          %s239 = int_to_ptr.hbm [resolvable:$true] %s238
          %s240 = sshll.u32 %s229, 4
          %s241 = int_to_ptr.vmem [resolvable:$true] %s240
          %243 = dma.hbm_to_vmem [thread:$0]  %s239, 256, %s241, %s226
        $region36: #{tpu_custom_call.1} parent=27 // pred_fallthru
          _
      $region28: #{tpu_custom_call.1} parent=5 // pred_fallthru
        _
      %p244 = scmp.le.s32.totalorder 1, %s18
      %p245 = scmp.lt.s32.totalorder %s18, 5
      %p246 = pnand %p244, %p245
      %p247 = pneg %p246
      // Predicated region
      $region37: #{tpu_custom_call.1} parent=5 // pred_check
        _
      $region38: #{tpu_custom_call.1} parent=5 // pred_check_branch
        %249 = sbr.rel (%p246) target = $region40
      $region39: #{tpu_custom_call.1} parent=5 // pred_region
        %s250 = ssub.s32 %s18, 1
        %s251 = sand.u32 %s71, 1
        %s252 = scalar_lea.sflag [#allocation4], %s251
        %s253 = sand.u32 %s71, 1
        %s254 = smul.addr %s253, 16
        %s255 = scalar_lea.vmem [#allocation3], %s254
        // Predicated region
        $region41: #{tpu_custom_call.1} parent=39 // pred_check
          %p256 = pneg %p84
        $region42: #{tpu_custom_call.1} parent=39 // pred_check_branch
          %258 = sbr.rel (%p256) target = $region44
        $region43: #{tpu_custom_call.1} parent=39 // pred_region
          %260 = dma.done %s252, 256
        $region44: #{tpu_custom_call.1} parent=39 // pred_fallthru
          _
        // Predicated region
        $region45: #{tpu_custom_call.1} parent=39 // pred_check
          %p261 = pneg %p126
        $region46: #{tpu_custom_call.1} parent=39 // pred_check_branch
          %263 = sbr.rel (%p261) target = $region48
        $region47: #{tpu_custom_call.1} parent=39 // pred_region
          %265 = dma.done [#allocation7], 256
        $region48: #{tpu_custom_call.1} parent=39 // pred_fallthru
          _
        %p266 = scmp.lt.s32.totalorder %s27, 1
        %s267 = scalar_select %p266, %s27, 1
        %s268 = smul.addr %s267, 4
        %s269 = smul.addr %s268, 4
        %s270 = scalar_lea.vmem %s0, %s269
        %p271 = pneg %p56
        %p272 = pneg %p53
        %s273 = sand.u32 %s71, 1
        %s274 = scalar_lea.sflag [#allocation4], %s273
        %s275 = sand.u32 %s71, 1
        %s276 = smul.addr %s275, 16
        %s277 = scalar_lea.vmem [#allocation3], %s276
        %p278 = pneg %p84
        %p279 = pneg %p81
        %p280 = pneg %p105
        %p281 = pneg %p102
        %p282 = pneg %p126
        %p283 = pneg %p123
        %p284 = pneg %p147
        %p285 = pneg %p144
        %p286 = pneg %p175
        %p287 = pneg %p172
        %s288 = sand.u32 %s162, 1
        %s289 = scalar_lea.sflag [#allocation5], %s288
        %s290 = sand.u32 %s162, 1
        %s291 = smul.addr %s290, 32
        %s292 = scalar_lea.vmem [#allocation8], %s291
        %p293 = scmp.lt.s32.totalorder %s27, 1
        %s294 = scalar_select %p293, %s27, 1
        %s295 = smul.addr %s294, 4
        %s296 = smul.addr %s295, 4
        %s297 = scalar_lea.vmem %s0, %s296
        %v299 = vld [vmem:[%s297] sm:$0xff]
        %v300 = vld [vmem:[%s297 + $0x8] sm:$0xff]
        %v301 = vld [vmem:[%s2] sm:$0x1]
        %v302 = vlaneseq
        %v303 = vshrl.u32 %v302, 7
        %v304 = vadd.s32 %v303, 8
        %v305 = vadd.s32 %v303, 16
        %v306 = vadd.s32 %v303, 24
        %v307 = vadd.s32 %v303, 32
        %v308 = vadd.s32 %v303, 40
        %v309 = vadd.s32 %v303, 48
        %v310 = vadd.s32 %v303, 56
        %v311 = vadd.s32 %v303, 64
        %v312 = vadd.s32 %v303, 72
        %v313 = vadd.s32 %v303, 80
        %v314 = vadd.s32 %v303, 88
        %v315 = vadd.s32 %v303, 96
        %v316 = vadd.s32 %v303, 104
        %v317 = vadd.s32 %v303, 112
        %v318 = vadd.s32 %v303, 120
        %v319 = vadd.s32 %v303, 128
        %v320 = vadd.s32 %v303, 136
        %v321 = vadd.s32 %v303, 144
        %v322 = vadd.s32 %v303, 152
        %v323 = vadd.s32 %v303, 160
        %v324 = vadd.s32 %v303, 168
        %v325 = vadd.s32 %v303, 176
        %v326 = vadd.s32 %v303, 184
        %v327 = vadd.s32 %v303, 192
        %v328 = vadd.s32 %v303, 200
        %v329 = vadd.s32 %v303, 208
        %v330 = vadd.s32 %v303, 216
        %v331 = vadd.s32 %v303, 224
        %v332 = vadd.s32 %v303, 232
        %v333 = vadd.s32 %v303, 240
        %v334 = vadd.s32 %v303, 248
        %v335 = vld [vmem:[%s255] ss:$2 sm:$0xff]
        %s336 = scalar_lea.vmem %s255, 1 [#allocation3]
        %v337 = vld [vmem:[%s336] ss:$2 sm:$0xff]
        %v338 = vperm.slane %v337, 0
        %v339 = vperm.slane %v337, 1
        %v340 = vperm.slane %v337, 2
        %v341 = vperm.slane %v337, 3
        %v342 = vperm.slane %v337, 4
        %v343 = vperm.slane %v337, 5
        %v344 = vperm.slane %v337, 6
        %v345 = vperm.slane %v337, 7
        %vm346 = vcmp.eq.s32.totalorder %v303, %v338
        %vm347 = vcmp.eq.s32.totalorder %v303, %v339
        %vm348 = vcmp.eq.s32.totalorder %v303, %v340
        %vm349 = vcmp.eq.s32.totalorder %v303, %v341
        %vm350 = vcmp.eq.s32.totalorder %v303, %v342
        %vm351 = vcmp.eq.s32.totalorder %v303, %v343
        %vm352 = vcmp.eq.s32.totalorder %v303, %v344
        %vm353 = vcmp.eq.s32.totalorder %v303, %v345
        %vm354 = vcmp.eq.s32.totalorder %v304, %v338
        %vm355 = vcmp.eq.s32.totalorder %v304, %v339
        %vm356 = vcmp.eq.s32.totalorder %v304, %v340
        %vm357 = vcmp.eq.s32.totalorder %v304, %v341
        %vm358 = vcmp.eq.s32.totalorder %v304, %v342
        %vm359 = vcmp.eq.s32.totalorder %v304, %v343
        %vm360 = vcmp.eq.s32.totalorder %v304, %v344
        %vm361 = vcmp.eq.s32.totalorder %v304, %v345
        %vm362 = vcmp.eq.s32.totalorder %v305, %v338
        %vm363 = vcmp.eq.s32.totalorder %v305, %v339
        %vm364 = vcmp.eq.s32.totalorder %v305, %v340
        %vm365 = vcmp.eq.s32.totalorder %v305, %v341
        %vm366 = vcmp.eq.s32.totalorder %v305, %v342
        %vm367 = vcmp.eq.s32.totalorder %v305, %v343
        %vm368 = vcmp.eq.s32.totalorder %v305, %v344
        %vm369 = vcmp.eq.s32.totalorder %v305, %v345
        %vm370 = vcmp.eq.s32.totalorder %v306, %v338
        %vm371 = vcmp.eq.s32.totalorder %v306, %v339
        %vm372 = vcmp.eq.s32.totalorder %v306, %v340
        %vm373 = vcmp.eq.s32.totalorder %v306, %v341
        %vm374 = vcmp.eq.s32.totalorder %v306, %v342
        %vm375 = vcmp.eq.s32.totalorder %v306, %v343
        %vm376 = vcmp.eq.s32.totalorder %v306, %v344
        %vm377 = vcmp.eq.s32.totalorder %v306, %v345
        %vm378 = vcmp.eq.s32.totalorder %v307, %v338
        %vm379 = vcmp.eq.s32.totalorder %v307, %v339
        %vm380 = vcmp.eq.s32.totalorder %v307, %v340
        %vm381 = vcmp.eq.s32.totalorder %v307, %v341
        %vm382 = vcmp.eq.s32.totalorder %v307, %v342
        %vm383 = vcmp.eq.s32.totalorder %v307, %v343
        %vm384 = vcmp.eq.s32.totalorder %v307, %v344
        %vm385 = vcmp.eq.s32.totalorder %v307, %v345
        %vm386 = vcmp.eq.s32.totalorder %v308, %v338
        %vm387 = vcmp.eq.s32.totalorder %v308, %v339
        %vm388 = vcmp.eq.s32.totalorder %v308, %v340
        %vm389 = vcmp.eq.s32.totalorder %v308, %v341
        %vm390 = vcmp.eq.s32.totalorder %v308, %v342
        %vm391 = vcmp.eq.s32.totalorder %v308, %v343
        %vm392 = vcmp.eq.s32.totalorder %v308, %v344
        %vm393 = vcmp.eq.s32.totalorder %v308, %v345
        %vm394 = vcmp.eq.s32.totalorder %v309, %v338
        %vm395 = vcmp.eq.s32.totalorder %v309, %v339
        %vm396 = vcmp.eq.s32.totalorder %v309, %v340
        %vm397 = vcmp.eq.s32.totalorder %v309, %v341
        %vm398 = vcmp.eq.s32.totalorder %v309, %v342
        %vm399 = vcmp.eq.s32.totalorder %v309, %v343
        %vm400 = vcmp.eq.s32.totalorder %v309, %v344
        %vm401 = vcmp.eq.s32.totalorder %v309, %v345
        %vm402 = vcmp.eq.s32.totalorder %v310, %v338
        %vm403 = vcmp.eq.s32.totalorder %v310, %v339
        %vm404 = vcmp.eq.s32.totalorder %v310, %v340
        %vm405 = vcmp.eq.s32.totalorder %v310, %v341
        %vm406 = vcmp.eq.s32.totalorder %v310, %v342
        %vm407 = vcmp.eq.s32.totalorder %v310, %v343
        %vm408 = vcmp.eq.s32.totalorder %v310, %v344
        %vm409 = vcmp.eq.s32.totalorder %v310, %v345
        %vm410 = vcmp.eq.s32.totalorder %v311, %v338
        %vm411 = vcmp.eq.s32.totalorder %v311, %v339
        %vm412 = vcmp.eq.s32.totalorder %v311, %v340
        %vm413 = vcmp.eq.s32.totalorder %v311, %v341
        %vm414 = vcmp.eq.s32.totalorder %v311, %v342
        %vm415 = vcmp.eq.s32.totalorder %v311, %v343
        %vm416 = vcmp.eq.s32.totalorder %v311, %v344
        %vm417 = vcmp.eq.s32.totalorder %v311, %v345
        %vm418 = vcmp.eq.s32.totalorder %v312, %v338
        %vm419 = vcmp.eq.s32.totalorder %v312, %v339
        %vm420 = vcmp.eq.s32.totalorder %v312, %v340
        %vm421 = vcmp.eq.s32.totalorder %v312, %v341
        %vm422 = vcmp.eq.s32.totalorder %v312, %v342
        %vm423 = vcmp.eq.s32.totalorder %v312, %v343
        %vm424 = vcmp.eq.s32.totalorder %v312, %v344
        %vm425 = vcmp.eq.s32.totalorder %v312, %v345
        %vm426 = vcmp.eq.s32.totalorder %v313, %v338
        %vm427 = vcmp.eq.s32.totalorder %v313, %v339
        %vm428 = vcmp.eq.s32.totalorder %v313, %v340
        %vm429 = vcmp.eq.s32.totalorder %v313, %v341
        %vm430 = vcmp.eq.s32.totalorder %v313, %v342
        %vm431 = vcmp.eq.s32.totalorder %v313, %v343
        %vm432 = vcmp.eq.s32.totalorder %v313, %v344
        %vm433 = vcmp.eq.s32.totalorder %v313, %v345
        %vm434 = vcmp.eq.s32.totalorder %v314, %v338
        %vm435 = vcmp.eq.s32.totalorder %v314, %v339
        %vm436 = vcmp.eq.s32.totalorder %v314, %v340
        %vm437 = vcmp.eq.s32.totalorder %v314, %v341
        %vm438 = vcmp.eq.s32.totalorder %v314, %v342
        %vm439 = vcmp.eq.s32.totalorder %v314, %v343
        %vm440 = vcmp.eq.s32.totalorder %v314, %v344
        %vm441 = vcmp.eq.s32.totalorder %v314, %v345
        %vm442 = vcmp.eq.s32.totalorder %v315, %v338
        %vm443 = vcmp.eq.s32.totalorder %v315, %v339
        %vm444 = vcmp.eq.s32.totalorder %v315, %v340
        %vm445 = vcmp.eq.s32.totalorder %v315, %v341
        %vm446 = vcmp.eq.s32.totalorder %v315, %v342
        %vm447 = vcmp.eq.s32.totalorder %v315, %v343
        %vm448 = vcmp.eq.s32.totalorder %v315, %v344
        %vm449 = vcmp.eq.s32.totalorder %v315, %v345
        %vm450 = vcmp.eq.s32.totalorder %v316, %v338
        %vm451 = vcmp.eq.s32.totalorder %v316, %v339
        %vm452 = vcmp.eq.s32.totalorder %v316, %v340
        %vm453 = vcmp.eq.s32.totalorder %v316, %v341
        %vm454 = vcmp.eq.s32.totalorder %v316, %v342
        %vm455 = vcmp.eq.s32.totalorder %v316, %v343
        %vm456 = vcmp.eq.s32.totalorder %v316, %v344
        %vm457 = vcmp.eq.s32.totalorder %v316, %v345
        %vm458 = vcmp.eq.s32.totalorder %v317, %v338
        %vm459 = vcmp.eq.s32.totalorder %v317, %v339
        %vm460 = vcmp.eq.s32.totalorder %v317, %v340
        %vm461 = vcmp.eq.s32.totalorder %v317, %v341
        %vm462 = vcmp.eq.s32.totalorder %v317, %v342
        %vm463 = vcmp.eq.s32.totalorder %v317, %v343
        %vm464 = vcmp.eq.s32.totalorder %v317, %v344
        %vm465 = vcmp.eq.s32.totalorder %v317, %v345
        %vm466 = vcmp.eq.s32.totalorder %v318, %v338
        %vm467 = vcmp.eq.s32.totalorder %v318, %v339
        %vm468 = vcmp.eq.s32.totalorder %v318, %v340
        %vm469 = vcmp.eq.s32.totalorder %v318, %v341
        %vm470 = vcmp.eq.s32.totalorder %v318, %v342
        %vm471 = vcmp.eq.s32.totalorder %v318, %v343
        %vm472 = vcmp.eq.s32.totalorder %v318, %v344
        %vm473 = vcmp.eq.s32.totalorder %v318, %v345
        %vm474 = vcmp.eq.s32.totalorder %v319, %v338
        %vm475 = vcmp.eq.s32.totalorder %v319, %v339
        %vm476 = vcmp.eq.s32.totalorder %v319, %v340
        %vm477 = vcmp.eq.s32.totalorder %v319, %v341
        %vm478 = vcmp.eq.s32.totalorder %v319, %v342
        %vm479 = vcmp.eq.s32.totalorder %v319, %v343
        %vm480 = vcmp.eq.s32.totalorder %v319, %v344
        %vm481 = vcmp.eq.s32.totalorder %v319, %v345
        %vm482 = vcmp.eq.s32.totalorder %v320, %v338
        %vm483 = vcmp.eq.s32.totalorder %v320, %v339
        %vm484 = vcmp.eq.s32.totalorder %v320, %v340
        %vm485 = vcmp.eq.s32.totalorder %v320, %v341
        %vm486 = vcmp.eq.s32.totalorder %v320, %v342
        %vm487 = vcmp.eq.s32.totalorder %v320, %v343
        %vm488 = vcmp.eq.s32.totalorder %v320, %v344
        %vm489 = vcmp.eq.s32.totalorder %v320, %v345
        %vm490 = vcmp.eq.s32.totalorder %v321, %v338
        %vm491 = vcmp.eq.s32.totalorder %v321, %v339
        %vm492 = vcmp.eq.s32.totalorder %v321, %v340
        %vm493 = vcmp.eq.s32.totalorder %v321, %v341
        %vm494 = vcmp.eq.s32.totalorder %v321, %v342
        %vm495 = vcmp.eq.s32.totalorder %v321, %v343
        %vm496 = vcmp.eq.s32.totalorder %v321, %v344
        %vm497 = vcmp.eq.s32.totalorder %v321, %v345
        %vm498 = vcmp.eq.s32.totalorder %v322, %v338
        %vm499 = vcmp.eq.s32.totalorder %v322, %v339
        %vm500 = vcmp.eq.s32.totalorder %v322, %v340
        %vm501 = vcmp.eq.s32.totalorder %v322, %v341
        %vm502 = vcmp.eq.s32.totalorder %v322, %v342
        %vm503 = vcmp.eq.s32.totalorder %v322, %v343
        %vm504 = vcmp.eq.s32.totalorder %v322, %v344
        %vm505 = vcmp.eq.s32.totalorder %v322, %v345
        %vm506 = vcmp.eq.s32.totalorder %v323, %v338
        %vm507 = vcmp.eq.s32.totalorder %v323, %v339
        %vm508 = vcmp.eq.s32.totalorder %v323, %v340
        %vm509 = vcmp.eq.s32.totalorder %v323, %v341
        %vm510 = vcmp.eq.s32.totalorder %v323, %v342
        %vm511 = vcmp.eq.s32.totalorder %v323, %v343
        %vm512 = vcmp.eq.s32.totalorder %v323, %v344
        %vm513 = vcmp.eq.s32.totalorder %v323, %v345
        %vm514 = vcmp.eq.s32.totalorder %v324, %v338
        %vm515 = vcmp.eq.s32.totalorder %v324, %v339
        %vm516 = vcmp.eq.s32.totalorder %v324, %v340
        %vm517 = vcmp.eq.s32.totalorder %v324, %v341
        %vm518 = vcmp.eq.s32.totalorder %v324, %v342
        %vm519 = vcmp.eq.s32.totalorder %v324, %v343
        %vm520 = vcmp.eq.s32.totalorder %v324, %v344
        %vm521 = vcmp.eq.s32.totalorder %v324, %v345
        %vm522 = vcmp.eq.s32.totalorder %v325, %v338
        %vm523 = vcmp.eq.s32.totalorder %v325, %v339
        %vm524 = vcmp.eq.s32.totalorder %v325, %v340
        %vm525 = vcmp.eq.s32.totalorder %v325, %v341
        %vm526 = vcmp.eq.s32.totalorder %v325, %v342
        %vm527 = vcmp.eq.s32.totalorder %v325, %v343
        %vm528 = vcmp.eq.s32.totalorder %v325, %v344
        %vm529 = vcmp.eq.s32.totalorder %v325, %v345
        %vm530 = vcmp.eq.s32.totalorder %v326, %v338
        %vm531 = vcmp.eq.s32.totalorder %v326, %v339
        %vm532 = vcmp.eq.s32.totalorder %v326, %v340
        %vm533 = vcmp.eq.s32.totalorder %v326, %v341
        %vm534 = vcmp.eq.s32.totalorder %v326, %v342
        %vm535 = vcmp.eq.s32.totalorder %v326, %v343
        %vm536 = vcmp.eq.s32.totalorder %v326, %v344
        %vm537 = vcmp.eq.s32.totalorder %v326, %v345
        %vm538 = vcmp.eq.s32.totalorder %v327, %v338
        %vm539 = vcmp.eq.s32.totalorder %v327, %v339
        %vm540 = vcmp.eq.s32.totalorder %v327, %v340
        %vm541 = vcmp.eq.s32.totalorder %v327, %v341
        %vm542 = vcmp.eq.s32.totalorder %v327, %v342
        %vm543 = vcmp.eq.s32.totalorder %v327, %v343
        %vm544 = vcmp.eq.s32.totalorder %v327, %v344
        %vm545 = vcmp.eq.s32.totalorder %v327, %v345
        %vm546 = vcmp.eq.s32.totalorder %v328, %v338
        %vm547 = vcmp.eq.s32.totalorder %v328, %v339
        %vm548 = vcmp.eq.s32.totalorder %v328, %v340
        %vm549 = vcmp.eq.s32.totalorder %v328, %v341
        %vm550 = vcmp.eq.s32.totalorder %v328, %v342
        %vm551 = vcmp.eq.s32.totalorder %v328, %v343
        %vm552 = vcmp.eq.s32.totalorder %v328, %v344
        %vm553 = vcmp.eq.s32.totalorder %v328, %v345
        %vm554 = vcmp.eq.s32.totalorder %v329, %v338
        %vm555 = vcmp.eq.s32.totalorder %v329, %v339
        %vm556 = vcmp.eq.s32.totalorder %v329, %v340
        %vm557 = vcmp.eq.s32.totalorder %v329, %v341
        %vm558 = vcmp.eq.s32.totalorder %v329, %v342
        %vm559 = vcmp.eq.s32.totalorder %v329, %v343
        %vm560 = vcmp.eq.s32.totalorder %v329, %v344
        %vm561 = vcmp.eq.s32.totalorder %v329, %v345
        %vm562 = vcmp.eq.s32.totalorder %v330, %v338
        %vm563 = vcmp.eq.s32.totalorder %v330, %v339
        %vm564 = vcmp.eq.s32.totalorder %v330, %v340
        %vm565 = vcmp.eq.s32.totalorder %v330, %v341
        %vm566 = vcmp.eq.s32.totalorder %v330, %v342
        %vm567 = vcmp.eq.s32.totalorder %v330, %v343
        %vm568 = vcmp.eq.s32.totalorder %v330, %v344
        %vm569 = vcmp.eq.s32.totalorder %v330, %v345
        %vm570 = vcmp.eq.s32.totalorder %v331, %v338
        %vm571 = vcmp.eq.s32.totalorder %v331, %v339
        %vm572 = vcmp.eq.s32.totalorder %v331, %v340
        %vm573 = vcmp.eq.s32.totalorder %v331, %v341
        %vm574 = vcmp.eq.s32.totalorder %v331, %v342
        %vm575 = vcmp.eq.s32.totalorder %v331, %v343
        %vm576 = vcmp.eq.s32.totalorder %v331, %v344
        %vm577 = vcmp.eq.s32.totalorder %v331, %v345
        %vm578 = vcmp.eq.s32.totalorder %v332, %v338
        %vm579 = vcmp.eq.s32.totalorder %v332, %v339
        %vm580 = vcmp.eq.s32.totalorder %v332, %v340
        %vm581 = vcmp.eq.s32.totalorder %v332, %v341
        %vm582 = vcmp.eq.s32.totalorder %v332, %v342
        %vm583 = vcmp.eq.s32.totalorder %v332, %v343
        %vm584 = vcmp.eq.s32.totalorder %v332, %v344
        %vm585 = vcmp.eq.s32.totalorder %v332, %v345
        %vm586 = vcmp.eq.s32.totalorder %v333, %v338
        %vm587 = vcmp.eq.s32.totalorder %v333, %v339
        %vm588 = vcmp.eq.s32.totalorder %v333, %v340
        %vm589 = vcmp.eq.s32.totalorder %v333, %v341
        %vm590 = vcmp.eq.s32.totalorder %v333, %v342
        %vm591 = vcmp.eq.s32.totalorder %v333, %v343
        %vm592 = vcmp.eq.s32.totalorder %v333, %v344
        %vm593 = vcmp.eq.s32.totalorder %v333, %v345
        %vm594 = vcmp.eq.s32.totalorder %v334, %v338
        %vm595 = vcmp.eq.s32.totalorder %v334, %v339
        %vm596 = vcmp.eq.s32.totalorder %v334, %v340
        %vm597 = vcmp.eq.s32.totalorder %v334, %v341
        %vm598 = vcmp.eq.s32.totalorder %v334, %v342
        %vm599 = vcmp.eq.s32.totalorder %v334, %v343
        %vm600 = vcmp.eq.s32.totalorder %v334, %v344
        %vm601 = vcmp.eq.s32.totalorder %v334, %v345
        %v602 = vsel %vm346, 1, 0
        %v603 = vsel %vm347, 1, 0
        %v604 = vsel %vm348, 1, 0
        %v605 = vsel %vm349, 1, 0
        %v606 = vsel %vm350, 1, 0
        %v607 = vsel %vm351, 1, 0
        %v608 = vsel %vm352, 1, 0
        %v609 = vsel %vm353, 1, 0
        %v610 = vsel %vm354, 1, 0
        %v611 = vsel %vm355, 1, 0
        %v612 = vsel %vm356, 1, 0
        %v613 = vsel %vm357, 1, 0
        %v614 = vsel %vm358, 1, 0
        %v615 = vsel %vm359, 1, 0
        %v616 = vsel %vm360, 1, 0
        %v617 = vsel %vm361, 1, 0
        %v618 = vsel %vm362, 1, 0
        %v619 = vsel %vm363, 1, 0
        %v620 = vsel %vm364, 1, 0
        %v621 = vsel %vm365, 1, 0
        %v622 = vsel %vm366, 1, 0
        %v623 = vsel %vm367, 1, 0
        %v624 = vsel %vm368, 1, 0
        %v625 = vsel %vm369, 1, 0
        %v626 = vsel %vm370, 1, 0
        %v627 = vsel %vm371, 1, 0
        %v628 = vsel %vm372, 1, 0
        %v629 = vsel %vm373, 1, 0
        %v630 = vsel %vm374, 1, 0
        %v631 = vsel %vm375, 1, 0
        %v632 = vsel %vm376, 1, 0
        %v633 = vsel %vm377, 1, 0
        %v634 = vsel %vm378, 1, 0
        %v635 = vsel %vm379, 1, 0
        %v636 = vsel %vm380, 1, 0
        %v637 = vsel %vm381, 1, 0
        %v638 = vsel %vm382, 1, 0
        %v639 = vsel %vm383, 1, 0
        %v640 = vsel %vm384, 1, 0
        %v641 = vsel %vm385, 1, 0
        %v642 = vsel %vm386, 1, 0
        %v643 = vsel %vm387, 1, 0
        %v644 = vsel %vm388, 1, 0
        %v645 = vsel %vm389, 1, 0
        %v646 = vsel %vm390, 1, 0
        %v647 = vsel %vm391, 1, 0
        %v648 = vsel %vm392, 1, 0
        %v649 = vsel %vm393, 1, 0
        %v650 = vsel %vm394, 1, 0
        %v651 = vsel %vm395, 1, 0
        %v652 = vsel %vm396, 1, 0
        %v653 = vsel %vm397, 1, 0
        %v654 = vsel %vm398, 1, 0
        %v655 = vsel %vm399, 1, 0
        %v656 = vsel %vm400, 1, 0
        %v657 = vsel %vm401, 1, 0
        %v658 = vsel %vm402, 1, 0
        %v659 = vsel %vm403, 1, 0
        %v660 = vsel %vm404, 1, 0
        %v661 = vsel %vm405, 1, 0
        %v662 = vsel %vm406, 1, 0
        %v663 = vsel %vm407, 1, 0
        %v664 = vsel %vm408, 1, 0
        %v665 = vsel %vm409, 1, 0
        %v666 = vsel %vm410, 1, 0
        %v667 = vsel %vm411, 1, 0
        %v668 = vsel %vm412, 1, 0
        %v669 = vsel %vm413, 1, 0
        %v670 = vsel %vm414, 1, 0
        %v671 = vsel %vm415, 1, 0
        %v672 = vsel %vm416, 1, 0
        %v673 = vsel %vm417, 1, 0
        %v674 = vsel %vm418, 1, 0
        %v675 = vsel %vm419, 1, 0
        %v676 = vsel %vm420, 1, 0
        %v677 = vsel %vm421, 1, 0
        %v678 = vsel %vm422, 1, 0
        %v679 = vsel %vm423, 1, 0
        %v680 = vsel %vm424, 1, 0
        %v681 = vsel %vm425, 1, 0
        %v682 = vsel %vm426, 1, 0
        %v683 = vsel %vm427, 1, 0
        %v684 = vsel %vm428, 1, 0
        %v685 = vsel %vm429, 1, 0
        %v686 = vsel %vm430, 1, 0
        %v687 = vsel %vm431, 1, 0
        %v688 = vsel %vm432, 1, 0
        %v689 = vsel %vm433, 1, 0
        %v690 = vsel %vm434, 1, 0
        %v691 = vsel %vm435, 1, 0
        %v692 = vsel %vm436, 1, 0
        %v693 = vsel %vm437, 1, 0
        %v694 = vsel %vm438, 1, 0
        %v695 = vsel %vm439, 1, 0
        %v696 = vsel %vm440, 1, 0
        %v697 = vsel %vm441, 1, 0
        %v698 = vsel %vm442, 1, 0
        %v699 = vsel %vm443, 1, 0
        %v700 = vsel %vm444, 1, 0
        %v701 = vsel %vm445, 1, 0
        %v702 = vsel %vm446, 1, 0
        %v703 = vsel %vm447, 1, 0
        %v704 = vsel %vm448, 1, 0
        %v705 = vsel %vm449, 1, 0
        %v706 = vsel %vm450, 1, 0
        %v707 = vsel %vm451, 1, 0
        %v708 = vsel %vm452, 1, 0
        %v709 = vsel %vm453, 1, 0
        %v710 = vsel %vm454, 1, 0
        %v711 = vsel %vm455, 1, 0
        %v712 = vsel %vm456, 1, 0
        %v713 = vsel %vm457, 1, 0
        %v714 = vsel %vm458, 1, 0
        %v715 = vsel %vm459, 1, 0
        %v716 = vsel %vm460, 1, 0
        %v717 = vsel %vm461, 1, 0
        %v718 = vsel %vm462, 1, 0
        %v719 = vsel %vm463, 1, 0
        %v720 = vsel %vm464, 1, 0
        %v721 = vsel %vm465, 1, 0
        %v722 = vsel %vm466, 1, 0
        %v723 = vsel %vm467, 1, 0
        %v724 = vsel %vm468, 1, 0
        %v725 = vsel %vm469, 1, 0
        %v726 = vsel %vm470, 1, 0
        %v727 = vsel %vm471, 1, 0
        %v728 = vsel %vm472, 1, 0
        %v729 = vsel %vm473, 1, 0
        %v730 = vsel %vm474, 1, 0
        %v731 = vsel %vm475, 1, 0
        %v732 = vsel %vm476, 1, 0
        %v733 = vsel %vm477, 1, 0
        %v734 = vsel %vm478, 1, 0
        %v735 = vsel %vm479, 1, 0
        %v736 = vsel %vm480, 1, 0
        %v737 = vsel %vm481, 1, 0
        %v738 = vsel %vm482, 1, 0
        %v739 = vsel %vm483, 1, 0
        %v740 = vsel %vm484, 1, 0
        %v741 = vsel %vm485, 1, 0
        %v742 = vsel %vm486, 1, 0
        %v743 = vsel %vm487, 1, 0
        %v744 = vsel %vm488, 1, 0
        %v745 = vsel %vm489, 1, 0
        %v746 = vsel %vm490, 1, 0
        %v747 = vsel %vm491, 1, 0
        %v748 = vsel %vm492, 1, 0
        %v749 = vsel %vm493, 1, 0
        %v750 = vsel %vm494, 1, 0
        %v751 = vsel %vm495, 1, 0
        %v752 = vsel %vm496, 1, 0
        %v753 = vsel %vm497, 1, 0
        %v754 = vsel %vm498, 1, 0
        %v755 = vsel %vm499, 1, 0
        %v756 = vsel %vm500, 1, 0
        %v757 = vsel %vm501, 1, 0
        %v758 = vsel %vm502, 1, 0
        %v759 = vsel %vm503, 1, 0
        %v760 = vsel %vm504, 1, 0
        %v761 = vsel %vm505, 1, 0
        %v762 = vsel %vm506, 1, 0
        %v763 = vsel %vm507, 1, 0
        %v764 = vsel %vm508, 1, 0
        %v765 = vsel %vm509, 1, 0
        %v766 = vsel %vm510, 1, 0
        %v767 = vsel %vm511, 1, 0
        %v768 = vsel %vm512, 1, 0
        %v769 = vsel %vm513, 1, 0
        %v770 = vsel %vm514, 1, 0
        %v771 = vsel %vm515, 1, 0
        %v772 = vsel %vm516, 1, 0
        %v773 = vsel %vm517, 1, 0
        %v774 = vsel %vm518, 1, 0
        %v775 = vsel %vm519, 1, 0
        %v776 = vsel %vm520, 1, 0
        %v777 = vsel %vm521, 1, 0
        %v778 = vsel %vm522, 1, 0
        %v779 = vsel %vm523, 1, 0
        %v780 = vsel %vm524, 1, 0
        %v781 = vsel %vm525, 1, 0
        %v782 = vsel %vm526, 1, 0
        %v783 = vsel %vm527, 1, 0
        %v784 = vsel %vm528, 1, 0
        %v785 = vsel %vm529, 1, 0
        %v786 = vsel %vm530, 1, 0
        %v787 = vsel %vm531, 1, 0
        %v788 = vsel %vm532, 1, 0
        %v789 = vsel %vm533, 1, 0
        %v790 = vsel %vm534, 1, 0
        %v791 = vsel %vm535, 1, 0
        %v792 = vsel %vm536, 1, 0
        %v793 = vsel %vm537, 1, 0
        %v794 = vsel %vm538, 1, 0
        %v795 = vsel %vm539, 1, 0
        %v796 = vsel %vm540, 1, 0
        %v797 = vsel %vm541, 1, 0
        %v798 = vsel %vm542, 1, 0
        %v799 = vsel %vm543, 1, 0
        %v800 = vsel %vm544, 1, 0
        %v801 = vsel %vm545, 1, 0
        %v802 = vsel %vm546, 1, 0
        %v803 = vsel %vm547, 1, 0
        %v804 = vsel %vm548, 1, 0
        %v805 = vsel %vm549, 1, 0
        %v806 = vsel %vm550, 1, 0
        %v807 = vsel %vm551, 1, 0
        %v808 = vsel %vm552, 1, 0
        %v809 = vsel %vm553, 1, 0
        %v810 = vsel %vm554, 1, 0
        %v811 = vsel %vm555, 1, 0
        %v812 = vsel %vm556, 1, 0
        %v813 = vsel %vm557, 1, 0
        %v814 = vsel %vm558, 1, 0
        %v815 = vsel %vm559, 1, 0
        %v816 = vsel %vm560, 1, 0
        %v817 = vsel %vm561, 1, 0
        %v818 = vsel %vm562, 1, 0
        %v819 = vsel %vm563, 1, 0
        %v820 = vsel %vm564, 1, 0
        %v821 = vsel %vm565, 1, 0
        %v822 = vsel %vm566, 1, 0
        %v823 = vsel %vm567, 1, 0
        %v824 = vsel %vm568, 1, 0
        %v825 = vsel %vm569, 1, 0
        %v826 = vsel %vm570, 1, 0
        %v827 = vsel %vm571, 1, 0
        %v828 = vsel %vm572, 1, 0
        %v829 = vsel %vm573, 1, 0
        %v830 = vsel %vm574, 1, 0
        %v831 = vsel %vm575, 1, 0
        %v832 = vsel %vm576, 1, 0
        %v833 = vsel %vm577, 1, 0
        %v834 = vsel %vm578, 1, 0
        %v835 = vsel %vm579, 1, 0
        %v836 = vsel %vm580, 1, 0
        %v837 = vsel %vm581, 1, 0
        %v838 = vsel %vm582, 1, 0
        %v839 = vsel %vm583, 1, 0
        %v840 = vsel %vm584, 1, 0
        %v841 = vsel %vm585, 1, 0
        %v842 = vsel %vm586, 1, 0
        %v843 = vsel %vm587, 1, 0
        %v844 = vsel %vm588, 1, 0
        %v845 = vsel %vm589, 1, 0
        %v846 = vsel %vm590, 1, 0
        %v847 = vsel %vm591, 1, 0
        %v848 = vsel %vm592, 1, 0
        %v849 = vsel %vm593, 1, 0
        %v850 = vsel %vm594, 1, 0
        %v851 = vsel %vm595, 1, 0
        %v852 = vsel %vm596, 1, 0
        %v853 = vsel %vm597, 1, 0
        %v854 = vsel %vm598, 1, 0
        %v855 = vsel %vm599, 1, 0
        %v856 = vsel %vm600, 1, 0
        %v857 = vsel %vm601, 1, 0
        %v858 = vcvt.s32.f32 %v602
        %v859 = vcvt.s32.f32 %v603
        %v860 = vcvt.s32.f32 %v604
        %v861 = vcvt.s32.f32 %v605
        %v862 = vcvt.s32.f32 %v606
        %v863 = vcvt.s32.f32 %v607
        %v864 = vcvt.s32.f32 %v608
        %v865 = vcvt.s32.f32 %v609
        %v866 = vcvt.s32.f32 %v610
        %v867 = vcvt.s32.f32 %v611
        %v868 = vcvt.s32.f32 %v612
        %v869 = vcvt.s32.f32 %v613
        %v870 = vcvt.s32.f32 %v614
        %v871 = vcvt.s32.f32 %v615
        %v872 = vcvt.s32.f32 %v616
        %v873 = vcvt.s32.f32 %v617
        %v874 = vcvt.s32.f32 %v618
        %v875 = vcvt.s32.f32 %v619
        %v876 = vcvt.s32.f32 %v620
        %v877 = vcvt.s32.f32 %v621
        %v878 = vcvt.s32.f32 %v622
        %v879 = vcvt.s32.f32 %v623
        %v880 = vcvt.s32.f32 %v624
        %v881 = vcvt.s32.f32 %v625
        %v882 = vcvt.s32.f32 %v626
        %v883 = vcvt.s32.f32 %v627
        %v884 = vcvt.s32.f32 %v628
        %v885 = vcvt.s32.f32 %v629
        %v886 = vcvt.s32.f32 %v630
        %v887 = vcvt.s32.f32 %v631
        %v888 = vcvt.s32.f32 %v632
        %v889 = vcvt.s32.f32 %v633
        %v890 = vcvt.s32.f32 %v634
        %v891 = vcvt.s32.f32 %v635
        %v892 = vcvt.s32.f32 %v636
        %v893 = vcvt.s32.f32 %v637
        %v894 = vcvt.s32.f32 %v638
        %v895 = vcvt.s32.f32 %v639
        %v896 = vcvt.s32.f32 %v640
        %v897 = vcvt.s32.f32 %v641
        %v898 = vcvt.s32.f32 %v642
        %v899 = vcvt.s32.f32 %v643
        %v900 = vcvt.s32.f32 %v644
        %v901 = vcvt.s32.f32 %v645
        %v902 = vcvt.s32.f32 %v646
        %v903 = vcvt.s32.f32 %v647
        %v904 = vcvt.s32.f32 %v648
        %v905 = vcvt.s32.f32 %v649
        %v906 = vcvt.s32.f32 %v650
        %v907 = vcvt.s32.f32 %v651
        %v908 = vcvt.s32.f32 %v652
        %v909 = vcvt.s32.f32 %v653
        %v910 = vcvt.s32.f32 %v654
        %v911 = vcvt.s32.f32 %v655
        %v912 = vcvt.s32.f32 %v656
        %v913 = vcvt.s32.f32 %v657
        %v914 = vcvt.s32.f32 %v658
        %v915 = vcvt.s32.f32 %v659
        %v916 = vcvt.s32.f32 %v660
        %v917 = vcvt.s32.f32 %v661
        %v918 = vcvt.s32.f32 %v662
        %v919 = vcvt.s32.f32 %v663
        %v920 = vcvt.s32.f32 %v664
        %v921 = vcvt.s32.f32 %v665
        %v922 = vcvt.s32.f32 %v666
        %v923 = vcvt.s32.f32 %v667
        %v924 = vcvt.s32.f32 %v668
        %v925 = vcvt.s32.f32 %v669
        %v926 = vcvt.s32.f32 %v670
        %v927 = vcvt.s32.f32 %v671
        %v928 = vcvt.s32.f32 %v672
        %v929 = vcvt.s32.f32 %v673
        %v930 = vcvt.s32.f32 %v674
        %v931 = vcvt.s32.f32 %v675
        %v932 = vcvt.s32.f32 %v676
        %v933 = vcvt.s32.f32 %v677
        %v934 = vcvt.s32.f32 %v678
        %v935 = vcvt.s32.f32 %v679
        %v936 = vcvt.s32.f32 %v680
        %v937 = vcvt.s32.f32 %v681
        %v938 = vcvt.s32.f32 %v682
        %v939 = vcvt.s32.f32 %v683
        %v940 = vcvt.s32.f32 %v684
        %v941 = vcvt.s32.f32 %v685
        %v942 = vcvt.s32.f32 %v686
        %v943 = vcvt.s32.f32 %v687
        %v944 = vcvt.s32.f32 %v688
        %v945 = vcvt.s32.f32 %v689
        %v946 = vcvt.s32.f32 %v690
        %v947 = vcvt.s32.f32 %v691
        %v948 = vcvt.s32.f32 %v692
        %v949 = vcvt.s32.f32 %v693
        %v950 = vcvt.s32.f32 %v694
        %v951 = vcvt.s32.f32 %v695
        %v952 = vcvt.s32.f32 %v696
        %v953 = vcvt.s32.f32 %v697
        %v954 = vcvt.s32.f32 %v698
        %v955 = vcvt.s32.f32 %v699
        %v956 = vcvt.s32.f32 %v700
        %v957 = vcvt.s32.f32 %v701
        %v958 = vcvt.s32.f32 %v702
        %v959 = vcvt.s32.f32 %v703
        %v960 = vcvt.s32.f32 %v704
        %v961 = vcvt.s32.f32 %v705
        %v962 = vcvt.s32.f32 %v706
        %v963 = vcvt.s32.f32 %v707
        %v964 = vcvt.s32.f32 %v708
        %v965 = vcvt.s32.f32 %v709
        %v966 = vcvt.s32.f32 %v710
        %v967 = vcvt.s32.f32 %v711
        %v968 = vcvt.s32.f32 %v712
        %v969 = vcvt.s32.f32 %v713
        %v970 = vcvt.s32.f32 %v714
        %v971 = vcvt.s32.f32 %v715
        %v972 = vcvt.s32.f32 %v716
        %v973 = vcvt.s32.f32 %v717
        %v974 = vcvt.s32.f32 %v718
        %v975 = vcvt.s32.f32 %v719
        %v976 = vcvt.s32.f32 %v720
        %v977 = vcvt.s32.f32 %v721
        %v978 = vcvt.s32.f32 %v722
        %v979 = vcvt.s32.f32 %v723
        %v980 = vcvt.s32.f32 %v724
        %v981 = vcvt.s32.f32 %v725
        %v982 = vcvt.s32.f32 %v726
        %v983 = vcvt.s32.f32 %v727
        %v984 = vcvt.s32.f32 %v728
        %v985 = vcvt.s32.f32 %v729
        %v986 = vcvt.s32.f32 %v730
        %v987 = vcvt.s32.f32 %v731
        %v988 = vcvt.s32.f32 %v732
        %v989 = vcvt.s32.f32 %v733
        %v990 = vcvt.s32.f32 %v734
        %v991 = vcvt.s32.f32 %v735
        %v992 = vcvt.s32.f32 %v736
        %v993 = vcvt.s32.f32 %v737
        %v994 = vcvt.s32.f32 %v738
        %v995 = vcvt.s32.f32 %v739
        %v996 = vcvt.s32.f32 %v740
        %v997 = vcvt.s32.f32 %v741
        %v998 = vcvt.s32.f32 %v742
        %v999 = vcvt.s32.f32 %v743
        %v1000 = vcvt.s32.f32 %v744
        %v1001 = vcvt.s32.f32 %v745
        %v1002 = vcvt.s32.f32 %v746
        %v1003 = vcvt.s32.f32 %v747
        %v1004 = vcvt.s32.f32 %v748
        %v1005 = vcvt.s32.f32 %v749
        %v1006 = vcvt.s32.f32 %v750
        %v1007 = vcvt.s32.f32 %v751
        %v1008 = vcvt.s32.f32 %v752
        %v1009 = vcvt.s32.f32 %v753
        %v1010 = vcvt.s32.f32 %v754
        %v1011 = vcvt.s32.f32 %v755
        %v1012 = vcvt.s32.f32 %v756
        %v1013 = vcvt.s32.f32 %v757
        %v1014 = vcvt.s32.f32 %v758
        %v1015 = vcvt.s32.f32 %v759
        %v1016 = vcvt.s32.f32 %v760
        %v1017 = vcvt.s32.f32 %v761
        %v1018 = vcvt.s32.f32 %v762
        %v1019 = vcvt.s32.f32 %v763
        %v1020 = vcvt.s32.f32 %v764
        %v1021 = vcvt.s32.f32 %v765
        %v1022 = vcvt.s32.f32 %v766
        %v1023 = vcvt.s32.f32 %v767
        %v1024 = vcvt.s32.f32 %v768
        %v1025 = vcvt.s32.f32 %v769
        %v1026 = vcvt.s32.f32 %v770
        %v1027 = vcvt.s32.f32 %v771
        %v1028 = vcvt.s32.f32 %v772
        %v1029 = vcvt.s32.f32 %v773
        %v1030 = vcvt.s32.f32 %v774
        %v1031 = vcvt.s32.f32 %v775
        %v1032 = vcvt.s32.f32 %v776
        %v1033 = vcvt.s32.f32 %v777
        %v1034 = vcvt.s32.f32 %v778
        %v1035 = vcvt.s32.f32 %v779
        %v1036 = vcvt.s32.f32 %v780
        %v1037 = vcvt.s32.f32 %v781
        %v1038 = vcvt.s32.f32 %v782
        %v1039 = vcvt.s32.f32 %v783
        %v1040 = vcvt.s32.f32 %v784
        %v1041 = vcvt.s32.f32 %v785
        %v1042 = vcvt.s32.f32 %v786
        %v1043 = vcvt.s32.f32 %v787
        %v1044 = vcvt.s32.f32 %v788
        %v1045 = vcvt.s32.f32 %v789
        %v1046 = vcvt.s32.f32 %v790
        %v1047 = vcvt.s32.f32 %v791
        %v1048 = vcvt.s32.f32 %v792
        %v1049 = vcvt.s32.f32 %v793
        %v1050 = vcvt.s32.f32 %v794
        %v1051 = vcvt.s32.f32 %v795
        %v1052 = vcvt.s32.f32 %v796
        %v1053 = vcvt.s32.f32 %v797
        %v1054 = vcvt.s32.f32 %v798
        %v1055 = vcvt.s32.f32 %v799
        %v1056 = vcvt.s32.f32 %v800
        %v1057 = vcvt.s32.f32 %v801
        %v1058 = vcvt.s32.f32 %v802
        %v1059 = vcvt.s32.f32 %v803
        %v1060 = vcvt.s32.f32 %v804
        %v1061 = vcvt.s32.f32 %v805
        %v1062 = vcvt.s32.f32 %v806
        %v1063 = vcvt.s32.f32 %v807
        %v1064 = vcvt.s32.f32 %v808
        %v1065 = vcvt.s32.f32 %v809
        %v1066 = vcvt.s32.f32 %v810
        %v1067 = vcvt.s32.f32 %v811
        %v1068 = vcvt.s32.f32 %v812
        %v1069 = vcvt.s32.f32 %v813
        %v1070 = vcvt.s32.f32 %v814
        %v1071 = vcvt.s32.f32 %v815
        %v1072 = vcvt.s32.f32 %v816
        %v1073 = vcvt.s32.f32 %v817
        %v1074 = vcvt.s32.f32 %v818
        %v1075 = vcvt.s32.f32 %v819
        %v1076 = vcvt.s32.f32 %v820
        %v1077 = vcvt.s32.f32 %v821
        %v1078 = vcvt.s32.f32 %v822
        %v1079 = vcvt.s32.f32 %v823
        %v1080 = vcvt.s32.f32 %v824
        %v1081 = vcvt.s32.f32 %v825
        %v1082 = vcvt.s32.f32 %v826
        %v1083 = vcvt.s32.f32 %v827
        %v1084 = vcvt.s32.f32 %v828
        %v1085 = vcvt.s32.f32 %v829
        %v1086 = vcvt.s32.f32 %v830
        %v1087 = vcvt.s32.f32 %v831
        %v1088 = vcvt.s32.f32 %v832
        %v1089 = vcvt.s32.f32 %v833
        %v1090 = vcvt.s32.f32 %v834
        %v1091 = vcvt.s32.f32 %v835
        %v1092 = vcvt.s32.f32 %v836
        %v1093 = vcvt.s32.f32 %v837
        %v1094 = vcvt.s32.f32 %v838
        %v1095 = vcvt.s32.f32 %v839
        %v1096 = vcvt.s32.f32 %v840
        %v1097 = vcvt.s32.f32 %v841
        %v1098 = vcvt.s32.f32 %v842
        %v1099 = vcvt.s32.f32 %v843
        %v1100 = vcvt.s32.f32 %v844
        %v1101 = vcvt.s32.f32 %v845
        %v1102 = vcvt.s32.f32 %v846
        %v1103 = vcvt.s32.f32 %v847
        %v1104 = vcvt.s32.f32 %v848
        %v1105 = vcvt.s32.f32 %v849
        %v1106 = vcvt.s32.f32 %v850
        %v1107 = vcvt.s32.f32 %v851
        %v1108 = vcvt.s32.f32 %v852
        %v1109 = vcvt.s32.f32 %v853
        %v1110 = vcvt.s32.f32 %v854
        %v1111 = vcvt.s32.f32 %v855
        %v1112 = vcvt.s32.f32 %v856
        %v1113 = vcvt.s32.f32 %v857
        %v1114 = vpack.c.bf16 %v859, %v858
        %v1115 = vpack.c.bf16 %v861, %v860
        %v1116 = vpack.c.bf16 %v863, %v862
        %v1117 = vpack.c.bf16 %v865, %v864
        %v1118 = vpack.c.bf16 %v867, %v866
        %v1119 = vpack.c.bf16 %v869, %v868
        %v1120 = vpack.c.bf16 %v871, %v870
        %v1121 = vpack.c.bf16 %v873, %v872
        %v1122 = vpack.c.bf16 %v875, %v874
        %v1123 = vpack.c.bf16 %v877, %v876
        %v1124 = vpack.c.bf16 %v879, %v878
        %v1125 = vpack.c.bf16 %v881, %v880
        %v1126 = vpack.c.bf16 %v883, %v882
        %v1127 = vpack.c.bf16 %v885, %v884
        %v1128 = vpack.c.bf16 %v887, %v886
        %v1129 = vpack.c.bf16 %v889, %v888
        %v1130 = vpack.c.bf16 %v891, %v890
        %v1131 = vpack.c.bf16 %v893, %v892
        %v1132 = vpack.c.bf16 %v895, %v894
        %v1133 = vpack.c.bf16 %v897, %v896
        %v1134 = vpack.c.bf16 %v899, %v898
        %v1135 = vpack.c.bf16 %v901, %v900
        %v1136 = vpack.c.bf16 %v903, %v902
        %v1137 = vpack.c.bf16 %v905, %v904
        %v1138 = vpack.c.bf16 %v907, %v906
        %v1139 = vpack.c.bf16 %v909, %v908
        %v1140 = vpack.c.bf16 %v911, %v910
        %v1141 = vpack.c.bf16 %v913, %v912
        %v1142 = vpack.c.bf16 %v915, %v914
        %v1143 = vpack.c.bf16 %v917, %v916
        %v1144 = vpack.c.bf16 %v919, %v918
        %v1145 = vpack.c.bf16 %v921, %v920
        %v1146 = vpack.c.bf16 %v923, %v922
        %v1147 = vpack.c.bf16 %v925, %v924
        %v1148 = vpack.c.bf16 %v927, %v926
        %v1149 = vpack.c.bf16 %v929, %v928
        %v1150 = vpack.c.bf16 %v931, %v930
        %v1151 = vpack.c.bf16 %v933, %v932
        %v1152 = vpack.c.bf16 %v935, %v934
        %v1153 = vpack.c.bf16 %v937, %v936
        %v1154 = vpack.c.bf16 %v939, %v938
        %v1155 = vpack.c.bf16 %v941, %v940
        %v1156 = vpack.c.bf16 %v943, %v942
        %v1157 = vpack.c.bf16 %v945, %v944
        %v1158 = vpack.c.bf16 %v947, %v946
        %v1159 = vpack.c.bf16 %v949, %v948
        %v1160 = vpack.c.bf16 %v951, %v950
        %v1161 = vpack.c.bf16 %v953, %v952
        %v1162 = vpack.c.bf16 %v955, %v954
        %v1163 = vpack.c.bf16 %v957, %v956
        %v1164 = vpack.c.bf16 %v959, %v958
        %v1165 = vpack.c.bf16 %v961, %v960
        %v1166 = vpack.c.bf16 %v963, %v962
        %v1167 = vpack.c.bf16 %v965, %v964
        %v1168 = vpack.c.bf16 %v967, %v966
        %v1169 = vpack.c.bf16 %v969, %v968
        %v1170 = vpack.c.bf16 %v971, %v970
        %v1171 = vpack.c.bf16 %v973, %v972
        %v1172 = vpack.c.bf16 %v975, %v974
        %v1173 = vpack.c.bf16 %v977, %v976
        %v1174 = vpack.c.bf16 %v979, %v978
        %v1175 = vpack.c.bf16 %v981, %v980
        %v1176 = vpack.c.bf16 %v983, %v982
        %v1177 = vpack.c.bf16 %v985, %v984
        %v1178 = vpack.c.bf16 %v987, %v986
        %v1179 = vpack.c.bf16 %v989, %v988
        %v1180 = vpack.c.bf16 %v991, %v990
        %v1181 = vpack.c.bf16 %v993, %v992
        %v1182 = vpack.c.bf16 %v995, %v994
        %v1183 = vpack.c.bf16 %v997, %v996
        %v1184 = vpack.c.bf16 %v999, %v998
        %v1185 = vpack.c.bf16 %v1001, %v1000
        %v1186 = vpack.c.bf16 %v1003, %v1002
        %v1187 = vpack.c.bf16 %v1005, %v1004
        %v1188 = vpack.c.bf16 %v1007, %v1006
        %v1189 = vpack.c.bf16 %v1009, %v1008
        %v1190 = vpack.c.bf16 %v1011, %v1010
        %v1191 = vpack.c.bf16 %v1013, %v1012
        %v1192 = vpack.c.bf16 %v1015, %v1014
        %v1193 = vpack.c.bf16 %v1017, %v1016
        %v1194 = vpack.c.bf16 %v1019, %v1018
        %v1195 = vpack.c.bf16 %v1021, %v1020
        %v1196 = vpack.c.bf16 %v1023, %v1022
        %v1197 = vpack.c.bf16 %v1025, %v1024
        %v1198 = vpack.c.bf16 %v1027, %v1026
        %v1199 = vpack.c.bf16 %v1029, %v1028
        %v1200 = vpack.c.bf16 %v1031, %v1030
        %v1201 = vpack.c.bf16 %v1033, %v1032
        %v1202 = vpack.c.bf16 %v1035, %v1034
        %v1203 = vpack.c.bf16 %v1037, %v1036
        %v1204 = vpack.c.bf16 %v1039, %v1038
        %v1205 = vpack.c.bf16 %v1041, %v1040
        %v1206 = vpack.c.bf16 %v1043, %v1042
        %v1207 = vpack.c.bf16 %v1045, %v1044
        %v1208 = vpack.c.bf16 %v1047, %v1046
        %v1209 = vpack.c.bf16 %v1049, %v1048
        %v1210 = vpack.c.bf16 %v1051, %v1050
        %v1211 = vpack.c.bf16 %v1053, %v1052
        %v1212 = vpack.c.bf16 %v1055, %v1054
        %v1213 = vpack.c.bf16 %v1057, %v1056
        %v1214 = vpack.c.bf16 %v1059, %v1058
        %v1215 = vpack.c.bf16 %v1061, %v1060
        %v1216 = vpack.c.bf16 %v1063, %v1062
        %v1217 = vpack.c.bf16 %v1065, %v1064
        %v1218 = vpack.c.bf16 %v1067, %v1066
        %v1219 = vpack.c.bf16 %v1069, %v1068
        %v1220 = vpack.c.bf16 %v1071, %v1070
        %v1221 = vpack.c.bf16 %v1073, %v1072
        %v1222 = vpack.c.bf16 %v1075, %v1074
        %v1223 = vpack.c.bf16 %v1077, %v1076
        %v1224 = vpack.c.bf16 %v1079, %v1078
        %v1225 = vpack.c.bf16 %v1081, %v1080
        %v1226 = vpack.c.bf16 %v1083, %v1082
        %v1227 = vpack.c.bf16 %v1085, %v1084
        %v1228 = vpack.c.bf16 %v1087, %v1086
        %v1229 = vpack.c.bf16 %v1089, %v1088
        %v1230 = vpack.c.bf16 %v1091, %v1090
        %v1231 = vpack.c.bf16 %v1093, %v1092
        %v1232 = vpack.c.bf16 %v1095, %v1094
        %v1233 = vpack.c.bf16 %v1097, %v1096
        %v1234 = vpack.c.bf16 %v1099, %v1098
        %v1235 = vpack.c.bf16 %v1101, %v1100
        %v1236 = vpack.c.bf16 %v1103, %v1102
        %v1237 = vpack.c.bf16 %v1105, %v1104
        %v1238 = vpack.c.bf16 %v1107, %v1106
        %v1239 = vpack.c.bf16 %v1109, %v1108
        %v1240 = vpack.c.bf16 %v1111, %v1110
        %v1241 = vpack.c.bf16 %v1113, %v1112
        %v1242 = vperm.slane %v335, 0
        %v1243 = vperm.slane %v335, 1
        %v1244 = vperm.slane %v335, 2
        %v1245 = vperm.slane %v335, 3
        %v1246 = vperm.slane %v335, 4
        %v1247 = vperm.slane %v335, 5
        %v1248 = vperm.slane %v335, 6
        %v1249 = vperm.slane %v335, 7
        %vm1250 = vcmp.eq.s32.totalorder %v303, %v1242
        %vm1251 = vcmp.eq.s32.totalorder %v303, %v1243
        %vm1252 = vcmp.eq.s32.totalorder %v303, %v1244
        %vm1253 = vcmp.eq.s32.totalorder %v303, %v1245
        %vm1254 = vcmp.eq.s32.totalorder %v303, %v1246
        %vm1255 = vcmp.eq.s32.totalorder %v303, %v1247
        %vm1256 = vcmp.eq.s32.totalorder %v303, %v1248
        %vm1257 = vcmp.eq.s32.totalorder %v303, %v1249
        %vm1258 = vcmp.eq.s32.totalorder %v304, %v1242
        %vm1259 = vcmp.eq.s32.totalorder %v304, %v1243
        %vm1260 = vcmp.eq.s32.totalorder %v304, %v1244
        %vm1261 = vcmp.eq.s32.totalorder %v304, %v1245
        %vm1262 = vcmp.eq.s32.totalorder %v304, %v1246
        %vm1263 = vcmp.eq.s32.totalorder %v304, %v1247
        %vm1264 = vcmp.eq.s32.totalorder %v304, %v1248
        %vm1265 = vcmp.eq.s32.totalorder %v304, %v1249
        %vm1266 = vcmp.eq.s32.totalorder %v305, %v1242
        %vm1267 = vcmp.eq.s32.totalorder %v305, %v1243
        %vm1268 = vcmp.eq.s32.totalorder %v305, %v1244
        %vm1269 = vcmp.eq.s32.totalorder %v305, %v1245
        %vm1270 = vcmp.eq.s32.totalorder %v305, %v1246
        %vm1271 = vcmp.eq.s32.totalorder %v305, %v1247
        %vm1272 = vcmp.eq.s32.totalorder %v305, %v1248
        %vm1273 = vcmp.eq.s32.totalorder %v305, %v1249
        %vm1274 = vcmp.eq.s32.totalorder %v306, %v1242
        %vm1275 = vcmp.eq.s32.totalorder %v306, %v1243
        %vm1276 = vcmp.eq.s32.totalorder %v306, %v1244
        %vm1277 = vcmp.eq.s32.totalorder %v306, %v1245
        %vm1278 = vcmp.eq.s32.totalorder %v306, %v1246
        %vm1279 = vcmp.eq.s32.totalorder %v306, %v1247
        %vm1280 = vcmp.eq.s32.totalorder %v306, %v1248
        %vm1281 = vcmp.eq.s32.totalorder %v306, %v1249
        %vm1282 = vcmp.eq.s32.totalorder %v307, %v1242
        %vm1283 = vcmp.eq.s32.totalorder %v307, %v1243
        %vm1284 = vcmp.eq.s32.totalorder %v307, %v1244
        %vm1285 = vcmp.eq.s32.totalorder %v307, %v1245
        %vm1286 = vcmp.eq.s32.totalorder %v307, %v1246
        %vm1287 = vcmp.eq.s32.totalorder %v307, %v1247
        %vm1288 = vcmp.eq.s32.totalorder %v307, %v1248
        %vm1289 = vcmp.eq.s32.totalorder %v307, %v1249
        %vm1290 = vcmp.eq.s32.totalorder %v308, %v1242
        %vm1291 = vcmp.eq.s32.totalorder %v308, %v1243
        %vm1292 = vcmp.eq.s32.totalorder %v308, %v1244
        %vm1293 = vcmp.eq.s32.totalorder %v308, %v1245
        %vm1294 = vcmp.eq.s32.totalorder %v308, %v1246
        %vm1295 = vcmp.eq.s32.totalorder %v308, %v1247
        %vm1296 = vcmp.eq.s32.totalorder %v308, %v1248
        %vm1297 = vcmp.eq.s32.totalorder %v308, %v1249
        %vm1298 = vcmp.eq.s32.totalorder %v309, %v1242
        %vm1299 = vcmp.eq.s32.totalorder %v309, %v1243
        %vm1300 = vcmp.eq.s32.totalorder %v309, %v1244
        %vm1301 = vcmp.eq.s32.totalorder %v309, %v1245
        %vm1302 = vcmp.eq.s32.totalorder %v309, %v1246
        %vm1303 = vcmp.eq.s32.totalorder %v309, %v1247
        %vm1304 = vcmp.eq.s32.totalorder %v309, %v1248
        %vm1305 = vcmp.eq.s32.totalorder %v309, %v1249
        %vm1306 = vcmp.eq.s32.totalorder %v310, %v1242
        %vm1307 = vcmp.eq.s32.totalorder %v310, %v1243
        %vm1308 = vcmp.eq.s32.totalorder %v310, %v1244
        %vm1309 = vcmp.eq.s32.totalorder %v310, %v1245
        %vm1310 = vcmp.eq.s32.totalorder %v310, %v1246
        %vm1311 = vcmp.eq.s32.totalorder %v310, %v1247
        %vm1312 = vcmp.eq.s32.totalorder %v310, %v1248
        %vm1313 = vcmp.eq.s32.totalorder %v310, %v1249
        %vm1314 = vcmp.eq.s32.totalorder %v311, %v1242
        %vm1315 = vcmp.eq.s32.totalorder %v311, %v1243
        %vm1316 = vcmp.eq.s32.totalorder %v311, %v1244
        %vm1317 = vcmp.eq.s32.totalorder %v311, %v1245
        %vm1318 = vcmp.eq.s32.totalorder %v311, %v1246
        %vm1319 = vcmp.eq.s32.totalorder %v311, %v1247
        %vm1320 = vcmp.eq.s32.totalorder %v311, %v1248
        %vm1321 = vcmp.eq.s32.totalorder %v311, %v1249
        %vm1322 = vcmp.eq.s32.totalorder %v312, %v1242
        %vm1323 = vcmp.eq.s32.totalorder %v312, %v1243
        %vm1324 = vcmp.eq.s32.totalorder %v312, %v1244
        %vm1325 = vcmp.eq.s32.totalorder %v312, %v1245
        %vm1326 = vcmp.eq.s32.totalorder %v312, %v1246
        %vm1327 = vcmp.eq.s32.totalorder %v312, %v1247
        %vm1328 = vcmp.eq.s32.totalorder %v312, %v1248
        %vm1329 = vcmp.eq.s32.totalorder %v312, %v1249
        %vm1330 = vcmp.eq.s32.totalorder %v313, %v1242
        %vm1331 = vcmp.eq.s32.totalorder %v313, %v1243
        %vm1332 = vcmp.eq.s32.totalorder %v313, %v1244
        %vm1333 = vcmp.eq.s32.totalorder %v313, %v1245
        %vm1334 = vcmp.eq.s32.totalorder %v313, %v1246
        %vm1335 = vcmp.eq.s32.totalorder %v313, %v1247
        %vm1336 = vcmp.eq.s32.totalorder %v313, %v1248
        %vm1337 = vcmp.eq.s32.totalorder %v313, %v1249
        %vm1338 = vcmp.eq.s32.totalorder %v314, %v1242
        %vm1339 = vcmp.eq.s32.totalorder %v314, %v1243
        %vm1340 = vcmp.eq.s32.totalorder %v314, %v1244
        %vm1341 = vcmp.eq.s32.totalorder %v314, %v1245
        %vm1342 = vcmp.eq.s32.totalorder %v314, %v1246
        %vm1343 = vcmp.eq.s32.totalorder %v314, %v1247
        %vm1344 = vcmp.eq.s32.totalorder %v314, %v1248
        %vm1345 = vcmp.eq.s32.totalorder %v314, %v1249
        %vm1346 = vcmp.eq.s32.totalorder %v315, %v1242
        %vm1347 = vcmp.eq.s32.totalorder %v315, %v1243
        %vm1348 = vcmp.eq.s32.totalorder %v315, %v1244
        %vm1349 = vcmp.eq.s32.totalorder %v315, %v1245
        %vm1350 = vcmp.eq.s32.totalorder %v315, %v1246
        %vm1351 = vcmp.eq.s32.totalorder %v315, %v1247
        %vm1352 = vcmp.eq.s32.totalorder %v315, %v1248
        %vm1353 = vcmp.eq.s32.totalorder %v315, %v1249
        %vm1354 = vcmp.eq.s32.totalorder %v316, %v1242
        %vm1355 = vcmp.eq.s32.totalorder %v316, %v1243
        %vm1356 = vcmp.eq.s32.totalorder %v316, %v1244
        %vm1357 = vcmp.eq.s32.totalorder %v316, %v1245
        %vm1358 = vcmp.eq.s32.totalorder %v316, %v1246
        %vm1359 = vcmp.eq.s32.totalorder %v316, %v1247
        %vm1360 = vcmp.eq.s32.totalorder %v316, %v1248
        %vm1361 = vcmp.eq.s32.totalorder %v316, %v1249
        %vm1362 = vcmp.eq.s32.totalorder %v317, %v1242
        %vm1363 = vcmp.eq.s32.totalorder %v317, %v1243
        %vm1364 = vcmp.eq.s32.totalorder %v317, %v1244
        %vm1365 = vcmp.eq.s32.totalorder %v317, %v1245
        %vm1366 = vcmp.eq.s32.totalorder %v317, %v1246
        %vm1367 = vcmp.eq.s32.totalorder %v317, %v1247
        %vm1368 = vcmp.eq.s32.totalorder %v317, %v1248
        %vm1369 = vcmp.eq.s32.totalorder %v317, %v1249
        %vm1370 = vcmp.eq.s32.totalorder %v318, %v1242
        %vm1371 = vcmp.eq.s32.totalorder %v318, %v1243
        %vm1372 = vcmp.eq.s32.totalorder %v318, %v1244
        %vm1373 = vcmp.eq.s32.totalorder %v318, %v1245
        %vm1374 = vcmp.eq.s32.totalorder %v318, %v1246
        %vm1375 = vcmp.eq.s32.totalorder %v318, %v1247
        %vm1376 = vcmp.eq.s32.totalorder %v318, %v1248
        %vm1377 = vcmp.eq.s32.totalorder %v318, %v1249
        %vm1378 = vcmp.eq.s32.totalorder %v319, %v1242
        %vm1379 = vcmp.eq.s32.totalorder %v319, %v1243
        %vm1380 = vcmp.eq.s32.totalorder %v319, %v1244
        %vm1381 = vcmp.eq.s32.totalorder %v319, %v1245
        %vm1382 = vcmp.eq.s32.totalorder %v319, %v1246
        %vm1383 = vcmp.eq.s32.totalorder %v319, %v1247
        %vm1384 = vcmp.eq.s32.totalorder %v319, %v1248
        %vm1385 = vcmp.eq.s32.totalorder %v319, %v1249
        %vm1386 = vcmp.eq.s32.totalorder %v320, %v1242
        %vm1387 = vcmp.eq.s32.totalorder %v320, %v1243
        %vm1388 = vcmp.eq.s32.totalorder %v320, %v1244
        %vm1389 = vcmp.eq.s32.totalorder %v320, %v1245
        %vm1390 = vcmp.eq.s32.totalorder %v320, %v1246
        %vm1391 = vcmp.eq.s32.totalorder %v320, %v1247
        %vm1392 = vcmp.eq.s32.totalorder %v320, %v1248
        %vm1393 = vcmp.eq.s32.totalorder %v320, %v1249
        %vm1394 = vcmp.eq.s32.totalorder %v321, %v1242
        %vm1395 = vcmp.eq.s32.totalorder %v321, %v1243
        %vm1396 = vcmp.eq.s32.totalorder %v321, %v1244
        %vm1397 = vcmp.eq.s32.totalorder %v321, %v1245
        %vm1398 = vcmp.eq.s32.totalorder %v321, %v1246
        %vm1399 = vcmp.eq.s32.totalorder %v321, %v1247
        %vm1400 = vcmp.eq.s32.totalorder %v321, %v1248
        %vm1401 = vcmp.eq.s32.totalorder %v321, %v1249
        %vm1402 = vcmp.eq.s32.totalorder %v322, %v1242
        %vm1403 = vcmp.eq.s32.totalorder %v322, %v1243
        %vm1404 = vcmp.eq.s32.totalorder %v322, %v1244
        %vm1405 = vcmp.eq.s32.totalorder %v322, %v1245
        %vm1406 = vcmp.eq.s32.totalorder %v322, %v1246
        %vm1407 = vcmp.eq.s32.totalorder %v322, %v1247
        %vm1408 = vcmp.eq.s32.totalorder %v322, %v1248
        %vm1409 = vcmp.eq.s32.totalorder %v322, %v1249
        %vm1410 = vcmp.eq.s32.totalorder %v323, %v1242
        %vm1411 = vcmp.eq.s32.totalorder %v323, %v1243
        %vm1412 = vcmp.eq.s32.totalorder %v323, %v1244
        %vm1413 = vcmp.eq.s32.totalorder %v323, %v1245
        %vm1414 = vcmp.eq.s32.totalorder %v323, %v1246
        %vm1415 = vcmp.eq.s32.totalorder %v323, %v1247
        %vm1416 = vcmp.eq.s32.totalorder %v323, %v1248
        %vm1417 = vcmp.eq.s32.totalorder %v323, %v1249
        %vm1418 = vcmp.eq.s32.totalorder %v324, %v1242
        %vm1419 = vcmp.eq.s32.totalorder %v324, %v1243
        %vm1420 = vcmp.eq.s32.totalorder %v324, %v1244
        %vm1421 = vcmp.eq.s32.totalorder %v324, %v1245
        %vm1422 = vcmp.eq.s32.totalorder %v324, %v1246
        %vm1423 = vcmp.eq.s32.totalorder %v324, %v1247
        %vm1424 = vcmp.eq.s32.totalorder %v324, %v1248
        %vm1425 = vcmp.eq.s32.totalorder %v324, %v1249
        %vm1426 = vcmp.eq.s32.totalorder %v325, %v1242
        %vm1427 = vcmp.eq.s32.totalorder %v325, %v1243
        %vm1428 = vcmp.eq.s32.totalorder %v325, %v1244
        %vm1429 = vcmp.eq.s32.totalorder %v325, %v1245
        %vm1430 = vcmp.eq.s32.totalorder %v325, %v1246
        %vm1431 = vcmp.eq.s32.totalorder %v325, %v1247
        %vm1432 = vcmp.eq.s32.totalorder %v325, %v1248
        %vm1433 = vcmp.eq.s32.totalorder %v325, %v1249
        %vm1434 = vcmp.eq.s32.totalorder %v326, %v1242
        %vm1435 = vcmp.eq.s32.totalorder %v326, %v1243
        %vm1436 = vcmp.eq.s32.totalorder %v326, %v1244
        %vm1437 = vcmp.eq.s32.totalorder %v326, %v1245
        %vm1438 = vcmp.eq.s32.totalorder %v326, %v1246
        %vm1439 = vcmp.eq.s32.totalorder %v326, %v1247
        %vm1440 = vcmp.eq.s32.totalorder %v326, %v1248
        %vm1441 = vcmp.eq.s32.totalorder %v326, %v1249
        %vm1442 = vcmp.eq.s32.totalorder %v327, %v1242
        %vm1443 = vcmp.eq.s32.totalorder %v327, %v1243
        %vm1444 = vcmp.eq.s32.totalorder %v327, %v1244
        %vm1445 = vcmp.eq.s32.totalorder %v327, %v1245
        %vm1446 = vcmp.eq.s32.totalorder %v327, %v1246
        %vm1447 = vcmp.eq.s32.totalorder %v327, %v1247
        %vm1448 = vcmp.eq.s32.totalorder %v327, %v1248
        %vm1449 = vcmp.eq.s32.totalorder %v327, %v1249
        %vm1450 = vcmp.eq.s32.totalorder %v328, %v1242
        %vm1451 = vcmp.eq.s32.totalorder %v328, %v1243
        %vm1452 = vcmp.eq.s32.totalorder %v328, %v1244
        %vm1453 = vcmp.eq.s32.totalorder %v328, %v1245
        %vm1454 = vcmp.eq.s32.totalorder %v328, %v1246
        %vm1455 = vcmp.eq.s32.totalorder %v328, %v1247
        %vm1456 = vcmp.eq.s32.totalorder %v328, %v1248
        %vm1457 = vcmp.eq.s32.totalorder %v328, %v1249
        %vm1458 = vcmp.eq.s32.totalorder %v329, %v1242
        %vm1459 = vcmp.eq.s32.totalorder %v329, %v1243
        %vm1460 = vcmp.eq.s32.totalorder %v329, %v1244
        %vm1461 = vcmp.eq.s32.totalorder %v329, %v1245
        %vm1462 = vcmp.eq.s32.totalorder %v329, %v1246
        %vm1463 = vcmp.eq.s32.totalorder %v329, %v1247
        %vm1464 = vcmp.eq.s32.totalorder %v329, %v1248
        %vm1465 = vcmp.eq.s32.totalorder %v329, %v1249
        %vm1466 = vcmp.eq.s32.totalorder %v330, %v1242
        %vm1467 = vcmp.eq.s32.totalorder %v330, %v1243
        %vm1468 = vcmp.eq.s32.totalorder %v330, %v1244
        %vm1469 = vcmp.eq.s32.totalorder %v330, %v1245
        %vm1470 = vcmp.eq.s32.totalorder %v330, %v1246
        %vm1471 = vcmp.eq.s32.totalorder %v330, %v1247
        %vm1472 = vcmp.eq.s32.totalorder %v330, %v1248
        %vm1473 = vcmp.eq.s32.totalorder %v330, %v1249
        %vm1474 = vcmp.eq.s32.totalorder %v331, %v1242
        %vm1475 = vcmp.eq.s32.totalorder %v331, %v1243
        %vm1476 = vcmp.eq.s32.totalorder %v331, %v1244
        %vm1477 = vcmp.eq.s32.totalorder %v331, %v1245
        %vm1478 = vcmp.eq.s32.totalorder %v331, %v1246
        %vm1479 = vcmp.eq.s32.totalorder %v331, %v1247
        %vm1480 = vcmp.eq.s32.totalorder %v331, %v1248
        %vm1481 = vcmp.eq.s32.totalorder %v331, %v1249
        %vm1482 = vcmp.eq.s32.totalorder %v332, %v1242
        %vm1483 = vcmp.eq.s32.totalorder %v332, %v1243
        %vm1484 = vcmp.eq.s32.totalorder %v332, %v1244
        %vm1485 = vcmp.eq.s32.totalorder %v332, %v1245
        %vm1486 = vcmp.eq.s32.totalorder %v332, %v1246
        %vm1487 = vcmp.eq.s32.totalorder %v332, %v1247
        %vm1488 = vcmp.eq.s32.totalorder %v332, %v1248
        %vm1489 = vcmp.eq.s32.totalorder %v332, %v1249
        %vm1490 = vcmp.eq.s32.totalorder %v333, %v1242
        %vm1491 = vcmp.eq.s32.totalorder %v333, %v1243
        %vm1492 = vcmp.eq.s32.totalorder %v333, %v1244
        %vm1493 = vcmp.eq.s32.totalorder %v333, %v1245
        %vm1494 = vcmp.eq.s32.totalorder %v333, %v1246
        %vm1495 = vcmp.eq.s32.totalorder %v333, %v1247
        %vm1496 = vcmp.eq.s32.totalorder %v333, %v1248
        %vm1497 = vcmp.eq.s32.totalorder %v333, %v1249
        %vm1498 = vcmp.eq.s32.totalorder %v334, %v1242
        %vm1499 = vcmp.eq.s32.totalorder %v334, %v1243
        %vm1500 = vcmp.eq.s32.totalorder %v334, %v1244
        %vm1501 = vcmp.eq.s32.totalorder %v334, %v1245
        %vm1502 = vcmp.eq.s32.totalorder %v334, %v1246
        %vm1503 = vcmp.eq.s32.totalorder %v334, %v1247
        %vm1504 = vcmp.eq.s32.totalorder %v334, %v1248
        %vm1505 = vcmp.eq.s32.totalorder %v334, %v1249
        %v1506 = vsel %vm1250, 1, 0
        %v1507 = vsel %vm1251, 1, 0
        %v1508 = vsel %vm1252, 1, 0
        %v1509 = vsel %vm1253, 1, 0
        %v1510 = vsel %vm1254, 1, 0
        %v1511 = vsel %vm1255, 1, 0
        %v1512 = vsel %vm1256, 1, 0
        %v1513 = vsel %vm1257, 1, 0
        %v1514 = vsel %vm1258, 1, 0
        %v1515 = vsel %vm1259, 1, 0
        %v1516 = vsel %vm1260, 1, 0
        %v1517 = vsel %vm1261, 1, 0
        %v1518 = vsel %vm1262, 1, 0
        %v1519 = vsel %vm1263, 1, 0
        %v1520 = vsel %vm1264, 1, 0
        %v1521 = vsel %vm1265, 1, 0
        %v1522 = vsel %vm1266, 1, 0
        %v1523 = vsel %vm1267, 1, 0
        %v1524 = vsel %vm1268, 1, 0
        %v1525 = vsel %vm1269, 1, 0
        %v1526 = vsel %vm1270, 1, 0
        %v1527 = vsel %vm1271, 1, 0
        %v1528 = vsel %vm1272, 1, 0
        %v1529 = vsel %vm1273, 1, 0
        %v1530 = vsel %vm1274, 1, 0
        %v1531 = vsel %vm1275, 1, 0
        %v1532 = vsel %vm1276, 1, 0
        %v1533 = vsel %vm1277, 1, 0
        %v1534 = vsel %vm1278, 1, 0
        %v1535 = vsel %vm1279, 1, 0
        %v1536 = vsel %vm1280, 1, 0
        %v1537 = vsel %vm1281, 1, 0
        %v1538 = vsel %vm1282, 1, 0
        %v1539 = vsel %vm1283, 1, 0
        %v1540 = vsel %vm1284, 1, 0
        %v1541 = vsel %vm1285, 1, 0
        %v1542 = vsel %vm1286, 1, 0
        %v1543 = vsel %vm1287, 1, 0
        %v1544 = vsel %vm1288, 1, 0
        %v1545 = vsel %vm1289, 1, 0
        %v1546 = vsel %vm1290, 1, 0
        %v1547 = vsel %vm1291, 1, 0
        %v1548 = vsel %vm1292, 1, 0
        %v1549 = vsel %vm1293, 1, 0
        %v1550 = vsel %vm1294, 1, 0
        %v1551 = vsel %vm1295, 1, 0
        %v1552 = vsel %vm1296, 1, 0
        %v1553 = vsel %vm1297, 1, 0
        %v1554 = vsel %vm1298, 1, 0
        %v1555 = vsel %vm1299, 1, 0
        %v1556 = vsel %vm1300, 1, 0
        %v1557 = vsel %vm1301, 1, 0
        %v1558 = vsel %vm1302, 1, 0
        %v1559 = vsel %vm1303, 1, 0
        %v1560 = vsel %vm1304, 1, 0
        %v1561 = vsel %vm1305, 1, 0
        %v1562 = vsel %vm1306, 1, 0
        %v1563 = vsel %vm1307, 1, 0
        %v1564 = vsel %vm1308, 1, 0
        %v1565 = vsel %vm1309, 1, 0
        %v1566 = vsel %vm1310, 1, 0
        %v1567 = vsel %vm1311, 1, 0
        %v1568 = vsel %vm1312, 1, 0
        %v1569 = vsel %vm1313, 1, 0
        %v1570 = vsel %vm1314, 1, 0
        %v1571 = vsel %vm1315, 1, 0
        %v1572 = vsel %vm1316, 1, 0
        %v1573 = vsel %vm1317, 1, 0
        %v1574 = vsel %vm1318, 1, 0
        %v1575 = vsel %vm1319, 1, 0
        %v1576 = vsel %vm1320, 1, 0
        %v1577 = vsel %vm1321, 1, 0
        %v1578 = vsel %vm1322, 1, 0
        %v1579 = vsel %vm1323, 1, 0
        %v1580 = vsel %vm1324, 1, 0
        %v1581 = vsel %vm1325, 1, 0
        %v1582 = vsel %vm1326, 1, 0
        %v1583 = vsel %vm1327, 1, 0
        %v1584 = vsel %vm1328, 1, 0
        %v1585 = vsel %vm1329, 1, 0
        %v1586 = vsel %vm1330, 1, 0
        %v1587 = vsel %vm1331, 1, 0
        %v1588 = vsel %vm1332, 1, 0
        %v1589 = vsel %vm1333, 1, 0
        %v1590 = vsel %vm1334, 1, 0
        %v1591 = vsel %vm1335, 1, 0
        %v1592 = vsel %vm1336, 1, 0
        %v1593 = vsel %vm1337, 1, 0
        %v1594 = vsel %vm1338, 1, 0
        %v1595 = vsel %vm1339, 1, 0
        %v1596 = vsel %vm1340, 1, 0
        %v1597 = vsel %vm1341, 1, 0
        %v1598 = vsel %vm1342, 1, 0
        %v1599 = vsel %vm1343, 1, 0
        %v1600 = vsel %vm1344, 1, 0
        %v1601 = vsel %vm1345, 1, 0
        %v1602 = vsel %vm1346, 1, 0
        %v1603 = vsel %vm1347, 1, 0
        %v1604 = vsel %vm1348, 1, 0
        %v1605 = vsel %vm1349, 1, 0
        %v1606 = vsel %vm1350, 1, 0
        %v1607 = vsel %vm1351, 1, 0
        %v1608 = vsel %vm1352, 1, 0
        %v1609 = vsel %vm1353, 1, 0
        %v1610 = vsel %vm1354, 1, 0
        %v1611 = vsel %vm1355, 1, 0
        %v1612 = vsel %vm1356, 1, 0
        %v1613 = vsel %vm1357, 1, 0
        %v1614 = vsel %vm1358, 1, 0
        %v1615 = vsel %vm1359, 1, 0
        %v1616 = vsel %vm1360, 1, 0
        %v1617 = vsel %vm1361, 1, 0
        %v1618 = vsel %vm1362, 1, 0
        %v1619 = vsel %vm1363, 1, 0
        %v1620 = vsel %vm1364, 1, 0
        %v1621 = vsel %vm1365, 1, 0
        %v1622 = vsel %vm1366, 1, 0
        %v1623 = vsel %vm1367, 1, 0
        %v1624 = vsel %vm1368, 1, 0
        %v1625 = vsel %vm1369, 1, 0
        %v1626 = vsel %vm1370, 1, 0
        %v1627 = vsel %vm1371, 1, 0
        %v1628 = vsel %vm1372, 1, 0
        %v1629 = vsel %vm1373, 1, 0
        %v1630 = vsel %vm1374, 1, 0
        %v1631 = vsel %vm1375, 1, 0
        %v1632 = vsel %vm1376, 1, 0
        %v1633 = vsel %vm1377, 1, 0
        %v1634 = vsel %vm1378, 1, 0
        %v1635 = vsel %vm1379, 1, 0
        %v1636 = vsel %vm1380, 1, 0
        %v1637 = vsel %vm1381, 1, 0
        %v1638 = vsel %vm1382, 1, 0
        %v1639 = vsel %vm1383, 1, 0
        %v1640 = vsel %vm1384, 1, 0
        %v1641 = vsel %vm1385, 1, 0
        %v1642 = vsel %vm1386, 1, 0
        %v1643 = vsel %vm1387, 1, 0
        %v1644 = vsel %vm1388, 1, 0
        %v1645 = vsel %vm1389, 1, 0
        %v1646 = vsel %vm1390, 1, 0
        %v1647 = vsel %vm1391, 1, 0
        %v1648 = vsel %vm1392, 1, 0
        %v1649 = vsel %vm1393, 1, 0
        %v1650 = vsel %vm1394, 1, 0
        %v1651 = vsel %vm1395, 1, 0
        %v1652 = vsel %vm1396, 1, 0
        %v1653 = vsel %vm1397, 1, 0
        %v1654 = vsel %vm1398, 1, 0
        %v1655 = vsel %vm1399, 1, 0
        %v1656 = vsel %vm1400, 1, 0
        %v1657 = vsel %vm1401, 1, 0
        %v1658 = vsel %vm1402, 1, 0
        %v1659 = vsel %vm1403, 1, 0
        %v1660 = vsel %vm1404, 1, 0
        %v1661 = vsel %vm1405, 1, 0
        %v1662 = vsel %vm1406, 1, 0
        %v1663 = vsel %vm1407, 1, 0
        %v1664 = vsel %vm1408, 1, 0
        %v1665 = vsel %vm1409, 1, 0
        %v1666 = vsel %vm1410, 1, 0
        %v1667 = vsel %vm1411, 1, 0
        %v1668 = vsel %vm1412, 1, 0
        %v1669 = vsel %vm1413, 1, 0
        %v1670 = vsel %vm1414, 1, 0
        %v1671 = vsel %vm1415, 1, 0
        %v1672 = vsel %vm1416, 1, 0
        %v1673 = vsel %vm1417, 1, 0
        %v1674 = vsel %vm1418, 1, 0
        %v1675 = vsel %vm1419, 1, 0
        %v1676 = vsel %vm1420, 1, 0
        %v1677 = vsel %vm1421, 1, 0
        %v1678 = vsel %vm1422, 1, 0
        %v1679 = vsel %vm1423, 1, 0
        %v1680 = vsel %vm1424, 1, 0
        %v1681 = vsel %vm1425, 1, 0
        %v1682 = vsel %vm1426, 1, 0
        %v1683 = vsel %vm1427, 1, 0
        %v1684 = vsel %vm1428, 1, 0
        %v1685 = vsel %vm1429, 1, 0
        %v1686 = vsel %vm1430, 1, 0
        %v1687 = vsel %vm1431, 1, 0
        %v1688 = vsel %vm1432, 1, 0
        %v1689 = vsel %vm1433, 1, 0
        %v1690 = vsel %vm1434, 1, 0
        %v1691 = vsel %vm1435, 1, 0
        %v1692 = vsel %vm1436, 1, 0
        %v1693 = vsel %vm1437, 1, 0
        %v1694 = vsel %vm1438, 1, 0
        %v1695 = vsel %vm1439, 1, 0
        %v1696 = vsel %vm1440, 1, 0
        %v1697 = vsel %vm1441, 1, 0
        %v1698 = vsel %vm1442, 1, 0
        %v1699 = vsel %vm1443, 1, 0
        %v1700 = vsel %vm1444, 1, 0
        %v1701 = vsel %vm1445, 1, 0
        %v1702 = vsel %vm1446, 1, 0
        %v1703 = vsel %vm1447, 1, 0
        %v1704 = vsel %vm1448, 1, 0
        %v1705 = vsel %vm1449, 1, 0
        %v1706 = vsel %vm1450, 1, 0
        %v1707 = vsel %vm1451, 1, 0
        %v1708 = vsel %vm1452, 1, 0
        %v1709 = vsel %vm1453, 1, 0
        %v1710 = vsel %vm1454, 1, 0
        %v1711 = vsel %vm1455, 1, 0
        %v1712 = vsel %vm1456, 1, 0
        %v1713 = vsel %vm1457, 1, 0
        %v1714 = vsel %vm1458, 1, 0
        %v1715 = vsel %vm1459, 1, 0
        %v1716 = vsel %vm1460, 1, 0
        %v1717 = vsel %vm1461, 1, 0
        %v1718 = vsel %vm1462, 1, 0
        %v1719 = vsel %vm1463, 1, 0
        %v1720 = vsel %vm1464, 1, 0
        %v1721 = vsel %vm1465, 1, 0
        %v1722 = vsel %vm1466, 1, 0
        %v1723 = vsel %vm1467, 1, 0
        %v1724 = vsel %vm1468, 1, 0
        %v1725 = vsel %vm1469, 1, 0
        %v1726 = vsel %vm1470, 1, 0
        %v1727 = vsel %vm1471, 1, 0
        %v1728 = vsel %vm1472, 1, 0
        %v1729 = vsel %vm1473, 1, 0
        %v1730 = vsel %vm1474, 1, 0
        %v1731 = vsel %vm1475, 1, 0
        %v1732 = vsel %vm1476, 1, 0
        %v1733 = vsel %vm1477, 1, 0
        %v1734 = vsel %vm1478, 1, 0
        %v1735 = vsel %vm1479, 1, 0
        %v1736 = vsel %vm1480, 1, 0
        %v1737 = vsel %vm1481, 1, 0
        %v1738 = vsel %vm1482, 1, 0
        %v1739 = vsel %vm1483, 1, 0
        %v1740 = vsel %vm1484, 1, 0
        %v1741 = vsel %vm1485, 1, 0
        %v1742 = vsel %vm1486, 1, 0
        %v1743 = vsel %vm1487, 1, 0
        %v1744 = vsel %vm1488, 1, 0
        %v1745 = vsel %vm1489, 1, 0
        %v1746 = vsel %vm1490, 1, 0
        %v1747 = vsel %vm1491, 1, 0
        %v1748 = vsel %vm1492, 1, 0
        %v1749 = vsel %vm1493, 1, 0
        %v1750 = vsel %vm1494, 1, 0
        %v1751 = vsel %vm1495, 1, 0
        %v1752 = vsel %vm1496, 1, 0
        %v1753 = vsel %vm1497, 1, 0
        %v1754 = vsel %vm1498, 1, 0
        %v1755 = vsel %vm1499, 1, 0
        %v1756 = vsel %vm1500, 1, 0
        %v1757 = vsel %vm1501, 1, 0
        %v1758 = vsel %vm1502, 1, 0
        %v1759 = vsel %vm1503, 1, 0
        %v1760 = vsel %vm1504, 1, 0
        %v1761 = vsel %vm1505, 1, 0
        %v1762 = vcvt.s32.f32 %v1506
        %v1763 = vcvt.s32.f32 %v1507
        %v1764 = vcvt.s32.f32 %v1508
        %v1765 = vcvt.s32.f32 %v1509
        %v1766 = vcvt.s32.f32 %v1510
        %v1767 = vcvt.s32.f32 %v1511
        %v1768 = vcvt.s32.f32 %v1512
        %v1769 = vcvt.s32.f32 %v1513
        %v1770 = vcvt.s32.f32 %v1514
        %v1771 = vcvt.s32.f32 %v1515
        %v1772 = vcvt.s32.f32 %v1516
        %v1773 = vcvt.s32.f32 %v1517
        %v1774 = vcvt.s32.f32 %v1518
        %v1775 = vcvt.s32.f32 %v1519
        %v1776 = vcvt.s32.f32 %v1520
        %v1777 = vcvt.s32.f32 %v1521
        %v1778 = vcvt.s32.f32 %v1522
        %v1779 = vcvt.s32.f32 %v1523
        %v1780 = vcvt.s32.f32 %v1524
        %v1781 = vcvt.s32.f32 %v1525
        %v1782 = vcvt.s32.f32 %v1526
        %v1783 = vcvt.s32.f32 %v1527
        %v1784 = vcvt.s32.f32 %v1528
        %v1785 = vcvt.s32.f32 %v1529
        %v1786 = vcvt.s32.f32 %v1530
        %v1787 = vcvt.s32.f32 %v1531
        %v1788 = vcvt.s32.f32 %v1532
        %v1789 = vcvt.s32.f32 %v1533
        %v1790 = vcvt.s32.f32 %v1534
        %v1791 = vcvt.s32.f32 %v1535
        %v1792 = vcvt.s32.f32 %v1536
        %v1793 = vcvt.s32.f32 %v1537
        %v1794 = vcvt.s32.f32 %v1538
        %v1795 = vcvt.s32.f32 %v1539
        %v1796 = vcvt.s32.f32 %v1540
        %v1797 = vcvt.s32.f32 %v1541
        %v1798 = vcvt.s32.f32 %v1542
        %v1799 = vcvt.s32.f32 %v1543
        %v1800 = vcvt.s32.f32 %v1544
        %v1801 = vcvt.s32.f32 %v1545
        %v1802 = vcvt.s32.f32 %v1546
        %v1803 = vcvt.s32.f32 %v1547
        %v1804 = vcvt.s32.f32 %v1548
        %v1805 = vcvt.s32.f32 %v1549
        %v1806 = vcvt.s32.f32 %v1550
        %v1807 = vcvt.s32.f32 %v1551
        %v1808 = vcvt.s32.f32 %v1552
        %v1809 = vcvt.s32.f32 %v1553
        %v1810 = vcvt.s32.f32 %v1554
        %v1811 = vcvt.s32.f32 %v1555
        %v1812 = vcvt.s32.f32 %v1556
        %v1813 = vcvt.s32.f32 %v1557
        %v1814 = vcvt.s32.f32 %v1558
        %v1815 = vcvt.s32.f32 %v1559
        %v1816 = vcvt.s32.f32 %v1560
        %v1817 = vcvt.s32.f32 %v1561
        %v1818 = vcvt.s32.f32 %v1562
        %v1819 = vcvt.s32.f32 %v1563
        %v1820 = vcvt.s32.f32 %v1564
        %v1821 = vcvt.s32.f32 %v1565
        %v1822 = vcvt.s32.f32 %v1566
        %v1823 = vcvt.s32.f32 %v1567
        %v1824 = vcvt.s32.f32 %v1568
        %v1825 = vcvt.s32.f32 %v1569
        %v1826 = vcvt.s32.f32 %v1570
        %v1827 = vcvt.s32.f32 %v1571
        %v1828 = vcvt.s32.f32 %v1572
        %v1829 = vcvt.s32.f32 %v1573
        %v1830 = vcvt.s32.f32 %v1574
        %v1831 = vcvt.s32.f32 %v1575
        %v1832 = vcvt.s32.f32 %v1576
        %v1833 = vcvt.s32.f32 %v1577
        %v1834 = vcvt.s32.f32 %v1578
        %v1835 = vcvt.s32.f32 %v1579
        %v1836 = vcvt.s32.f32 %v1580
        %v1837 = vcvt.s32.f32 %v1581
        %v1838 = vcvt.s32.f32 %v1582
        %v1839 = vcvt.s32.f32 %v1583
        %v1840 = vcvt.s32.f32 %v1584
        %v1841 = vcvt.s32.f32 %v1585
        %v1842 = vcvt.s32.f32 %v1586
        %v1843 = vcvt.s32.f32 %v1587
        %v1844 = vcvt.s32.f32 %v1588
        %v1845 = vcvt.s32.f32 %v1589
        %v1846 = vcvt.s32.f32 %v1590
        %v1847 = vcvt.s32.f32 %v1591
        %v1848 = vcvt.s32.f32 %v1592
        %v1849 = vcvt.s32.f32 %v1593
        %v1850 = vcvt.s32.f32 %v1594
        %v1851 = vcvt.s32.f32 %v1595
        %v1852 = vcvt.s32.f32 %v1596
        %v1853 = vcvt.s32.f32 %v1597
        %v1854 = vcvt.s32.f32 %v1598
        %v1855 = vcvt.s32.f32 %v1599
        %v1856 = vcvt.s32.f32 %v1600
        %v1857 = vcvt.s32.f32 %v1601
        %v1858 = vcvt.s32.f32 %v1602
        %v1859 = vcvt.s32.f32 %v1603
        %v1860 = vcvt.s32.f32 %v1604
        %v1861 = vcvt.s32.f32 %v1605
        %v1862 = vcvt.s32.f32 %v1606
        %v1863 = vcvt.s32.f32 %v1607
        %v1864 = vcvt.s32.f32 %v1608
        %v1865 = vcvt.s32.f32 %v1609
        %v1866 = vcvt.s32.f32 %v1610
        %v1867 = vcvt.s32.f32 %v1611
        %v1868 = vcvt.s32.f32 %v1612
        %v1869 = vcvt.s32.f32 %v1613
        %v1870 = vcvt.s32.f32 %v1614
        %v1871 = vcvt.s32.f32 %v1615
        %v1872 = vcvt.s32.f32 %v1616
        %v1873 = vcvt.s32.f32 %v1617
        %v1874 = vcvt.s32.f32 %v1618
        %v1875 = vcvt.s32.f32 %v1619
        %v1876 = vcvt.s32.f32 %v1620
        %v1877 = vcvt.s32.f32 %v1621
        %v1878 = vcvt.s32.f32 %v1622
        %v1879 = vcvt.s32.f32 %v1623
        %v1880 = vcvt.s32.f32 %v1624
        %v1881 = vcvt.s32.f32 %v1625
        %v1882 = vcvt.s32.f32 %v1626
        %v1883 = vcvt.s32.f32 %v1627
        %v1884 = vcvt.s32.f32 %v1628
        %v1885 = vcvt.s32.f32 %v1629
        %v1886 = vcvt.s32.f32 %v1630
        %v1887 = vcvt.s32.f32 %v1631
        %v1888 = vcvt.s32.f32 %v1632
        %v1889 = vcvt.s32.f32 %v1633
        %v1890 = vcvt.s32.f32 %v1634
        %v1891 = vcvt.s32.f32 %v1635
        %v1892 = vcvt.s32.f32 %v1636
        %v1893 = vcvt.s32.f32 %v1637
        %v1894 = vcvt.s32.f32 %v1638
        %v1895 = vcvt.s32.f32 %v1639
        %v1896 = vcvt.s32.f32 %v1640
        %v1897 = vcvt.s32.f32 %v1641
        %v1898 = vcvt.s32.f32 %v1642
        %v1899 = vcvt.s32.f32 %v1643
        %v1900 = vcvt.s32.f32 %v1644
        %v1901 = vcvt.s32.f32 %v1645
        %v1902 = vcvt.s32.f32 %v1646
        %v1903 = vcvt.s32.f32 %v1647
        %v1904 = vcvt.s32.f32 %v1648
        %v1905 = vcvt.s32.f32 %v1649
        %v1906 = vcvt.s32.f32 %v1650
        %v1907 = vcvt.s32.f32 %v1651
        %v1908 = vcvt.s32.f32 %v1652
        %v1909 = vcvt.s32.f32 %v1653
        %v1910 = vcvt.s32.f32 %v1654
        %v1911 = vcvt.s32.f32 %v1655
        %v1912 = vcvt.s32.f32 %v1656
        %v1913 = vcvt.s32.f32 %v1657
        %v1914 = vcvt.s32.f32 %v1658
        %v1915 = vcvt.s32.f32 %v1659
        %v1916 = vcvt.s32.f32 %v1660
        %v1917 = vcvt.s32.f32 %v1661
        %v1918 = vcvt.s32.f32 %v1662
        %v1919 = vcvt.s32.f32 %v1663
        %v1920 = vcvt.s32.f32 %v1664
        %v1921 = vcvt.s32.f32 %v1665
        %v1922 = vcvt.s32.f32 %v1666
        %v1923 = vcvt.s32.f32 %v1667
        %v1924 = vcvt.s32.f32 %v1668
        %v1925 = vcvt.s32.f32 %v1669
        %v1926 = vcvt.s32.f32 %v1670
        %v1927 = vcvt.s32.f32 %v1671
        %v1928 = vcvt.s32.f32 %v1672
        %v1929 = vcvt.s32.f32 %v1673
        %v1930 = vcvt.s32.f32 %v1674
        %v1931 = vcvt.s32.f32 %v1675
        %v1932 = vcvt.s32.f32 %v1676
        %v1933 = vcvt.s32.f32 %v1677
        %v1934 = vcvt.s32.f32 %v1678
        %v1935 = vcvt.s32.f32 %v1679
        %v1936 = vcvt.s32.f32 %v1680
        %v1937 = vcvt.s32.f32 %v1681
        %v1938 = vcvt.s32.f32 %v1682
        %v1939 = vcvt.s32.f32 %v1683
        %v1940 = vcvt.s32.f32 %v1684
        %v1941 = vcvt.s32.f32 %v1685
        %v1942 = vcvt.s32.f32 %v1686
        %v1943 = vcvt.s32.f32 %v1687
        %v1944 = vcvt.s32.f32 %v1688
        %v1945 = vcvt.s32.f32 %v1689
        %v1946 = vcvt.s32.f32 %v1690
        %v1947 = vcvt.s32.f32 %v1691
        %v1948 = vcvt.s32.f32 %v1692
        %v1949 = vcvt.s32.f32 %v1693
        %v1950 = vcvt.s32.f32 %v1694
        %v1951 = vcvt.s32.f32 %v1695
        %v1952 = vcvt.s32.f32 %v1696
        %v1953 = vcvt.s32.f32 %v1697
        %v1954 = vcvt.s32.f32 %v1698
        %v1955 = vcvt.s32.f32 %v1699
        %v1956 = vcvt.s32.f32 %v1700
        %v1957 = vcvt.s32.f32 %v1701
        %v1958 = vcvt.s32.f32 %v1702
        %v1959 = vcvt.s32.f32 %v1703
        %v1960 = vcvt.s32.f32 %v1704
        %v1961 = vcvt.s32.f32 %v1705
        %v1962 = vcvt.s32.f32 %v1706
        %v1963 = vcvt.s32.f32 %v1707
        %v1964 = vcvt.s32.f32 %v1708
        %v1965 = vcvt.s32.f32 %v1709
        %v1966 = vcvt.s32.f32 %v1710
        %v1967 = vcvt.s32.f32 %v1711
        %v1968 = vcvt.s32.f32 %v1712
        %v1969 = vcvt.s32.f32 %v1713
        %v1970 = vcvt.s32.f32 %v1714
        %v1971 = vcvt.s32.f32 %v1715
        %v1972 = vcvt.s32.f32 %v1716
        %v1973 = vcvt.s32.f32 %v1717
        %v1974 = vcvt.s32.f32 %v1718
        %v1975 = vcvt.s32.f32 %v1719
        %v1976 = vcvt.s32.f32 %v1720
        %v1977 = vcvt.s32.f32 %v1721
        %v1978 = vcvt.s32.f32 %v1722
        %v1979 = vcvt.s32.f32 %v1723
        %v1980 = vcvt.s32.f32 %v1724
        %v1981 = vcvt.s32.f32 %v1725
        %v1982 = vcvt.s32.f32 %v1726
        %v1983 = vcvt.s32.f32 %v1727
        %v1984 = vcvt.s32.f32 %v1728
        %v1985 = vcvt.s32.f32 %v1729
        %v1986 = vcvt.s32.f32 %v1730
        %v1987 = vcvt.s32.f32 %v1731
        %v1988 = vcvt.s32.f32 %v1732
        %v1989 = vcvt.s32.f32 %v1733
        %v1990 = vcvt.s32.f32 %v1734
        %v1991 = vcvt.s32.f32 %v1735
        %v1992 = vcvt.s32.f32 %v1736
        %v1993 = vcvt.s32.f32 %v1737
        %v1994 = vcvt.s32.f32 %v1738
        %v1995 = vcvt.s32.f32 %v1739
        %v1996 = vcvt.s32.f32 %v1740
        %v1997 = vcvt.s32.f32 %v1741
        %v1998 = vcvt.s32.f32 %v1742
        %v1999 = vcvt.s32.f32 %v1743
        %v2000 = vcvt.s32.f32 %v1744
        %v2001 = vcvt.s32.f32 %v1745
        %v2002 = vcvt.s32.f32 %v1746
        %v2003 = vcvt.s32.f32 %v1747
        %v2004 = vcvt.s32.f32 %v1748
        %v2005 = vcvt.s32.f32 %v1749
        %v2006 = vcvt.s32.f32 %v1750
        %v2007 = vcvt.s32.f32 %v1751
        %v2008 = vcvt.s32.f32 %v1752
        %v2009 = vcvt.s32.f32 %v1753
        %v2010 = vcvt.s32.f32 %v1754
        %v2011 = vcvt.s32.f32 %v1755
        %v2012 = vcvt.s32.f32 %v1756
        %v2013 = vcvt.s32.f32 %v1757
        %v2014 = vcvt.s32.f32 %v1758
        %v2015 = vcvt.s32.f32 %v1759
        %v2016 = vcvt.s32.f32 %v1760
        %v2017 = vcvt.s32.f32 %v1761
        %v2018 = vpack.c.bf16 %v1763, %v1762
        %v2019 = vpack.c.bf16 %v1765, %v1764
        %v2020 = vpack.c.bf16 %v1767, %v1766
        %v2021 = vpack.c.bf16 %v1769, %v1768
        %v2022 = vpack.c.bf16 %v1771, %v1770
        %v2023 = vpack.c.bf16 %v1773, %v1772
        %v2024 = vpack.c.bf16 %v1775, %v1774
        %v2025 = vpack.c.bf16 %v1777, %v1776
        %v2026 = vpack.c.bf16 %v1779, %v1778
        %v2027 = vpack.c.bf16 %v1781, %v1780
        %v2028 = vpack.c.bf16 %v1783, %v1782
        %v2029 = vpack.c.bf16 %v1785, %v1784
        %v2030 = vpack.c.bf16 %v1787, %v1786
        %v2031 = vpack.c.bf16 %v1789, %v1788
        %v2032 = vpack.c.bf16 %v1791, %v1790
        %v2033 = vpack.c.bf16 %v1793, %v1792
        %v2034 = vpack.c.bf16 %v1795, %v1794
        %v2035 = vpack.c.bf16 %v1797, %v1796
        %v2036 = vpack.c.bf16 %v1799, %v1798
        %v2037 = vpack.c.bf16 %v1801, %v1800
        %v2038 = vpack.c.bf16 %v1803, %v1802
        %v2039 = vpack.c.bf16 %v1805, %v1804
        %v2040 = vpack.c.bf16 %v1807, %v1806
        %v2041 = vpack.c.bf16 %v1809, %v1808
        %v2042 = vpack.c.bf16 %v1811, %v1810
        %v2043 = vpack.c.bf16 %v1813, %v1812
        %v2044 = vpack.c.bf16 %v1815, %v1814
        %v2045 = vpack.c.bf16 %v1817, %v1816
        %v2046 = vpack.c.bf16 %v1819, %v1818
        %v2047 = vpack.c.bf16 %v1821, %v1820
        %v2048 = vpack.c.bf16 %v1823, %v1822
        %v2049 = vpack.c.bf16 %v1825, %v1824
        %v2050 = vpack.c.bf16 %v1827, %v1826
        %v2051 = vpack.c.bf16 %v1829, %v1828
        %v2052 = vpack.c.bf16 %v1831, %v1830
        %v2053 = vpack.c.bf16 %v1833, %v1832
        %v2054 = vpack.c.bf16 %v1835, %v1834
        %v2055 = vpack.c.bf16 %v1837, %v1836
        %v2056 = vpack.c.bf16 %v1839, %v1838
        %v2057 = vpack.c.bf16 %v1841, %v1840
        %v2058 = vpack.c.bf16 %v1843, %v1842
        %v2059 = vpack.c.bf16 %v1845, %v1844
        %v2060 = vpack.c.bf16 %v1847, %v1846
        %v2061 = vpack.c.bf16 %v1849, %v1848
        %v2062 = vpack.c.bf16 %v1851, %v1850
        %v2063 = vpack.c.bf16 %v1853, %v1852
        %v2064 = vpack.c.bf16 %v1855, %v1854
        %v2065 = vpack.c.bf16 %v1857, %v1856
        %v2066 = vpack.c.bf16 %v1859, %v1858
        %v2067 = vpack.c.bf16 %v1861, %v1860
        %v2068 = vpack.c.bf16 %v1863, %v1862
        %v2069 = vpack.c.bf16 %v1865, %v1864
        %v2070 = vpack.c.bf16 %v1867, %v1866
        %v2071 = vpack.c.bf16 %v1869, %v1868
        %v2072 = vpack.c.bf16 %v1871, %v1870
        %v2073 = vpack.c.bf16 %v1873, %v1872
        %v2074 = vpack.c.bf16 %v1875, %v1874
        %v2075 = vpack.c.bf16 %v1877, %v1876
        %v2076 = vpack.c.bf16 %v1879, %v1878
        %v2077 = vpack.c.bf16 %v1881, %v1880
        %v2078 = vpack.c.bf16 %v1883, %v1882
        %v2079 = vpack.c.bf16 %v1885, %v1884
        %v2080 = vpack.c.bf16 %v1887, %v1886
        %v2081 = vpack.c.bf16 %v1889, %v1888
        %v2082 = vpack.c.bf16 %v1891, %v1890
        %v2083 = vpack.c.bf16 %v1893, %v1892
        %v2084 = vpack.c.bf16 %v1895, %v1894
        %v2085 = vpack.c.bf16 %v1897, %v1896
        %v2086 = vpack.c.bf16 %v1899, %v1898
        %v2087 = vpack.c.bf16 %v1901, %v1900
        %v2088 = vpack.c.bf16 %v1903, %v1902
        %v2089 = vpack.c.bf16 %v1905, %v1904
        %v2090 = vpack.c.bf16 %v1907, %v1906
        %v2091 = vpack.c.bf16 %v1909, %v1908
        %v2092 = vpack.c.bf16 %v1911, %v1910
        %v2093 = vpack.c.bf16 %v1913, %v1912
        %v2094 = vpack.c.bf16 %v1915, %v1914
        %v2095 = vpack.c.bf16 %v1917, %v1916
        %v2096 = vpack.c.bf16 %v1919, %v1918
        %v2097 = vpack.c.bf16 %v1921, %v1920
        %v2098 = vpack.c.bf16 %v1923, %v1922
        %v2099 = vpack.c.bf16 %v1925, %v1924
        %v2100 = vpack.c.bf16 %v1927, %v1926
        %v2101 = vpack.c.bf16 %v1929, %v1928
        %v2102 = vpack.c.bf16 %v1931, %v1930
        %v2103 = vpack.c.bf16 %v1933, %v1932
        %v2104 = vpack.c.bf16 %v1935, %v1934
        %v2105 = vpack.c.bf16 %v1937, %v1936
        %v2106 = vpack.c.bf16 %v1939, %v1938
        %v2107 = vpack.c.bf16 %v1941, %v1940
        %v2108 = vpack.c.bf16 %v1943, %v1942
        %v2109 = vpack.c.bf16 %v1945, %v1944
        %v2110 = vpack.c.bf16 %v1947, %v1946
        %v2111 = vpack.c.bf16 %v1949, %v1948
        %v2112 = vpack.c.bf16 %v1951, %v1950
        %v2113 = vpack.c.bf16 %v1953, %v1952
        %v2114 = vpack.c.bf16 %v1955, %v1954
        %v2115 = vpack.c.bf16 %v1957, %v1956
        %v2116 = vpack.c.bf16 %v1959, %v1958
        %v2117 = vpack.c.bf16 %v1961, %v1960
        %v2118 = vpack.c.bf16 %v1963, %v1962
        %v2119 = vpack.c.bf16 %v1965, %v1964
        %v2120 = vpack.c.bf16 %v1967, %v1966
        %v2121 = vpack.c.bf16 %v1969, %v1968
        %v2122 = vpack.c.bf16 %v1971, %v1970
        %v2123 = vpack.c.bf16 %v1973, %v1972
        %v2124 = vpack.c.bf16 %v1975, %v1974
        %v2125 = vpack.c.bf16 %v1977, %v1976
        %v2126 = vpack.c.bf16 %v1979, %v1978
        %v2127 = vpack.c.bf16 %v1981, %v1980
        %v2128 = vpack.c.bf16 %v1983, %v1982
        %v2129 = vpack.c.bf16 %v1985, %v1984
        %v2130 = vpack.c.bf16 %v1987, %v1986
        %v2131 = vpack.c.bf16 %v1989, %v1988
        %v2132 = vpack.c.bf16 %v1991, %v1990
        %v2133 = vpack.c.bf16 %v1993, %v1992
        %v2134 = vpack.c.bf16 %v1995, %v1994
        %v2135 = vpack.c.bf16 %v1997, %v1996
        %v2136 = vpack.c.bf16 %v1999, %v1998
        %v2137 = vpack.c.bf16 %v2001, %v2000
        %v2138 = vpack.c.bf16 %v2003, %v2002
        %v2139 = vpack.c.bf16 %v2005, %v2004
        %v2140 = vpack.c.bf16 %v2007, %v2006
        %v2141 = vpack.c.bf16 %v2009, %v2008
        %v2142 = vpack.c.bf16 %v2011, %v2010
        %v2143 = vpack.c.bf16 %v2013, %v2012
        %v2144 = vpack.c.bf16 %v2015, %v2014
        %v2145 = vpack.c.bf16 %v2017, %v2016
        %v2146 = vunpack.c.l.bf16 %v1114
        %v2147 = vunpack.c.h.bf16 %v1114
        %v2148 = vunpack.c.l.bf16 %v1115
        %v2149 = vunpack.c.h.bf16 %v1115
        %v2150 = vunpack.c.l.bf16 %v1116
        %v2151 = vunpack.c.h.bf16 %v1116
        %v2152 = vunpack.c.l.bf16 %v1117
        %v2153 = vunpack.c.h.bf16 %v1117
        %v2154 = vunpack.c.l.bf16 %v1118
        %v2155 = vunpack.c.h.bf16 %v1118
        %v2156 = vunpack.c.l.bf16 %v1119
        %v2157 = vunpack.c.h.bf16 %v1119
        %v2158 = vunpack.c.l.bf16 %v1120
        %v2159 = vunpack.c.h.bf16 %v1120
        %v2160 = vunpack.c.l.bf16 %v1121
        %v2161 = vunpack.c.h.bf16 %v1121
        %v2162 = vunpack.c.l.bf16 %v1122
        %v2163 = vunpack.c.h.bf16 %v1122
        %v2164 = vunpack.c.l.bf16 %v1123
        %v2165 = vunpack.c.h.bf16 %v1123
        %v2166 = vunpack.c.l.bf16 %v1124
        %v2167 = vunpack.c.h.bf16 %v1124
        %v2168 = vunpack.c.l.bf16 %v1125
        %v2169 = vunpack.c.h.bf16 %v1125
        %v2170 = vunpack.c.l.bf16 %v1126
        %v2171 = vunpack.c.h.bf16 %v1126
        %v2172 = vunpack.c.l.bf16 %v1127
        %v2173 = vunpack.c.h.bf16 %v1127
        %v2174 = vunpack.c.l.bf16 %v1128
        %v2175 = vunpack.c.h.bf16 %v1128
        %v2176 = vunpack.c.l.bf16 %v1129
        %v2177 = vunpack.c.h.bf16 %v1129
        %v2178 = vunpack.c.l.bf16 %v1130
        %v2179 = vunpack.c.h.bf16 %v1130
        %v2180 = vunpack.c.l.bf16 %v1131
        %v2181 = vunpack.c.h.bf16 %v1131
        %v2182 = vunpack.c.l.bf16 %v1132
        %v2183 = vunpack.c.h.bf16 %v1132
        %v2184 = vunpack.c.l.bf16 %v1133
        %v2185 = vunpack.c.h.bf16 %v1133
        %v2186 = vunpack.c.l.bf16 %v1134
        %v2187 = vunpack.c.h.bf16 %v1134
        %v2188 = vunpack.c.l.bf16 %v1135
        %v2189 = vunpack.c.h.bf16 %v1135
        %v2190 = vunpack.c.l.bf16 %v1136
        %v2191 = vunpack.c.h.bf16 %v1136
        %v2192 = vunpack.c.l.bf16 %v1137
        %v2193 = vunpack.c.h.bf16 %v1137
        %v2194 = vunpack.c.l.bf16 %v1138
        %v2195 = vunpack.c.h.bf16 %v1138
        %v2196 = vunpack.c.l.bf16 %v1139
        %v2197 = vunpack.c.h.bf16 %v1139
        %v2198 = vunpack.c.l.bf16 %v1140
        %v2199 = vunpack.c.h.bf16 %v1140
        %v2200 = vunpack.c.l.bf16 %v1141
        %v2201 = vunpack.c.h.bf16 %v1141
        %v2202 = vunpack.c.l.bf16 %v1142
        %v2203 = vunpack.c.h.bf16 %v1142
        %v2204 = vunpack.c.l.bf16 %v1143
        %v2205 = vunpack.c.h.bf16 %v1143
        %v2206 = vunpack.c.l.bf16 %v1144
        %v2207 = vunpack.c.h.bf16 %v1144
        %v2208 = vunpack.c.l.bf16 %v1145
        %v2209 = vunpack.c.h.bf16 %v1145
        %v2210 = vunpack.c.l.bf16 %v1146
        %v2211 = vunpack.c.h.bf16 %v1146
        %v2212 = vunpack.c.l.bf16 %v1147
        %v2213 = vunpack.c.h.bf16 %v1147
        %v2214 = vunpack.c.l.bf16 %v1148
        %v2215 = vunpack.c.h.bf16 %v1148
        %v2216 = vunpack.c.l.bf16 %v1149
        %v2217 = vunpack.c.h.bf16 %v1149
        %v2218 = vunpack.c.l.bf16 %v1150
        %v2219 = vunpack.c.h.bf16 %v1150
        %v2220 = vunpack.c.l.bf16 %v1151
        %v2221 = vunpack.c.h.bf16 %v1151
        %v2222 = vunpack.c.l.bf16 %v1152
        %v2223 = vunpack.c.h.bf16 %v1152
        %v2224 = vunpack.c.l.bf16 %v1153
        %v2225 = vunpack.c.h.bf16 %v1153
        %v2226 = vunpack.c.l.bf16 %v1154
        %v2227 = vunpack.c.h.bf16 %v1154
        %v2228 = vunpack.c.l.bf16 %v1155
        %v2229 = vunpack.c.h.bf16 %v1155
        %v2230 = vunpack.c.l.bf16 %v1156
        %v2231 = vunpack.c.h.bf16 %v1156
        %v2232 = vunpack.c.l.bf16 %v1157
        %v2233 = vunpack.c.h.bf16 %v1157
        %v2234 = vunpack.c.l.bf16 %v1158
        %v2235 = vunpack.c.h.bf16 %v1158
        %v2236 = vunpack.c.l.bf16 %v1159
        %v2237 = vunpack.c.h.bf16 %v1159
        %v2238 = vunpack.c.l.bf16 %v1160
        %v2239 = vunpack.c.h.bf16 %v1160
        %v2240 = vunpack.c.l.bf16 %v1161
        %v2241 = vunpack.c.h.bf16 %v1161
        %v2242 = vunpack.c.l.bf16 %v1162
        %v2243 = vunpack.c.h.bf16 %v1162
        %v2244 = vunpack.c.l.bf16 %v1163
        %v2245 = vunpack.c.h.bf16 %v1163
        %v2246 = vunpack.c.l.bf16 %v1164
        %v2247 = vunpack.c.h.bf16 %v1164
        %v2248 = vunpack.c.l.bf16 %v1165
        %v2249 = vunpack.c.h.bf16 %v1165
        %v2250 = vunpack.c.l.bf16 %v1166
        %v2251 = vunpack.c.h.bf16 %v1166
        %v2252 = vunpack.c.l.bf16 %v1167
        %v2253 = vunpack.c.h.bf16 %v1167
        %v2254 = vunpack.c.l.bf16 %v1168
        %v2255 = vunpack.c.h.bf16 %v1168
        %v2256 = vunpack.c.l.bf16 %v1169
        %v2257 = vunpack.c.h.bf16 %v1169
        %v2258 = vunpack.c.l.bf16 %v1170
        %v2259 = vunpack.c.h.bf16 %v1170
        %v2260 = vunpack.c.l.bf16 %v1171
        %v2261 = vunpack.c.h.bf16 %v1171
        %v2262 = vunpack.c.l.bf16 %v1172
        %v2263 = vunpack.c.h.bf16 %v1172
        %v2264 = vunpack.c.l.bf16 %v1173
        %v2265 = vunpack.c.h.bf16 %v1173
        %v2266 = vunpack.c.l.bf16 %v1174
        %v2267 = vunpack.c.h.bf16 %v1174
        %v2268 = vunpack.c.l.bf16 %v1175
        %v2269 = vunpack.c.h.bf16 %v1175
        %v2270 = vunpack.c.l.bf16 %v1176
        %v2271 = vunpack.c.h.bf16 %v1176
        %v2272 = vunpack.c.l.bf16 %v1177
        %v2273 = vunpack.c.h.bf16 %v1177
        %v2274 = vunpack.c.l.bf16 %v1178
        %v2275 = vunpack.c.h.bf16 %v1178
        %v2276 = vunpack.c.l.bf16 %v1179
        %v2277 = vunpack.c.h.bf16 %v1179
        %v2278 = vunpack.c.l.bf16 %v1180
        %v2279 = vunpack.c.h.bf16 %v1180
        %v2280 = vunpack.c.l.bf16 %v1181
        %v2281 = vunpack.c.h.bf16 %v1181
        %v2282 = vunpack.c.l.bf16 %v1182
        %v2283 = vunpack.c.h.bf16 %v1182
        %v2284 = vunpack.c.l.bf16 %v1183
        %v2285 = vunpack.c.h.bf16 %v1183
        %v2286 = vunpack.c.l.bf16 %v1184
        %v2287 = vunpack.c.h.bf16 %v1184
        %v2288 = vunpack.c.l.bf16 %v1185
        %v2289 = vunpack.c.h.bf16 %v1185
        %v2290 = vunpack.c.l.bf16 %v1186
        %v2291 = vunpack.c.h.bf16 %v1186
        %v2292 = vunpack.c.l.bf16 %v1187
        %v2293 = vunpack.c.h.bf16 %v1187
        %v2294 = vunpack.c.l.bf16 %v1188
        %v2295 = vunpack.c.h.bf16 %v1188
        %v2296 = vunpack.c.l.bf16 %v1189
        %v2297 = vunpack.c.h.bf16 %v1189
        %v2298 = vunpack.c.l.bf16 %v1190
        %v2299 = vunpack.c.h.bf16 %v1190
        %v2300 = vunpack.c.l.bf16 %v1191
        %v2301 = vunpack.c.h.bf16 %v1191
        %v2302 = vunpack.c.l.bf16 %v1192
        %v2303 = vunpack.c.h.bf16 %v1192
        %v2304 = vunpack.c.l.bf16 %v1193
        %v2305 = vunpack.c.h.bf16 %v1193
        %v2306 = vunpack.c.l.bf16 %v1194
        %v2307 = vunpack.c.h.bf16 %v1194
        %v2308 = vunpack.c.l.bf16 %v1195
        %v2309 = vunpack.c.h.bf16 %v1195
        %v2310 = vunpack.c.l.bf16 %v1196
        %v2311 = vunpack.c.h.bf16 %v1196
        %v2312 = vunpack.c.l.bf16 %v1197
        %v2313 = vunpack.c.h.bf16 %v1197
        %v2314 = vunpack.c.l.bf16 %v1198
        %v2315 = vunpack.c.h.bf16 %v1198
        %v2316 = vunpack.c.l.bf16 %v1199
        %v2317 = vunpack.c.h.bf16 %v1199
        %v2318 = vunpack.c.l.bf16 %v1200
        %v2319 = vunpack.c.h.bf16 %v1200
        %v2320 = vunpack.c.l.bf16 %v1201
        %v2321 = vunpack.c.h.bf16 %v1201
        %v2322 = vunpack.c.l.bf16 %v1202
        %v2323 = vunpack.c.h.bf16 %v1202
        %v2324 = vunpack.c.l.bf16 %v1203
        %v2325 = vunpack.c.h.bf16 %v1203
        %v2326 = vunpack.c.l.bf16 %v1204
        %v2327 = vunpack.c.h.bf16 %v1204
        %v2328 = vunpack.c.l.bf16 %v1205
        %v2329 = vunpack.c.h.bf16 %v1205
        %v2330 = vunpack.c.l.bf16 %v1206
        %v2331 = vunpack.c.h.bf16 %v1206
        %v2332 = vunpack.c.l.bf16 %v1207
        %v2333 = vunpack.c.h.bf16 %v1207
        %v2334 = vunpack.c.l.bf16 %v1208
        %v2335 = vunpack.c.h.bf16 %v1208
        %v2336 = vunpack.c.l.bf16 %v1209
        %v2337 = vunpack.c.h.bf16 %v1209
        %v2338 = vunpack.c.l.bf16 %v1210
        %v2339 = vunpack.c.h.bf16 %v1210
        %v2340 = vunpack.c.l.bf16 %v1211
        %v2341 = vunpack.c.h.bf16 %v1211
        %v2342 = vunpack.c.l.bf16 %v1212
        %v2343 = vunpack.c.h.bf16 %v1212
        %v2344 = vunpack.c.l.bf16 %v1213
        %v2345 = vunpack.c.h.bf16 %v1213
        %v2346 = vunpack.c.l.bf16 %v1214
        %v2347 = vunpack.c.h.bf16 %v1214
        %v2348 = vunpack.c.l.bf16 %v1215
        %v2349 = vunpack.c.h.bf16 %v1215
        %v2350 = vunpack.c.l.bf16 %v1216
        %v2351 = vunpack.c.h.bf16 %v1216
        %v2352 = vunpack.c.l.bf16 %v1217
        %v2353 = vunpack.c.h.bf16 %v1217
        %v2354 = vunpack.c.l.bf16 %v1218
        %v2355 = vunpack.c.h.bf16 %v1218
        %v2356 = vunpack.c.l.bf16 %v1219
        %v2357 = vunpack.c.h.bf16 %v1219
        %v2358 = vunpack.c.l.bf16 %v1220
        %v2359 = vunpack.c.h.bf16 %v1220
        %v2360 = vunpack.c.l.bf16 %v1221
        %v2361 = vunpack.c.h.bf16 %v1221
        %v2362 = vunpack.c.l.bf16 %v1222
        %v2363 = vunpack.c.h.bf16 %v1222
        %v2364 = vunpack.c.l.bf16 %v1223
        %v2365 = vunpack.c.h.bf16 %v1223
        %v2366 = vunpack.c.l.bf16 %v1224
        %v2367 = vunpack.c.h.bf16 %v1224
        %v2368 = vunpack.c.l.bf16 %v1225
        %v2369 = vunpack.c.h.bf16 %v1225
        %v2370 = vunpack.c.l.bf16 %v1226
        %v2371 = vunpack.c.h.bf16 %v1226
        %v2372 = vunpack.c.l.bf16 %v1227
        %v2373 = vunpack.c.h.bf16 %v1227
        %v2374 = vunpack.c.l.bf16 %v1228
        %v2375 = vunpack.c.h.bf16 %v1228
        %v2376 = vunpack.c.l.bf16 %v1229
        %v2377 = vunpack.c.h.bf16 %v1229
        %v2378 = vunpack.c.l.bf16 %v1230
        %v2379 = vunpack.c.h.bf16 %v1230
        %v2380 = vunpack.c.l.bf16 %v1231
        %v2381 = vunpack.c.h.bf16 %v1231
        %v2382 = vunpack.c.l.bf16 %v1232
        %v2383 = vunpack.c.h.bf16 %v1232
        %v2384 = vunpack.c.l.bf16 %v1233
        %v2385 = vunpack.c.h.bf16 %v1233
        %v2386 = vunpack.c.l.bf16 %v1234
        %v2387 = vunpack.c.h.bf16 %v1234
        %v2388 = vunpack.c.l.bf16 %v1235
        %v2389 = vunpack.c.h.bf16 %v1235
        %v2390 = vunpack.c.l.bf16 %v1236
        %v2391 = vunpack.c.h.bf16 %v1236
        %v2392 = vunpack.c.l.bf16 %v1237
        %v2393 = vunpack.c.h.bf16 %v1237
        %v2394 = vunpack.c.l.bf16 %v1238
        %v2395 = vunpack.c.h.bf16 %v1238
        %v2396 = vunpack.c.l.bf16 %v1239
        %v2397 = vunpack.c.h.bf16 %v1239
        %v2398 = vunpack.c.l.bf16 %v1240
        %v2399 = vunpack.c.h.bf16 %v1240
        %v2400 = vunpack.c.l.bf16 %v1241
        %v2401 = vunpack.c.h.bf16 %v1241
        %v2402 = vunpack.c.l.bf16 %v2018
        %v2403 = vunpack.c.h.bf16 %v2018
        %v2404 = vunpack.c.l.bf16 %v2019
        %v2405 = vunpack.c.h.bf16 %v2019
        %v2406 = vunpack.c.l.bf16 %v2020
        %v2407 = vunpack.c.h.bf16 %v2020
        %v2408 = vunpack.c.l.bf16 %v2021
        %v2409 = vunpack.c.h.bf16 %v2021
        %v2410 = vunpack.c.l.bf16 %v2022
        %v2411 = vunpack.c.h.bf16 %v2022
        %v2412 = vunpack.c.l.bf16 %v2023
        %v2413 = vunpack.c.h.bf16 %v2023
        %v2414 = vunpack.c.l.bf16 %v2024
        %v2415 = vunpack.c.h.bf16 %v2024
        %v2416 = vunpack.c.l.bf16 %v2025
        %v2417 = vunpack.c.h.bf16 %v2025
        %v2418 = vunpack.c.l.bf16 %v2026
        %v2419 = vunpack.c.h.bf16 %v2026
        %v2420 = vunpack.c.l.bf16 %v2027
        %v2421 = vunpack.c.h.bf16 %v2027
        %v2422 = vunpack.c.l.bf16 %v2028
        %v2423 = vunpack.c.h.bf16 %v2028
        %v2424 = vunpack.c.l.bf16 %v2029
        %v2425 = vunpack.c.h.bf16 %v2029
        %v2426 = vunpack.c.l.bf16 %v2030
        %v2427 = vunpack.c.h.bf16 %v2030
        %v2428 = vunpack.c.l.bf16 %v2031
        %v2429 = vunpack.c.h.bf16 %v2031
        %v2430 = vunpack.c.l.bf16 %v2032
        %v2431 = vunpack.c.h.bf16 %v2032
        %v2432 = vunpack.c.l.bf16 %v2033
        %v2433 = vunpack.c.h.bf16 %v2033
        %v2434 = vunpack.c.l.bf16 %v2034
        %v2435 = vunpack.c.h.bf16 %v2034
        %v2436 = vunpack.c.l.bf16 %v2035
        %v2437 = vunpack.c.h.bf16 %v2035
        %v2438 = vunpack.c.l.bf16 %v2036
        %v2439 = vunpack.c.h.bf16 %v2036
        %v2440 = vunpack.c.l.bf16 %v2037
        %v2441 = vunpack.c.h.bf16 %v2037
        %v2442 = vunpack.c.l.bf16 %v2038
        %v2443 = vunpack.c.h.bf16 %v2038
        %v2444 = vunpack.c.l.bf16 %v2039
        %v2445 = vunpack.c.h.bf16 %v2039
        %v2446 = vunpack.c.l.bf16 %v2040
        %v2447 = vunpack.c.h.bf16 %v2040
        %v2448 = vunpack.c.l.bf16 %v2041
        %v2449 = vunpack.c.h.bf16 %v2041
        %v2450 = vunpack.c.l.bf16 %v2042
        %v2451 = vunpack.c.h.bf16 %v2042
        %v2452 = vunpack.c.l.bf16 %v2043
        %v2453 = vunpack.c.h.bf16 %v2043
        %v2454 = vunpack.c.l.bf16 %v2044
        %v2455 = vunpack.c.h.bf16 %v2044
        %v2456 = vunpack.c.l.bf16 %v2045
        %v2457 = vunpack.c.h.bf16 %v2045
        %v2458 = vunpack.c.l.bf16 %v2046
        %v2459 = vunpack.c.h.bf16 %v2046
        %v2460 = vunpack.c.l.bf16 %v2047
        %v2461 = vunpack.c.h.bf16 %v2047
        %v2462 = vunpack.c.l.bf16 %v2048
        %v2463 = vunpack.c.h.bf16 %v2048
        %v2464 = vunpack.c.l.bf16 %v2049
        %v2465 = vunpack.c.h.bf16 %v2049
        %v2466 = vunpack.c.l.bf16 %v2050
        %v2467 = vunpack.c.h.bf16 %v2050
        %v2468 = vunpack.c.l.bf16 %v2051
        %v2469 = vunpack.c.h.bf16 %v2051
        %v2470 = vunpack.c.l.bf16 %v2052
        %v2471 = vunpack.c.h.bf16 %v2052
        %v2472 = vunpack.c.l.bf16 %v2053
        %v2473 = vunpack.c.h.bf16 %v2053
        %v2474 = vunpack.c.l.bf16 %v2054
        %v2475 = vunpack.c.h.bf16 %v2054
        %v2476 = vunpack.c.l.bf16 %v2055
        %v2477 = vunpack.c.h.bf16 %v2055
        %v2478 = vunpack.c.l.bf16 %v2056
        %v2479 = vunpack.c.h.bf16 %v2056
        %v2480 = vunpack.c.l.bf16 %v2057
        %v2481 = vunpack.c.h.bf16 %v2057
        %v2482 = vunpack.c.l.bf16 %v2058
        %v2483 = vunpack.c.h.bf16 %v2058
        %v2484 = vunpack.c.l.bf16 %v2059
        %v2485 = vunpack.c.h.bf16 %v2059
        %v2486 = vunpack.c.l.bf16 %v2060
        %v2487 = vunpack.c.h.bf16 %v2060
        %v2488 = vunpack.c.l.bf16 %v2061
        %v2489 = vunpack.c.h.bf16 %v2061
        %v2490 = vunpack.c.l.bf16 %v2062
        %v2491 = vunpack.c.h.bf16 %v2062
        %v2492 = vunpack.c.l.bf16 %v2063
        %v2493 = vunpack.c.h.bf16 %v2063
        %v2494 = vunpack.c.l.bf16 %v2064
        %v2495 = vunpack.c.h.bf16 %v2064
        %v2496 = vunpack.c.l.bf16 %v2065
        %v2497 = vunpack.c.h.bf16 %v2065
        %v2498 = vunpack.c.l.bf16 %v2066
        %v2499 = vunpack.c.h.bf16 %v2066
        %v2500 = vunpack.c.l.bf16 %v2067
        %v2501 = vunpack.c.h.bf16 %v2067
        %v2502 = vunpack.c.l.bf16 %v2068
        %v2503 = vunpack.c.h.bf16 %v2068
        %v2504 = vunpack.c.l.bf16 %v2069
        %v2505 = vunpack.c.h.bf16 %v2069
        %v2506 = vunpack.c.l.bf16 %v2070
        %v2507 = vunpack.c.h.bf16 %v2070
        %v2508 = vunpack.c.l.bf16 %v2071
        %v2509 = vunpack.c.h.bf16 %v2071
        %v2510 = vunpack.c.l.bf16 %v2072
        %v2511 = vunpack.c.h.bf16 %v2072
        %v2512 = vunpack.c.l.bf16 %v2073
        %v2513 = vunpack.c.h.bf16 %v2073
        %v2514 = vunpack.c.l.bf16 %v2074
        %v2515 = vunpack.c.h.bf16 %v2074
        %v2516 = vunpack.c.l.bf16 %v2075
        %v2517 = vunpack.c.h.bf16 %v2075
        %v2518 = vunpack.c.l.bf16 %v2076
        %v2519 = vunpack.c.h.bf16 %v2076
        %v2520 = vunpack.c.l.bf16 %v2077
        %v2521 = vunpack.c.h.bf16 %v2077
        %v2522 = vunpack.c.l.bf16 %v2078
        %v2523 = vunpack.c.h.bf16 %v2078
        %v2524 = vunpack.c.l.bf16 %v2079
        %v2525 = vunpack.c.h.bf16 %v2079
        %v2526 = vunpack.c.l.bf16 %v2080
        %v2527 = vunpack.c.h.bf16 %v2080
        %v2528 = vunpack.c.l.bf16 %v2081
        %v2529 = vunpack.c.h.bf16 %v2081
        %v2530 = vunpack.c.l.bf16 %v2082
        %v2531 = vunpack.c.h.bf16 %v2082
        %v2532 = vunpack.c.l.bf16 %v2083
        %v2533 = vunpack.c.h.bf16 %v2083
        %v2534 = vunpack.c.l.bf16 %v2084
        %v2535 = vunpack.c.h.bf16 %v2084
        %v2536 = vunpack.c.l.bf16 %v2085
        %v2537 = vunpack.c.h.bf16 %v2085
        %v2538 = vunpack.c.l.bf16 %v2086
        %v2539 = vunpack.c.h.bf16 %v2086
        %v2540 = vunpack.c.l.bf16 %v2087
        %v2541 = vunpack.c.h.bf16 %v2087
        %v2542 = vunpack.c.l.bf16 %v2088
        %v2543 = vunpack.c.h.bf16 %v2088
        %v2544 = vunpack.c.l.bf16 %v2089
        %v2545 = vunpack.c.h.bf16 %v2089
        %v2546 = vunpack.c.l.bf16 %v2090
        %v2547 = vunpack.c.h.bf16 %v2090
        %v2548 = vunpack.c.l.bf16 %v2091
        %v2549 = vunpack.c.h.bf16 %v2091
        %v2550 = vunpack.c.l.bf16 %v2092
        %v2551 = vunpack.c.h.bf16 %v2092
        %v2552 = vunpack.c.l.bf16 %v2093
        %v2553 = vunpack.c.h.bf16 %v2093
        %v2554 = vunpack.c.l.bf16 %v2094
        %v2555 = vunpack.c.h.bf16 %v2094
        %v2556 = vunpack.c.l.bf16 %v2095
        %v2557 = vunpack.c.h.bf16 %v2095
        %v2558 = vunpack.c.l.bf16 %v2096
        %v2559 = vunpack.c.h.bf16 %v2096
        %v2560 = vunpack.c.l.bf16 %v2097
        %v2561 = vunpack.c.h.bf16 %v2097
        %v2562 = vunpack.c.l.bf16 %v2098
        %v2563 = vunpack.c.h.bf16 %v2098
        %v2564 = vunpack.c.l.bf16 %v2099
        %v2565 = vunpack.c.h.bf16 %v2099
        %v2566 = vunpack.c.l.bf16 %v2100
        %v2567 = vunpack.c.h.bf16 %v2100
        %v2568 = vunpack.c.l.bf16 %v2101
        %v2569 = vunpack.c.h.bf16 %v2101
        %v2570 = vunpack.c.l.bf16 %v2102
        %v2571 = vunpack.c.h.bf16 %v2102
        %v2572 = vunpack.c.l.bf16 %v2103
        %v2573 = vunpack.c.h.bf16 %v2103
        %v2574 = vunpack.c.l.bf16 %v2104
        %v2575 = vunpack.c.h.bf16 %v2104
        %v2576 = vunpack.c.l.bf16 %v2105
        %v2577 = vunpack.c.h.bf16 %v2105
        %v2578 = vunpack.c.l.bf16 %v2106
        %v2579 = vunpack.c.h.bf16 %v2106
        %v2580 = vunpack.c.l.bf16 %v2107
        %v2581 = vunpack.c.h.bf16 %v2107
        %v2582 = vunpack.c.l.bf16 %v2108
        %v2583 = vunpack.c.h.bf16 %v2108
        %v2584 = vunpack.c.l.bf16 %v2109
        %v2585 = vunpack.c.h.bf16 %v2109
        %v2586 = vunpack.c.l.bf16 %v2110
        %v2587 = vunpack.c.h.bf16 %v2110
        %v2588 = vunpack.c.l.bf16 %v2111
        %v2589 = vunpack.c.h.bf16 %v2111
        %v2590 = vunpack.c.l.bf16 %v2112
        %v2591 = vunpack.c.h.bf16 %v2112
        %v2592 = vunpack.c.l.bf16 %v2113
        %v2593 = vunpack.c.h.bf16 %v2113
        %v2594 = vunpack.c.l.bf16 %v2114
        %v2595 = vunpack.c.h.bf16 %v2114
        %v2596 = vunpack.c.l.bf16 %v2115
        %v2597 = vunpack.c.h.bf16 %v2115
        %v2598 = vunpack.c.l.bf16 %v2116
        %v2599 = vunpack.c.h.bf16 %v2116
        %v2600 = vunpack.c.l.bf16 %v2117
        %v2601 = vunpack.c.h.bf16 %v2117
        %v2602 = vunpack.c.l.bf16 %v2118
        %v2603 = vunpack.c.h.bf16 %v2118
        %v2604 = vunpack.c.l.bf16 %v2119
        %v2605 = vunpack.c.h.bf16 %v2119
        %v2606 = vunpack.c.l.bf16 %v2120
        %v2607 = vunpack.c.h.bf16 %v2120
        %v2608 = vunpack.c.l.bf16 %v2121
        %v2609 = vunpack.c.h.bf16 %v2121
        %v2610 = vunpack.c.l.bf16 %v2122
        %v2611 = vunpack.c.h.bf16 %v2122
        %v2612 = vunpack.c.l.bf16 %v2123
        %v2613 = vunpack.c.h.bf16 %v2123
        %v2614 = vunpack.c.l.bf16 %v2124
        %v2615 = vunpack.c.h.bf16 %v2124
        %v2616 = vunpack.c.l.bf16 %v2125
        %v2617 = vunpack.c.h.bf16 %v2125
        %v2618 = vunpack.c.l.bf16 %v2126
        %v2619 = vunpack.c.h.bf16 %v2126
        %v2620 = vunpack.c.l.bf16 %v2127
        %v2621 = vunpack.c.h.bf16 %v2127
        %v2622 = vunpack.c.l.bf16 %v2128
        %v2623 = vunpack.c.h.bf16 %v2128
        %v2624 = vunpack.c.l.bf16 %v2129
        %v2625 = vunpack.c.h.bf16 %v2129
        %v2626 = vunpack.c.l.bf16 %v2130
        %v2627 = vunpack.c.h.bf16 %v2130
        %v2628 = vunpack.c.l.bf16 %v2131
        %v2629 = vunpack.c.h.bf16 %v2131
        %v2630 = vunpack.c.l.bf16 %v2132
        %v2631 = vunpack.c.h.bf16 %v2132
        %v2632 = vunpack.c.l.bf16 %v2133
        %v2633 = vunpack.c.h.bf16 %v2133
        %v2634 = vunpack.c.l.bf16 %v2134
        %v2635 = vunpack.c.h.bf16 %v2134
        %v2636 = vunpack.c.l.bf16 %v2135
        %v2637 = vunpack.c.h.bf16 %v2135
        %v2638 = vunpack.c.l.bf16 %v2136
        %v2639 = vunpack.c.h.bf16 %v2136
        %v2640 = vunpack.c.l.bf16 %v2137
        %v2641 = vunpack.c.h.bf16 %v2137
        %v2642 = vunpack.c.l.bf16 %v2138
        %v2643 = vunpack.c.h.bf16 %v2138
        %v2644 = vunpack.c.l.bf16 %v2139
        %v2645 = vunpack.c.h.bf16 %v2139
        %v2646 = vunpack.c.l.bf16 %v2140
        %v2647 = vunpack.c.h.bf16 %v2140
        %v2648 = vunpack.c.l.bf16 %v2141
        %v2649 = vunpack.c.h.bf16 %v2141
        %v2650 = vunpack.c.l.bf16 %v2142
        %v2651 = vunpack.c.h.bf16 %v2142
        %v2652 = vunpack.c.l.bf16 %v2143
        %v2653 = vunpack.c.h.bf16 %v2143
        %v2654 = vunpack.c.l.bf16 %v2144
        %v2655 = vunpack.c.h.bf16 %v2144
        %v2656 = vunpack.c.l.bf16 %v2145
        %v2657 = vunpack.c.h.bf16 %v2145
        %v2658 = vsub.f32 %v2146, %v2402
        %v2659 = vsub.f32 %v2147, %v2403
        %v2660 = vsub.f32 %v2148, %v2404
        %v2661 = vsub.f32 %v2149, %v2405
        %v2662 = vsub.f32 %v2150, %v2406
        %v2663 = vsub.f32 %v2151, %v2407
        %v2664 = vsub.f32 %v2152, %v2408
        %v2665 = vsub.f32 %v2153, %v2409
        %v2666 = vsub.f32 %v2154, %v2410
        %v2667 = vsub.f32 %v2155, %v2411
        %v2668 = vsub.f32 %v2156, %v2412
        %v2669 = vsub.f32 %v2157, %v2413
        %v2670 = vsub.f32 %v2158, %v2414
        %v2671 = vsub.f32 %v2159, %v2415
        %v2672 = vsub.f32 %v2160, %v2416
        %v2673 = vsub.f32 %v2161, %v2417
        %v2674 = vsub.f32 %v2162, %v2418
        %v2675 = vsub.f32 %v2163, %v2419
        %v2676 = vsub.f32 %v2164, %v2420
        %v2677 = vsub.f32 %v2165, %v2421
        %v2678 = vsub.f32 %v2166, %v2422
        %v2679 = vsub.f32 %v2167, %v2423
        %v2680 = vsub.f32 %v2168, %v2424
        %v2681 = vsub.f32 %v2169, %v2425
        %v2682 = vsub.f32 %v2170, %v2426
        %v2683 = vsub.f32 %v2171, %v2427
        %v2684 = vsub.f32 %v2172, %v2428
        %v2685 = vsub.f32 %v2173, %v2429
        %v2686 = vsub.f32 %v2174, %v2430
        %v2687 = vsub.f32 %v2175, %v2431
        %v2688 = vsub.f32 %v2176, %v2432
        %v2689 = vsub.f32 %v2177, %v2433
        %v2690 = vsub.f32 %v2178, %v2434
        %v2691 = vsub.f32 %v2179, %v2435
        %v2692 = vsub.f32 %v2180, %v2436
        %v2693 = vsub.f32 %v2181, %v2437
        %v2694 = vsub.f32 %v2182, %v2438
        %v2695 = vsub.f32 %v2183, %v2439
        %v2696 = vsub.f32 %v2184, %v2440
        %v2697 = vsub.f32 %v2185, %v2441
        %v2698 = vsub.f32 %v2186, %v2442
        %v2699 = vsub.f32 %v2187, %v2443
        %v2700 = vsub.f32 %v2188, %v2444
        %v2701 = vsub.f32 %v2189, %v2445
        %v2702 = vsub.f32 %v2190, %v2446
        %v2703 = vsub.f32 %v2191, %v2447
        %v2704 = vsub.f32 %v2192, %v2448
        %v2705 = vsub.f32 %v2193, %v2449
        %v2706 = vsub.f32 %v2194, %v2450
        %v2707 = vsub.f32 %v2195, %v2451
        %v2708 = vsub.f32 %v2196, %v2452
        %v2709 = vsub.f32 %v2197, %v2453
        %v2710 = vsub.f32 %v2198, %v2454
        %v2711 = vsub.f32 %v2199, %v2455
        %v2712 = vsub.f32 %v2200, %v2456
        %v2713 = vsub.f32 %v2201, %v2457
        %v2714 = vsub.f32 %v2202, %v2458
        %v2715 = vsub.f32 %v2203, %v2459
        %v2716 = vsub.f32 %v2204, %v2460
        %v2717 = vsub.f32 %v2205, %v2461
        %v2718 = vsub.f32 %v2206, %v2462
        %v2719 = vsub.f32 %v2207, %v2463
        %v2720 = vsub.f32 %v2208, %v2464
        %v2721 = vsub.f32 %v2209, %v2465
        %v2722 = vsub.f32 %v2210, %v2466
        %v2723 = vsub.f32 %v2211, %v2467
        %v2724 = vsub.f32 %v2212, %v2468
        %v2725 = vsub.f32 %v2213, %v2469
        %v2726 = vsub.f32 %v2214, %v2470
        %v2727 = vsub.f32 %v2215, %v2471
        %v2728 = vsub.f32 %v2216, %v2472
        %v2729 = vsub.f32 %v2217, %v2473
        %v2730 = vsub.f32 %v2218, %v2474
        %v2731 = vsub.f32 %v2219, %v2475
        %v2732 = vsub.f32 %v2220, %v2476
        %v2733 = vsub.f32 %v2221, %v2477
        %v2734 = vsub.f32 %v2222, %v2478
        %v2735 = vsub.f32 %v2223, %v2479
        %v2736 = vsub.f32 %v2224, %v2480
        %v2737 = vsub.f32 %v2225, %v2481
        %v2738 = vsub.f32 %v2226, %v2482
        %v2739 = vsub.f32 %v2227, %v2483
        %v2740 = vsub.f32 %v2228, %v2484
        %v2741 = vsub.f32 %v2229, %v2485
        %v2742 = vsub.f32 %v2230, %v2486
        %v2743 = vsub.f32 %v2231, %v2487
        %v2744 = vsub.f32 %v2232, %v2488
        %v2745 = vsub.f32 %v2233, %v2489
        %v2746 = vsub.f32 %v2234, %v2490
        %v2747 = vsub.f32 %v2235, %v2491
        %v2748 = vsub.f32 %v2236, %v2492
        %v2749 = vsub.f32 %v2237, %v2493
        %v2750 = vsub.f32 %v2238, %v2494
        %v2751 = vsub.f32 %v2239, %v2495
        %v2752 = vsub.f32 %v2240, %v2496
        %v2753 = vsub.f32 %v2241, %v2497
        %v2754 = vsub.f32 %v2242, %v2498
        %v2755 = vsub.f32 %v2243, %v2499
        %v2756 = vsub.f32 %v2244, %v2500
        %v2757 = vsub.f32 %v2245, %v2501
        %v2758 = vsub.f32 %v2246, %v2502
        %v2759 = vsub.f32 %v2247, %v2503
        %v2760 = vsub.f32 %v2248, %v2504
        %v2761 = vsub.f32 %v2249, %v2505
        %v2762 = vsub.f32 %v2250, %v2506
        %v2763 = vsub.f32 %v2251, %v2507
        %v2764 = vsub.f32 %v2252, %v2508
        %v2765 = vsub.f32 %v2253, %v2509
        %v2766 = vsub.f32 %v2254, %v2510
        %v2767 = vsub.f32 %v2255, %v2511
        %v2768 = vsub.f32 %v2256, %v2512
        %v2769 = vsub.f32 %v2257, %v2513
        %v2770 = vsub.f32 %v2258, %v2514
        %v2771 = vsub.f32 %v2259, %v2515
        %v2772 = vsub.f32 %v2260, %v2516
        %v2773 = vsub.f32 %v2261, %v2517
        %v2774 = vsub.f32 %v2262, %v2518
        %v2775 = vsub.f32 %v2263, %v2519
        %v2776 = vsub.f32 %v2264, %v2520
        %v2777 = vsub.f32 %v2265, %v2521
        %v2778 = vsub.f32 %v2266, %v2522
        %v2779 = vsub.f32 %v2267, %v2523
        %v2780 = vsub.f32 %v2268, %v2524
        %v2781 = vsub.f32 %v2269, %v2525
        %v2782 = vsub.f32 %v2270, %v2526
        %v2783 = vsub.f32 %v2271, %v2527
        %v2784 = vsub.f32 %v2272, %v2528
        %v2785 = vsub.f32 %v2273, %v2529
        %v2786 = vsub.f32 %v2274, %v2530
        %v2787 = vsub.f32 %v2275, %v2531
        %v2788 = vsub.f32 %v2276, %v2532
        %v2789 = vsub.f32 %v2277, %v2533
        %v2790 = vsub.f32 %v2278, %v2534
        %v2791 = vsub.f32 %v2279, %v2535
        %v2792 = vsub.f32 %v2280, %v2536
        %v2793 = vsub.f32 %v2281, %v2537
        %v2794 = vsub.f32 %v2282, %v2538
        %v2795 = vsub.f32 %v2283, %v2539
        %v2796 = vsub.f32 %v2284, %v2540
        %v2797 = vsub.f32 %v2285, %v2541
        %v2798 = vsub.f32 %v2286, %v2542
        %v2799 = vsub.f32 %v2287, %v2543
        %v2800 = vsub.f32 %v2288, %v2544
        %v2801 = vsub.f32 %v2289, %v2545
        %v2802 = vsub.f32 %v2290, %v2546
        %v2803 = vsub.f32 %v2291, %v2547
        %v2804 = vsub.f32 %v2292, %v2548
        %v2805 = vsub.f32 %v2293, %v2549
        %v2806 = vsub.f32 %v2294, %v2550
        %v2807 = vsub.f32 %v2295, %v2551
        %v2808 = vsub.f32 %v2296, %v2552
        %v2809 = vsub.f32 %v2297, %v2553
        %v2810 = vsub.f32 %v2298, %v2554
        %v2811 = vsub.f32 %v2299, %v2555
        %v2812 = vsub.f32 %v2300, %v2556
        %v2813 = vsub.f32 %v2301, %v2557
        %v2814 = vsub.f32 %v2302, %v2558
        %v2815 = vsub.f32 %v2303, %v2559
        %v2816 = vsub.f32 %v2304, %v2560
        %v2817 = vsub.f32 %v2305, %v2561
        %v2818 = vsub.f32 %v2306, %v2562
        %v2819 = vsub.f32 %v2307, %v2563
        %v2820 = vsub.f32 %v2308, %v2564
        %v2821 = vsub.f32 %v2309, %v2565
        %v2822 = vsub.f32 %v2310, %v2566
        %v2823 = vsub.f32 %v2311, %v2567
        %v2824 = vsub.f32 %v2312, %v2568
        %v2825 = vsub.f32 %v2313, %v2569
        %v2826 = vsub.f32 %v2314, %v2570
        %v2827 = vsub.f32 %v2315, %v2571
        %v2828 = vsub.f32 %v2316, %v2572
        %v2829 = vsub.f32 %v2317, %v2573
        %v2830 = vsub.f32 %v2318, %v2574
        %v2831 = vsub.f32 %v2319, %v2575
        %v2832 = vsub.f32 %v2320, %v2576
        %v2833 = vsub.f32 %v2321, %v2577
        %v2834 = vsub.f32 %v2322, %v2578
        %v2835 = vsub.f32 %v2323, %v2579
        %v2836 = vsub.f32 %v2324, %v2580
        %v2837 = vsub.f32 %v2325, %v2581
        %v2838 = vsub.f32 %v2326, %v2582
        %v2839 = vsub.f32 %v2327, %v2583
        %v2840 = vsub.f32 %v2328, %v2584
        %v2841 = vsub.f32 %v2329, %v2585
        %v2842 = vsub.f32 %v2330, %v2586
        %v2843 = vsub.f32 %v2331, %v2587
        %v2844 = vsub.f32 %v2332, %v2588
        %v2845 = vsub.f32 %v2333, %v2589
        %v2846 = vsub.f32 %v2334, %v2590
        %v2847 = vsub.f32 %v2335, %v2591
        %v2848 = vsub.f32 %v2336, %v2592
        %v2849 = vsub.f32 %v2337, %v2593
        %v2850 = vsub.f32 %v2338, %v2594
        %v2851 = vsub.f32 %v2339, %v2595
        %v2852 = vsub.f32 %v2340, %v2596
        %v2853 = vsub.f32 %v2341, %v2597
        %v2854 = vsub.f32 %v2342, %v2598
        %v2855 = vsub.f32 %v2343, %v2599
        %v2856 = vsub.f32 %v2344, %v2600
        %v2857 = vsub.f32 %v2345, %v2601
        %v2858 = vsub.f32 %v2346, %v2602
        %v2859 = vsub.f32 %v2347, %v2603
        %v2860 = vsub.f32 %v2348, %v2604
        %v2861 = vsub.f32 %v2349, %v2605
        %v2862 = vsub.f32 %v2350, %v2606
        %v2863 = vsub.f32 %v2351, %v2607
        %v2864 = vsub.f32 %v2352, %v2608
        %v2865 = vsub.f32 %v2353, %v2609
        %v2866 = vsub.f32 %v2354, %v2610
        %v2867 = vsub.f32 %v2355, %v2611
        %v2868 = vsub.f32 %v2356, %v2612
        %v2869 = vsub.f32 %v2357, %v2613
        %v2870 = vsub.f32 %v2358, %v2614
        %v2871 = vsub.f32 %v2359, %v2615
        %v2872 = vsub.f32 %v2360, %v2616
        %v2873 = vsub.f32 %v2361, %v2617
        %v2874 = vsub.f32 %v2362, %v2618
        %v2875 = vsub.f32 %v2363, %v2619
        %v2876 = vsub.f32 %v2364, %v2620
        %v2877 = vsub.f32 %v2365, %v2621
        %v2878 = vsub.f32 %v2366, %v2622
        %v2879 = vsub.f32 %v2367, %v2623
        %v2880 = vsub.f32 %v2368, %v2624
        %v2881 = vsub.f32 %v2369, %v2625
        %v2882 = vsub.f32 %v2370, %v2626
        %v2883 = vsub.f32 %v2371, %v2627
        %v2884 = vsub.f32 %v2372, %v2628
        %v2885 = vsub.f32 %v2373, %v2629
        %v2886 = vsub.f32 %v2374, %v2630
        %v2887 = vsub.f32 %v2375, %v2631
        %v2888 = vsub.f32 %v2376, %v2632
        %v2889 = vsub.f32 %v2377, %v2633
        %v2890 = vsub.f32 %v2378, %v2634
        %v2891 = vsub.f32 %v2379, %v2635
        %v2892 = vsub.f32 %v2380, %v2636
        %v2893 = vsub.f32 %v2381, %v2637
        %v2894 = vsub.f32 %v2382, %v2638
        %v2895 = vsub.f32 %v2383, %v2639
        %v2896 = vsub.f32 %v2384, %v2640
        %v2897 = vsub.f32 %v2385, %v2641
        %v2898 = vsub.f32 %v2386, %v2642
        %v2899 = vsub.f32 %v2387, %v2643
        %v2900 = vsub.f32 %v2388, %v2644
        %v2901 = vsub.f32 %v2389, %v2645
        %v2902 = vsub.f32 %v2390, %v2646
        %v2903 = vsub.f32 %v2391, %v2647
        %v2904 = vsub.f32 %v2392, %v2648
        %v2905 = vsub.f32 %v2393, %v2649
        %v2906 = vsub.f32 %v2394, %v2650
        %v2907 = vsub.f32 %v2395, %v2651
        %v2908 = vsub.f32 %v2396, %v2652
        %v2909 = vsub.f32 %v2397, %v2653
        %v2910 = vsub.f32 %v2398, %v2654
        %v2911 = vsub.f32 %v2399, %v2655
        %v2912 = vsub.f32 %v2400, %v2656
        %v2913 = vsub.f32 %v2401, %v2657
        %v2914 = vpack.c.bf16 %v2666, %v2658
        %v2915 = vpack.c.bf16 %v2667, %v2659
        %v2916 = vpack.c.bf16 %v2668, %v2660
        %v2917 = vpack.c.bf16 %v2669, %v2661
        %v2918 = vpack.c.bf16 %v2670, %v2662
        %v2919 = vpack.c.bf16 %v2671, %v2663
        %v2920 = vpack.c.bf16 %v2672, %v2664
        %v2921 = vpack.c.bf16 %v2673, %v2665
        %v2922 = vpack.c.bf16 %v2682, %v2674
        %v2923 = vpack.c.bf16 %v2683, %v2675
        %v2924 = vpack.c.bf16 %v2684, %v2676
        %v2925 = vpack.c.bf16 %v2685, %v2677
        %v2926 = vpack.c.bf16 %v2686, %v2678
        %v2927 = vpack.c.bf16 %v2687, %v2679
        %v2928 = vpack.c.bf16 %v2688, %v2680
        %v2929 = vpack.c.bf16 %v2689, %v2681
        %v2930 = vpack.c.bf16 %v2698, %v2690
        %v2931 = vpack.c.bf16 %v2699, %v2691
        %v2932 = vpack.c.bf16 %v2700, %v2692
        %v2933 = vpack.c.bf16 %v2701, %v2693
        %v2934 = vpack.c.bf16 %v2702, %v2694
        %v2935 = vpack.c.bf16 %v2703, %v2695
        %v2936 = vpack.c.bf16 %v2704, %v2696
        %v2937 = vpack.c.bf16 %v2705, %v2697
        %v2938 = vpack.c.bf16 %v2714, %v2706
        %v2939 = vpack.c.bf16 %v2715, %v2707
        %v2940 = vpack.c.bf16 %v2716, %v2708
        %v2941 = vpack.c.bf16 %v2717, %v2709
        %v2942 = vpack.c.bf16 %v2718, %v2710
        %v2943 = vpack.c.bf16 %v2719, %v2711
        %v2944 = vpack.c.bf16 %v2720, %v2712
        %v2945 = vpack.c.bf16 %v2721, %v2713
        %v2946 = vpack.c.bf16 %v2730, %v2722
        %v2947 = vpack.c.bf16 %v2731, %v2723
        %v2948 = vpack.c.bf16 %v2732, %v2724
        %v2949 = vpack.c.bf16 %v2733, %v2725
        %v2950 = vpack.c.bf16 %v2734, %v2726
        %v2951 = vpack.c.bf16 %v2735, %v2727
        %v2952 = vpack.c.bf16 %v2736, %v2728
        %v2953 = vpack.c.bf16 %v2737, %v2729
        %v2954 = vpack.c.bf16 %v2746, %v2738
        %v2955 = vpack.c.bf16 %v2747, %v2739
        %v2956 = vpack.c.bf16 %v2748, %v2740
        %v2957 = vpack.c.bf16 %v2749, %v2741
        %v2958 = vpack.c.bf16 %v2750, %v2742
        %v2959 = vpack.c.bf16 %v2751, %v2743
        %v2960 = vpack.c.bf16 %v2752, %v2744
        %v2961 = vpack.c.bf16 %v2753, %v2745
        %v2962 = vpack.c.bf16 %v2762, %v2754
        %v2963 = vpack.c.bf16 %v2763, %v2755
        %v2964 = vpack.c.bf16 %v2764, %v2756
        %v2965 = vpack.c.bf16 %v2765, %v2757
        %v2966 = vpack.c.bf16 %v2766, %v2758
        %v2967 = vpack.c.bf16 %v2767, %v2759
        %v2968 = vpack.c.bf16 %v2768, %v2760
        %v2969 = vpack.c.bf16 %v2769, %v2761
        %v2970 = vpack.c.bf16 %v2778, %v2770
        %v2971 = vpack.c.bf16 %v2779, %v2771
        %v2972 = vpack.c.bf16 %v2780, %v2772
        %v2973 = vpack.c.bf16 %v2781, %v2773
        %v2974 = vpack.c.bf16 %v2782, %v2774
        %v2975 = vpack.c.bf16 %v2783, %v2775
        %v2976 = vpack.c.bf16 %v2784, %v2776
        %v2977 = vpack.c.bf16 %v2785, %v2777
        %v2978 = vpack.c.bf16 %v2794, %v2786
        %v2979 = vpack.c.bf16 %v2795, %v2787
        %v2980 = vpack.c.bf16 %v2796, %v2788
        %v2981 = vpack.c.bf16 %v2797, %v2789
        %v2982 = vpack.c.bf16 %v2798, %v2790
        %v2983 = vpack.c.bf16 %v2799, %v2791
        %v2984 = vpack.c.bf16 %v2800, %v2792
        %v2985 = vpack.c.bf16 %v2801, %v2793
        %v2986 = vpack.c.bf16 %v2810, %v2802
        %v2987 = vpack.c.bf16 %v2811, %v2803
        %v2988 = vpack.c.bf16 %v2812, %v2804
        %v2989 = vpack.c.bf16 %v2813, %v2805
        %v2990 = vpack.c.bf16 %v2814, %v2806
        %v2991 = vpack.c.bf16 %v2815, %v2807
        %v2992 = vpack.c.bf16 %v2816, %v2808
        %v2993 = vpack.c.bf16 %v2817, %v2809
        %v2994 = vpack.c.bf16 %v2826, %v2818
        %v2995 = vpack.c.bf16 %v2827, %v2819
        %v2996 = vpack.c.bf16 %v2828, %v2820
        %v2997 = vpack.c.bf16 %v2829, %v2821
        %v2998 = vpack.c.bf16 %v2830, %v2822
        %v2999 = vpack.c.bf16 %v2831, %v2823
        %v3000 = vpack.c.bf16 %v2832, %v2824
        %v3001 = vpack.c.bf16 %v2833, %v2825
        %v3002 = vpack.c.bf16 %v2842, %v2834
        %v3003 = vpack.c.bf16 %v2843, %v2835
        %v3004 = vpack.c.bf16 %v2844, %v2836
        %v3005 = vpack.c.bf16 %v2845, %v2837
        %v3006 = vpack.c.bf16 %v2846, %v2838
        %v3007 = vpack.c.bf16 %v2847, %v2839
        %v3008 = vpack.c.bf16 %v2848, %v2840
        %v3009 = vpack.c.bf16 %v2849, %v2841
        %v3010 = vpack.c.bf16 %v2858, %v2850
        %v3011 = vpack.c.bf16 %v2859, %v2851
        %v3012 = vpack.c.bf16 %v2860, %v2852
        %v3013 = vpack.c.bf16 %v2861, %v2853
        %v3014 = vpack.c.bf16 %v2862, %v2854
        %v3015 = vpack.c.bf16 %v2863, %v2855
        %v3016 = vpack.c.bf16 %v2864, %v2856
        %v3017 = vpack.c.bf16 %v2865, %v2857
        %v3018 = vpack.c.bf16 %v2874, %v2866
        %v3019 = vpack.c.bf16 %v2875, %v2867
        %v3020 = vpack.c.bf16 %v2876, %v2868
        %v3021 = vpack.c.bf16 %v2877, %v2869
        %v3022 = vpack.c.bf16 %v2878, %v2870
        %v3023 = vpack.c.bf16 %v2879, %v2871
        %v3024 = vpack.c.bf16 %v2880, %v2872
        %v3025 = vpack.c.bf16 %v2881, %v2873
        %v3026 = vpack.c.bf16 %v2890, %v2882
        %v3027 = vpack.c.bf16 %v2891, %v2883
        %v3028 = vpack.c.bf16 %v2892, %v2884
        %v3029 = vpack.c.bf16 %v2893, %v2885
        %v3030 = vpack.c.bf16 %v2894, %v2886
        %v3031 = vpack.c.bf16 %v2895, %v2887
        %v3032 = vpack.c.bf16 %v2896, %v2888
        %v3033 = vpack.c.bf16 %v2897, %v2889
        %v3034 = vpack.c.bf16 %v2906, %v2898
        %v3035 = vpack.c.bf16 %v2907, %v2899
        %v3036 = vpack.c.bf16 %v2908, %v2900
        %v3037 = vpack.c.bf16 %v2909, %v2901
        %v3038 = vpack.c.bf16 %v2910, %v2902
        %v3039 = vpack.c.bf16 %v2911, %v2903
        %v3040 = vpack.c.bf16 %v2912, %v2904
        %v3041 = vpack.c.bf16 %v2913, %v2905
        %v3044 = vunpack.c.l.b16 %v299
        %v3045 = vunpack.c.h.b16 %v299
        %v3046 = vunpack.c.l.b16 %v300
        %v3047 = vunpack.c.h.b16 %v300
        %v3048 = vpack.c.b16 %v3046, %v3044
        %v3049 = vpack.c.b16 %v3047, %v3045
        %3052 = vmatpush.bf16.msra.mxu0 %v2970
        %3053 = vmatpush.bf16.msra.mxu0 %v2962
        %3054 = vmatpush.bf16.msra.mxu0 %v2954
        %3055 = vmatpush.bf16.msra.mxu0 %v2946
        %3056 = vmatpush.bf16.msra.mxu0 %v2938
        %3057 = vmatpush.bf16.msra.mxu0 %v2930
        %3058 = vmatpush.bf16.msra.mxu0 %v2922
        %3059 = vmatpush.bf16.msra.mxu0 %v2914
        %3060 = vmatmul.bf16.gmra.mxu0 %v3048
        %v3061 = vpop.f32.mrf.mxu0
        %v3062 = vadd.f32 0.0, %v3061
        %v3063 = vpop.f32.mrf.mxu0
        %v3064 = vadd.f32 0.0, %v3063
        %3065 = vdwg.mxu0
        %3066 = vmatpush.bf16.msra.mxu0 %v3034
        %3067 = vmatpush.bf16.msra.mxu0 %v3026
        %3068 = vmatpush.bf16.msra.mxu0 %v3018
        %3069 = vmatpush.bf16.msra.mxu0 %v3010
        %3070 = vmatpush.bf16.msra.mxu0 %v3002
        %3071 = vmatpush.bf16.msra.mxu0 %v2994
        %3072 = vmatpush.bf16.msra.mxu0 %v2986
        %3073 = vmatpush.bf16.msra.mxu0 %v2978
        %3074 = vmatmul.bf16.gmra.mxu0 %v3049
        %v3075 = vpop.f32.mrf.mxu0
        %v3076 = vadd.f32 %v3062, %v3075
        %v3077 = vpop.f32.mrf.mxu0
        %v3078 = vadd.f32 %v3064, %v3077
        %3079 = vdwg.mxu0
        %3080 = vmatpush.bf16.msra.mxu0 %v2971
        %3081 = vmatpush.bf16.msra.mxu0 %v2963
        %3082 = vmatpush.bf16.msra.mxu0 %v2955
        %3083 = vmatpush.bf16.msra.mxu0 %v2947
        %3084 = vmatpush.bf16.msra.mxu0 %v2939
        %3085 = vmatpush.bf16.msra.mxu0 %v2931
        %3086 = vmatpush.bf16.msra.mxu0 %v2923
        %3087 = vmatpush.bf16.msra.mxu0 %v2915
        %3088 = vmatmul.bf16.gmra.mxu0 %v3048
        %v3089 = vpop.f32.mrf.mxu0
        %v3090 = vadd.f32 0.0, %v3089
        %v3091 = vpop.f32.mrf.mxu0
        %v3092 = vadd.f32 0.0, %v3091
        %3093 = vdwg.mxu0
        %3094 = vmatpush.bf16.msra.mxu0 %v3035
        %3095 = vmatpush.bf16.msra.mxu0 %v3027
        %3096 = vmatpush.bf16.msra.mxu0 %v3019
        %3097 = vmatpush.bf16.msra.mxu0 %v3011
        %3098 = vmatpush.bf16.msra.mxu0 %v3003
        %3099 = vmatpush.bf16.msra.mxu0 %v2995
        %3100 = vmatpush.bf16.msra.mxu0 %v2987
        %3101 = vmatpush.bf16.msra.mxu0 %v2979
        %3102 = vmatmul.bf16.gmra.mxu0 %v3049
        %v3103 = vpop.f32.mrf.mxu0
        %v3104 = vadd.f32 %v3090, %v3103
        %v3105 = vpop.f32.mrf.mxu0
        %v3106 = vadd.f32 %v3092, %v3105
        %3107 = vdwg.mxu0
        %3108 = vmatpush.bf16.msra.mxu0 %v2972
        %3109 = vmatpush.bf16.msra.mxu0 %v2964
        %3110 = vmatpush.bf16.msra.mxu0 %v2956
        %3111 = vmatpush.bf16.msra.mxu0 %v2948
        %3112 = vmatpush.bf16.msra.mxu0 %v2940
        %3113 = vmatpush.bf16.msra.mxu0 %v2932
        %3114 = vmatpush.bf16.msra.mxu0 %v2924
        %3115 = vmatpush.bf16.msra.mxu0 %v2916
        %3116 = vmatmul.bf16.gmra.mxu0 %v3048
        %v3117 = vpop.f32.mrf.mxu0
        %v3118 = vadd.f32 0.0, %v3117
        %v3119 = vpop.f32.mrf.mxu0
        %v3120 = vadd.f32 0.0, %v3119
        %3121 = vdwg.mxu0
        %3122 = vmatpush.bf16.msra.mxu0 %v3036
        %3123 = vmatpush.bf16.msra.mxu0 %v3028
        %3124 = vmatpush.bf16.msra.mxu0 %v3020
        %3125 = vmatpush.bf16.msra.mxu0 %v3012
        %3126 = vmatpush.bf16.msra.mxu0 %v3004
        %3127 = vmatpush.bf16.msra.mxu0 %v2996
        %3128 = vmatpush.bf16.msra.mxu0 %v2988
        %3129 = vmatpush.bf16.msra.mxu0 %v2980
        %3130 = vmatmul.bf16.gmra.mxu0 %v3049
        %v3131 = vpop.f32.mrf.mxu0
        %v3132 = vadd.f32 %v3118, %v3131
        %v3133 = vpop.f32.mrf.mxu0
        %v3134 = vadd.f32 %v3120, %v3133
        %3135 = vdwg.mxu0
        %3136 = vmatpush.bf16.msra.mxu0 %v2973
        %3137 = vmatpush.bf16.msra.mxu0 %v2965
        %3138 = vmatpush.bf16.msra.mxu0 %v2957
        %3139 = vmatpush.bf16.msra.mxu0 %v2949
        %3140 = vmatpush.bf16.msra.mxu0 %v2941
        %3141 = vmatpush.bf16.msra.mxu0 %v2933
        %3142 = vmatpush.bf16.msra.mxu0 %v2925
        %3143 = vmatpush.bf16.msra.mxu0 %v2917
        %3144 = vmatmul.bf16.gmra.mxu0 %v3048
        %v3145 = vpop.f32.mrf.mxu0
        %v3146 = vadd.f32 0.0, %v3145
        %v3147 = vpop.f32.mrf.mxu0
        %v3148 = vadd.f32 0.0, %v3147
        %3149 = vdwg.mxu0
        %3150 = vmatpush.bf16.msra.mxu0 %v3037
        %3151 = vmatpush.bf16.msra.mxu0 %v3029
        %3152 = vmatpush.bf16.msra.mxu0 %v3021
        %3153 = vmatpush.bf16.msra.mxu0 %v3013
        %3154 = vmatpush.bf16.msra.mxu0 %v3005
        %3155 = vmatpush.bf16.msra.mxu0 %v2997
        %3156 = vmatpush.bf16.msra.mxu0 %v2989
        %3157 = vmatpush.bf16.msra.mxu0 %v2981
        %3158 = vmatmul.bf16.gmra.mxu0 %v3049
        %v3159 = vpop.f32.mrf.mxu0
        %v3160 = vadd.f32 %v3146, %v3159
        %v3161 = vpop.f32.mrf.mxu0
        %v3162 = vadd.f32 %v3148, %v3161
        %3163 = vdwg.mxu0
        %3164 = vmatpush.bf16.msra.mxu0 %v2974
        %3165 = vmatpush.bf16.msra.mxu0 %v2966
        %3166 = vmatpush.bf16.msra.mxu0 %v2958
        %3167 = vmatpush.bf16.msra.mxu0 %v2950
        %3168 = vmatpush.bf16.msra.mxu0 %v2942
        %3169 = vmatpush.bf16.msra.mxu0 %v2934
        %3170 = vmatpush.bf16.msra.mxu0 %v2926
        %3171 = vmatpush.bf16.msra.mxu0 %v2918
        %3172 = vmatmul.bf16.gmra.mxu0 %v3048
        %v3173 = vpop.f32.mrf.mxu0
        %v3174 = vadd.f32 0.0, %v3173
        %v3175 = vpop.f32.mrf.mxu0
        %v3176 = vadd.f32 0.0, %v3175
        %3177 = vdwg.mxu0
        %3178 = vmatpush.bf16.msra.mxu0 %v3038
        %3179 = vmatpush.bf16.msra.mxu0 %v3030
        %3180 = vmatpush.bf16.msra.mxu0 %v3022
        %3181 = vmatpush.bf16.msra.mxu0 %v3014
        %3182 = vmatpush.bf16.msra.mxu0 %v3006
        %3183 = vmatpush.bf16.msra.mxu0 %v2998
        %3184 = vmatpush.bf16.msra.mxu0 %v2990
        %3185 = vmatpush.bf16.msra.mxu0 %v2982
        %3186 = vmatmul.bf16.gmra.mxu0 %v3049
        %v3187 = vpop.f32.mrf.mxu0
        %v3188 = vadd.f32 %v3174, %v3187
        %v3189 = vpop.f32.mrf.mxu0
        %v3190 = vadd.f32 %v3176, %v3189
        %3191 = vdwg.mxu0
        %3192 = vmatpush.bf16.msra.mxu0 %v2975
        %3193 = vmatpush.bf16.msra.mxu0 %v2967
        %3194 = vmatpush.bf16.msra.mxu0 %v2959
        %3195 = vmatpush.bf16.msra.mxu0 %v2951
        %3196 = vmatpush.bf16.msra.mxu0 %v2943
        %3197 = vmatpush.bf16.msra.mxu0 %v2935
        %3198 = vmatpush.bf16.msra.mxu0 %v2927
        %3199 = vmatpush.bf16.msra.mxu0 %v2919
        %3200 = vmatmul.bf16.gmra.mxu0 %v3048
        %v3201 = vpop.f32.mrf.mxu0
        %v3202 = vadd.f32 0.0, %v3201
        %v3203 = vpop.f32.mrf.mxu0
        %v3204 = vadd.f32 0.0, %v3203
        %3205 = vdwg.mxu0
        %3206 = vmatpush.bf16.msra.mxu0 %v3039
        %3207 = vmatpush.bf16.msra.mxu0 %v3031
        %3208 = vmatpush.bf16.msra.mxu0 %v3023
        %3209 = vmatpush.bf16.msra.mxu0 %v3015
        %3210 = vmatpush.bf16.msra.mxu0 %v3007
        %3211 = vmatpush.bf16.msra.mxu0 %v2999
        %3212 = vmatpush.bf16.msra.mxu0 %v2991
        %3213 = vmatpush.bf16.msra.mxu0 %v2983
        %3214 = vmatmul.bf16.gmra.mxu0 %v3049
        %v3215 = vpop.f32.mrf.mxu0
        %v3216 = vadd.f32 %v3202, %v3215
        %v3217 = vpop.f32.mrf.mxu0
        %v3218 = vadd.f32 %v3204, %v3217
        %3219 = vdwg.mxu0
        %3220 = vmatpush.bf16.msra.mxu0 %v2976
        %3221 = vmatpush.bf16.msra.mxu0 %v2968
        %3222 = vmatpush.bf16.msra.mxu0 %v2960
        %3223 = vmatpush.bf16.msra.mxu0 %v2952
        %3224 = vmatpush.bf16.msra.mxu0 %v2944
        %3225 = vmatpush.bf16.msra.mxu0 %v2936
        %3226 = vmatpush.bf16.msra.mxu0 %v2928
        %3227 = vmatpush.bf16.msra.mxu0 %v2920
        %3228 = vmatmul.bf16.gmra.mxu0 %v3048
        %v3229 = vpop.f32.mrf.mxu0
        %v3230 = vadd.f32 0.0, %v3229
        %v3231 = vpop.f32.mrf.mxu0
        %v3232 = vadd.f32 0.0, %v3231
        %3233 = vdwg.mxu0
        %3234 = vmatpush.bf16.msra.mxu0 %v3040
        %3235 = vmatpush.bf16.msra.mxu0 %v3032
        %3236 = vmatpush.bf16.msra.mxu0 %v3024
        %3237 = vmatpush.bf16.msra.mxu0 %v3016
        %3238 = vmatpush.bf16.msra.mxu0 %v3008
        %3239 = vmatpush.bf16.msra.mxu0 %v3000
        %3240 = vmatpush.bf16.msra.mxu0 %v2992
        %3241 = vmatpush.bf16.msra.mxu0 %v2984
        %3242 = vmatmul.bf16.gmra.mxu0 %v3049
        %v3243 = vpop.f32.mrf.mxu0
        %v3244 = vadd.f32 %v3230, %v3243
        %v3245 = vpop.f32.mrf.mxu0
        %v3246 = vadd.f32 %v3232, %v3245
        %3247 = vdwg.mxu0
        %3248 = vmatpush.bf16.msra.mxu0 %v2977
        %3249 = vmatpush.bf16.msra.mxu0 %v2969
        %3250 = vmatpush.bf16.msra.mxu0 %v2961
        %3251 = vmatpush.bf16.msra.mxu0 %v2953
        %3252 = vmatpush.bf16.msra.mxu0 %v2945
        %3253 = vmatpush.bf16.msra.mxu0 %v2937
        %3254 = vmatpush.bf16.msra.mxu0 %v2929
        %3255 = vmatpush.bf16.msra.mxu0 %v2921
        %3256 = vmatmul.bf16.gmra.mxu0 %v3048
        %v3257 = vpop.f32.mrf.mxu0
        %v3258 = vadd.f32 0.0, %v3257
        %v3259 = vpop.f32.mrf.mxu0
        %v3260 = vadd.f32 0.0, %v3259
        %3261 = vdwg.mxu0
        %3262 = vmatpush.bf16.msra.mxu0 %v3041
        %3263 = vmatpush.bf16.msra.mxu0 %v3033
        %3264 = vmatpush.bf16.msra.mxu0 %v3025
        %3265 = vmatpush.bf16.msra.mxu0 %v3017
        %3266 = vmatpush.bf16.msra.mxu0 %v3009
        %3267 = vmatpush.bf16.msra.mxu0 %v3001
        %3268 = vmatpush.bf16.msra.mxu0 %v2993
        %3269 = vmatpush.bf16.msra.mxu0 %v2985
        %3270 = vmatmul.bf16.gmra.mxu0 %v3049
        %v3271 = vpop.f32.mrf.mxu0
        %v3272 = vadd.f32 %v3258, %v3271
        %v3273 = vpop.f32.mrf.mxu0
        %v3274 = vadd.f32 %v3260, %v3273
        %3275 = vdwg.mxu0
        %3276 = vst [vmem:[#allocation2] sm:$0xff] %v3076
        %3277 = vst [vmem:[#allocation2 + $0x8] sm:$0xff] %v3104
        %3278 = vst [vmem:[#allocation2 + $0x10] sm:$0xff] %v3132
        %3279 = vst [vmem:[#allocation2 + $0x18] sm:$0xff] %v3160
        %3280 = vst [vmem:[#allocation2 + $0x20] sm:$0xff] %v3188
        %3281 = vst [vmem:[#allocation2 + $0x28] sm:$0xff] %v3216
        %3282 = vst [vmem:[#allocation2 + $0x30] sm:$0xff] %v3244
        %3283 = vst [vmem:[#allocation2 + $0x38] sm:$0xff] %v3272
        %3284 = vst [vmem:[#allocation2 + $0x40] sm:$0xff] %v3078
        %3285 = vst [vmem:[#allocation2 + $0x48] sm:$0xff] %v3106
        %3286 = vst [vmem:[#allocation2 + $0x50] sm:$0xff] %v3134
        %3287 = vst [vmem:[#allocation2 + $0x58] sm:$0xff] %v3162
        %3288 = vst [vmem:[#allocation2 + $0x60] sm:$0xff] %v3190
        %3289 = vst [vmem:[#allocation2 + $0x68] sm:$0xff] %v3218
        %3290 = vst [vmem:[#allocation2 + $0x70] sm:$0xff] %v3246
        %3291 = vst [vmem:[#allocation2 + $0x78] sm:$0xff] %v3274
        %vm3292 = vcmp.ge.f32.partialorder %v3076, 0.0
        %vm3293 = vcmp.ge.f32.partialorder %v3104, 0.0
        %vm3294 = vcmp.ge.f32.partialorder %v3132, 0.0
        %vm3295 = vcmp.ge.f32.partialorder %v3160, 0.0
        %vm3296 = vcmp.ge.f32.partialorder %v3188, 0.0
        %vm3297 = vcmp.ge.f32.partialorder %v3216, 0.0
        %vm3298 = vcmp.ge.f32.partialorder %v3244, 0.0
        %vm3299 = vcmp.ge.f32.partialorder %v3272, 0.0
        %vm3300 = vcmp.ge.f32.partialorder %v3078, 0.0
        %vm3301 = vcmp.ge.f32.partialorder %v3106, 0.0
        %vm3302 = vcmp.ge.f32.partialorder %v3134, 0.0
        %vm3303 = vcmp.ge.f32.partialorder %v3162, 0.0
        %vm3304 = vcmp.ge.f32.partialorder %v3190, 0.0
        %vm3305 = vcmp.ge.f32.partialorder %v3218, 0.0
        %vm3306 = vcmp.ge.f32.partialorder %v3246, 0.0
        %vm3307 = vcmp.ge.f32.partialorder %v3274, 0.0
        %v3308 = vmul.f32 %v3076, 0.2
        %v3309 = vmul.f32 %v3104, 0.2
        %v3310 = vmul.f32 %v3132, 0.2
        %v3311 = vmul.f32 %v3160, 0.2
        %v3312 = vmul.f32 %v3188, 0.2
        %v3313 = vmul.f32 %v3216, 0.2
        %v3314 = vmul.f32 %v3244, 0.2
        %v3315 = vmul.f32 %v3272, 0.2
        %v3316 = vmul.f32 %v3078, 0.2
        %v3317 = vmul.f32 %v3106, 0.2
        %v3318 = vmul.f32 %v3134, 0.2
        %v3319 = vmul.f32 %v3162, 0.2
        %v3320 = vmul.f32 %v3190, 0.2
        %v3321 = vmul.f32 %v3218, 0.2
        %v3322 = vmul.f32 %v3246, 0.2
        %v3323 = vmul.f32 %v3274, 0.2
        %v3324 = vsel %vm3292, %v3076, %v3308
        %v3325 = vsel %vm3293, %v3104, %v3309
        %v3326 = vsel %vm3294, %v3132, %v3310
        %v3327 = vsel %vm3295, %v3160, %v3311
        %v3328 = vsel %vm3296, %v3188, %v3312
        %v3329 = vsel %vm3297, %v3216, %v3313
        %v3330 = vsel %vm3298, %v3244, %v3314
        %v3331 = vsel %vm3299, %v3272, %v3315
        %v3332 = vsel %vm3300, %v3078, %v3316
        %v3333 = vsel %vm3301, %v3106, %v3317
        %v3334 = vsel %vm3302, %v3134, %v3318
        %v3335 = vsel %vm3303, %v3162, %v3319
        %v3336 = vsel %vm3304, %v3190, %v3320
        %v3337 = vsel %vm3305, %v3218, %v3321
        %v3338 = vsel %vm3306, %v3246, %v3322
        %v3339 = vsel %vm3307, %v3274, %v3323
        %v3340 = vpack.c.bf16 %v3332, %v3324
        %v3341 = vpack.c.bf16 %v3333, %v3325
        %v3342 = vpack.c.bf16 %v3334, %v3326
        %v3343 = vpack.c.bf16 %v3335, %v3327
        %v3344 = vpack.c.bf16 %v3336, %v3328
        %v3345 = vpack.c.bf16 %v3337, %v3329
        %v3346 = vpack.c.bf16 %v3338, %v3330
        %v3347 = vpack.c.bf16 %v3339, %v3331
        %vm3348 = vcmask 130048
        %v3350 = vsel %vm3348, %v301, 0
        %3352 = vmatpush.bf16.msra.mxu0 0
        %3353 = vmatpush.bf16.msra.mxu0 0
        %3354 = vmatpush.bf16.msra.mxu0 0
        %3355 = vmatpush.bf16.msra.mxu0 0
        %3356 = vmatpush.bf16.msra.mxu0 0
        %3357 = vmatpush.bf16.msra.mxu0 0
        %3358 = vmatpush.bf16.msra.mxu0 0
        %3359 = vmatpush.bf16.msra.mxu0 %v3340
        %3360 = vmatmul.bf16.gmra.mxu0 %v3350
        %v3361 = vpop.f32.mrf.mxu0
        %v3362 = vadd.f32 0.0, %v3361
        %v3363 = vpop.f32.mrf.mxu0
        %3364 = vdwg.mxu0
        %3365 = vmatpush.bf16.msra.mxu0 0
        %3366 = vmatpush.bf16.msra.mxu0 0
        %3367 = vmatpush.bf16.msra.mxu0 0
        %3368 = vmatpush.bf16.msra.mxu0 0
        %3369 = vmatpush.bf16.msra.mxu0 0
        %3370 = vmatpush.bf16.msra.mxu0 0
        %3371 = vmatpush.bf16.msra.mxu0 0
        %3372 = vmatpush.bf16.msra.mxu0 %v3341
        %3373 = vmatmul.bf16.gmra.mxu0 %v3350
        %v3374 = vpop.f32.mrf.mxu0
        %v3375 = vadd.f32 0.0, %v3374
        %v3376 = vpop.f32.mrf.mxu0
        %3377 = vdwg.mxu0
        %3378 = vmatpush.bf16.msra.mxu0 0
        %3379 = vmatpush.bf16.msra.mxu0 0
        %3380 = vmatpush.bf16.msra.mxu0 0
        %3381 = vmatpush.bf16.msra.mxu0 0
        %3382 = vmatpush.bf16.msra.mxu0 0
        %3383 = vmatpush.bf16.msra.mxu0 0
        %3384 = vmatpush.bf16.msra.mxu0 0
        %3385 = vmatpush.bf16.msra.mxu0 %v3342
        %3386 = vmatmul.bf16.gmra.mxu0 %v3350
        %v3387 = vpop.f32.mrf.mxu0
        %v3388 = vadd.f32 0.0, %v3387
        %v3389 = vpop.f32.mrf.mxu0
        %3390 = vdwg.mxu0
        %3391 = vmatpush.bf16.msra.mxu0 0
        %3392 = vmatpush.bf16.msra.mxu0 0
        %3393 = vmatpush.bf16.msra.mxu0 0
        %3394 = vmatpush.bf16.msra.mxu0 0
        %3395 = vmatpush.bf16.msra.mxu0 0
        %3396 = vmatpush.bf16.msra.mxu0 0
        %3397 = vmatpush.bf16.msra.mxu0 0
        %3398 = vmatpush.bf16.msra.mxu0 %v3343
        %3399 = vmatmul.bf16.gmra.mxu0 %v3350
        %v3400 = vpop.f32.mrf.mxu0
        %v3401 = vadd.f32 0.0, %v3400
        %v3402 = vpop.f32.mrf.mxu0
        %3403 = vdwg.mxu0
        %3404 = vmatpush.bf16.msra.mxu0 0
        %3405 = vmatpush.bf16.msra.mxu0 0
        %3406 = vmatpush.bf16.msra.mxu0 0
        %3407 = vmatpush.bf16.msra.mxu0 0
        %3408 = vmatpush.bf16.msra.mxu0 0
        %3409 = vmatpush.bf16.msra.mxu0 0
        %3410 = vmatpush.bf16.msra.mxu0 0
        %3411 = vmatpush.bf16.msra.mxu0 %v3344
        %3412 = vmatmul.bf16.gmra.mxu0 %v3350
        %v3413 = vpop.f32.mrf.mxu0
        %v3414 = vadd.f32 0.0, %v3413
        %v3415 = vpop.f32.mrf.mxu0
        %3416 = vdwg.mxu0
        %3417 = vmatpush.bf16.msra.mxu0 0
        %3418 = vmatpush.bf16.msra.mxu0 0
        %3419 = vmatpush.bf16.msra.mxu0 0
        %3420 = vmatpush.bf16.msra.mxu0 0
        %3421 = vmatpush.bf16.msra.mxu0 0
        %3422 = vmatpush.bf16.msra.mxu0 0
        %3423 = vmatpush.bf16.msra.mxu0 0
        %3424 = vmatpush.bf16.msra.mxu0 %v3345
        %3425 = vmatmul.bf16.gmra.mxu0 %v3350
        %v3426 = vpop.f32.mrf.mxu0
        %v3427 = vadd.f32 0.0, %v3426
        %v3428 = vpop.f32.mrf.mxu0
        %3429 = vdwg.mxu0
        %3430 = vmatpush.bf16.msra.mxu0 0
        %3431 = vmatpush.bf16.msra.mxu0 0
        %3432 = vmatpush.bf16.msra.mxu0 0
        %3433 = vmatpush.bf16.msra.mxu0 0
        %3434 = vmatpush.bf16.msra.mxu0 0
        %3435 = vmatpush.bf16.msra.mxu0 0
        %3436 = vmatpush.bf16.msra.mxu0 0
        %3437 = vmatpush.bf16.msra.mxu0 %v3346
        %3438 = vmatmul.bf16.gmra.mxu0 %v3350
        %v3439 = vpop.f32.mrf.mxu0
        %v3440 = vadd.f32 0.0, %v3439
        %v3441 = vpop.f32.mrf.mxu0
        %3442 = vdwg.mxu0
        %3443 = vmatpush.bf16.msra.mxu0 0
        %3444 = vmatpush.bf16.msra.mxu0 0
        %3445 = vmatpush.bf16.msra.mxu0 0
        %3446 = vmatpush.bf16.msra.mxu0 0
        %3447 = vmatpush.bf16.msra.mxu0 0
        %3448 = vmatpush.bf16.msra.mxu0 0
        %3449 = vmatpush.bf16.msra.mxu0 0
        %3450 = vmatpush.bf16.msra.mxu0 %v3347
        %3451 = vmatmul.bf16.gmra.mxu0 %v3350
        %v3452 = vpop.f32.mrf.mxu0
        %v3453 = vadd.f32 0.0, %v3452
        %v3454 = vpop.f32.mrf.mxu0
        %3455 = vdwg.mxu0
        %v3456 = vmax.f32 %v3362, %v3375
        %v3457 = vmax.f32 %v3456, %v3388
        %v3458 = vmax.f32 %v3457, %v3401
        %v3459 = vmax.f32 %v3458, %v3414
        %v3460 = vmax.f32 %v3459, %v3427
        %v3461 = vmax.f32 %v3460, %v3440
        %v3462 = vmax.f32 %v3461, %v3453
        %v3463 = vsub.f32 %v3362, %v3462
        %v3464 = vmul.f32 %v3463, 1.442695
        %v3465 = vpow.pop %v3464
        %v3466 = vsub.f32 %v3375, %v3462
        %v3467 = vmul.f32 %v3466, 1.442695
        %v3468 = vpow.pop %v3467
        %v3469 = vsub.f32 %v3388, %v3462
        %v3470 = vmul.f32 %v3469, 1.442695
        %v3471 = vpow.pop %v3470
        %v3472 = vsub.f32 %v3401, %v3462
        %v3473 = vmul.f32 %v3472, 1.442695
        %v3474 = vpow.pop %v3473
        %v3475 = vsub.f32 %v3414, %v3462
        %v3476 = vmul.f32 %v3475, 1.442695
        %v3477 = vpow.pop %v3476
        %v3478 = vsub.f32 %v3427, %v3462
        %v3479 = vmul.f32 %v3478, 1.442695
        %v3480 = vpow.pop %v3479
        %v3481 = vsub.f32 %v3440, %v3462
        %v3482 = vmul.f32 %v3481, 1.442695
        %v3483 = vpow.pop %v3482
        %v3484 = vsub.f32 %v3453, %v3462
        %v3485 = vmul.f32 %v3484, 1.442695
        %v3486 = vpow.pop %v3485
        %v3487 = vadd.f32 %v3465, %v3468
        %v3488 = vadd.f32 %v3487, %v3471
        %v3489 = vadd.f32 %v3488, %v3474
        %v3490 = vadd.f32 %v3489, %v3477
        %v3491 = vadd.f32 %v3490, %v3480
        %v3492 = vadd.f32 %v3491, %v3483
        %v3493 = vadd.f32 %v3492, %v3486
        %v3494 = vrcp.pop %v3493
        %v3495 = vmul.f32 %v3493, %v3494
        %v3496 = vsub.f32 1.0, %v3495
        %v3497 = vmul.f32 %v3494, %v3496
        %v3498 = vadd.f32 %v3494, %v3497
        %vm3499 = vweird.f32 %v3493
        %vm3500 = vweird.f32 %v3494
        %vm3501 = vmor %vm3499, %vm3500
        %v3502 = vsel %vm3501, %v3494, %v3498
        %v3503 = vand.u32 2147483647, %v3493
        %vm3504 = vcmp.eq.f32.partialorder %v3503, 8.507059e+37
        %v3505 = vand.u32 %v3493, 2147483648
        %v3506 = vor.u32 1.1754944e-38, %v3505
        %v3507 = vsel %vm3504, %v3506, %v3502
        %v3508 = vmul.f32 1.0, %v3507
        %v3509 = vmul.f32 %v3465, %v3508
        %vm3510 = vcmask 1041408
        %v3511 = vsel %vm3510, %v3509, 0.0
        %v3512 = vrot.slane %v3511, 4
        %v3513 = vadd.f32 %v3511, %v3512
        %v3514 = vrot.slane %v3513, 2
        %v3515 = vadd.f32 %v3513, %v3514
        %v3516 = vrot.slane %v3515, 1
        %v3517 = vadd.f32 %v3515, %v3516
        %v3518 = vmul.f32 %v3517, 0.5
        %v3519 = vmul.f32 %v3468, %v3508
        %v3520 = vsel %vm3510, %v3519, 0.0
        %v3521 = vrot.slane %v3520, 4
        %v3522 = vadd.f32 %v3520, %v3521
        %v3523 = vrot.slane %v3522, 2
        %v3524 = vadd.f32 %v3522, %v3523
        %v3525 = vrot.slane %v3524, 1
        %v3526 = vadd.f32 %v3524, %v3525
        %v3527 = vmul.f32 %v3526, 0.5
        %v3528 = vmul.f32 %v3471, %v3508
        %v3529 = vsel %vm3510, %v3528, 0.0
        %v3530 = vrot.slane %v3529, 4
        %v3531 = vadd.f32 %v3529, %v3530
        %v3532 = vrot.slane %v3531, 2
        %v3533 = vadd.f32 %v3531, %v3532
        %v3534 = vrot.slane %v3533, 1
        %v3535 = vadd.f32 %v3533, %v3534
        %v3536 = vmul.f32 %v3535, 0.5
        %v3537 = vmul.f32 %v3474, %v3508
        %v3538 = vsel %vm3510, %v3537, 0.0
        %v3539 = vrot.slane %v3538, 4
        %v3540 = vadd.f32 %v3538, %v3539
        %v3541 = vrot.slane %v3540, 2
        %v3542 = vadd.f32 %v3540, %v3541
        %v3543 = vrot.slane %v3542, 1
        %v3544 = vadd.f32 %v3542, %v3543
        %v3545 = vmul.f32 %v3544, 0.5
        %v3546 = vmul.f32 %v3477, %v3508
        %v3547 = vsel %vm3510, %v3546, 0.0
        %v3548 = vrot.slane %v3547, 4
        %v3549 = vadd.f32 %v3547, %v3548
        %v3550 = vrot.slane %v3549, 2
        %v3551 = vadd.f32 %v3549, %v3550
        %v3552 = vrot.slane %v3551, 1
        %v3553 = vadd.f32 %v3551, %v3552
        %v3554 = vmul.f32 %v3553, 0.5
        %v3555 = vmul.f32 %v3480, %v3508
        %v3556 = vsel %vm3510, %v3555, 0.0
        %v3557 = vrot.slane %v3556, 4
        %v3558 = vadd.f32 %v3556, %v3557
        %v3559 = vrot.slane %v3558, 2
        %v3560 = vadd.f32 %v3558, %v3559
        %v3561 = vrot.slane %v3560, 1
        %v3562 = vadd.f32 %v3560, %v3561
        %v3563 = vmul.f32 %v3562, 0.5
        %v3564 = vmul.f32 %v3483, %v3508
        %v3565 = vsel %vm3510, %v3564, 0.0
        %v3566 = vrot.slane %v3565, 4
        %v3567 = vadd.f32 %v3565, %v3566
        %v3568 = vrot.slane %v3567, 2
        %v3569 = vadd.f32 %v3567, %v3568
        %v3570 = vrot.slane %v3569, 1
        %v3571 = vadd.f32 %v3569, %v3570
        %v3572 = vmul.f32 %v3571, 0.5
        %v3573 = vmul.f32 %v3486, %v3508
        %v3574 = vsel %vm3510, %v3573, 0.0
        %v3575 = vrot.slane %v3574, 4
        %v3576 = vadd.f32 %v3574, %v3575
        %v3577 = vrot.slane %v3576, 2
        %v3578 = vadd.f32 %v3576, %v3577
        %v3579 = vrot.slane %v3578, 1
        %v3580 = vadd.f32 %v3578, %v3579
        %v3581 = vmul.f32 %v3580, 0.5
        %v3582 = vld [vmem:[#allocation2] sm:$0xff]
        %v3583 = vld [vmem:[#allocation2 + $0x40] sm:$0xff]
        %v3584 = vmul.f32 %v3582, %v3518
        %v3585 = vmul.f32 %v3583, %v3518
        %v3586 = vld [vmem:[#allocation2 + $0x8] sm:$0xff]
        %v3587 = vld [vmem:[#allocation2 + $0x48] sm:$0xff]
        %v3588 = vmul.f32 %v3586, %v3527
        %v3589 = vmul.f32 %v3587, %v3527
        %v3590 = vmax.f32 %v3584, %v3588
        %v3591 = vmax.f32 %v3585, %v3589
        %v3592 = vld [vmem:[#allocation2 + $0x10] sm:$0xff]
        %v3593 = vld [vmem:[#allocation2 + $0x50] sm:$0xff]
        %v3594 = vmul.f32 %v3592, %v3536
        %v3595 = vmul.f32 %v3593, %v3536
        %v3596 = vmax.f32 %v3590, %v3594
        %v3597 = vmax.f32 %v3591, %v3595
        %v3598 = vld [vmem:[#allocation2 + $0x18] sm:$0xff]
        %v3599 = vld [vmem:[#allocation2 + $0x58] sm:$0xff]
        %v3600 = vmul.f32 %v3598, %v3545
        %v3601 = vmul.f32 %v3599, %v3545
        %v3602 = vmax.f32 %v3596, %v3600
        %v3603 = vmax.f32 %v3597, %v3601
        %v3604 = vld [vmem:[#allocation2 + $0x20] sm:$0xff]
        %v3605 = vld [vmem:[#allocation2 + $0x60] sm:$0xff]
        %v3606 = vmul.f32 %v3604, %v3554
        %v3607 = vmul.f32 %v3605, %v3554
        %v3608 = vmax.f32 %v3602, %v3606
        %v3609 = vmax.f32 %v3603, %v3607
        %v3610 = vld [vmem:[#allocation2 + $0x28] sm:$0xff]
        %v3611 = vld [vmem:[#allocation2 + $0x68] sm:$0xff]
        %v3612 = vmul.f32 %v3610, %v3563
        %v3613 = vmul.f32 %v3611, %v3563
        %v3614 = vmax.f32 %v3608, %v3612
        %v3615 = vmax.f32 %v3609, %v3613
        %v3616 = vld [vmem:[#allocation2 + $0x30] sm:$0xff]
        %v3617 = vld [vmem:[#allocation2 + $0x70] sm:$0xff]
        %v3618 = vmul.f32 %v3616, %v3572
        %v3619 = vmul.f32 %v3617, %v3572
        %v3620 = vmax.f32 %v3614, %v3618
        %v3621 = vmax.f32 %v3615, %v3619
        %v3622 = vld [vmem:[#allocation2 + $0x38] sm:$0xff]
        %v3623 = vld [vmem:[#allocation2 + $0x78] sm:$0xff]
        %v3624 = vmul.f32 %v3622, %v3581
        %v3625 = vmul.f32 %v3623, %v3581
        %v3626 = vmax.f32 %v3620, %v3624
        %v3627 = vmax.f32 %v3621, %v3625
        %s3628 = smul.u32 %s28, 128
        %s3629 = sshra.s32 %s3628, 7
        %s3630 = sand.u32 %s3628, 127
        %s3631 = smul.addr %s3629, 4
        %s3632 = scalar_lea.vmem %s297, %s3631
        %v3633 = vld [vmem:[%s3632] sm:$0xf]
        %v3634 = vld [vmem:[%s3632 + $0x8] sm:$0xf]
        %v3635 = vpack.c.bf16 %v3626, %v3626
        %v3636 = vpack.c.bf16 %v3627, %v3627
        %v3639 = vunpack.c.l.b16 %v3633
        %v3640 = vunpack.c.l.b16 %v3634
        %v3641 = vpack.c.b16 %v3640, %v3639
        %v3645 = vunpack.c.l.b16 %v3635
        %v3646 = vunpack.c.l.b16 %v3636
        %v3647 = vpack.c.b16 %v3646, %v3645
        %v3649 = vld [vmem:[#allocation6] sm:$0xf]
        %v3650 = vld [vmem:[#allocation6 + $0x4] sm:$0xf]
        %v3651 = vld [vmem:[#allocation6 + $0x8] sm:$0xf]
        %v3652 = vld [vmem:[#allocation6 + $0xc] sm:$0xf]
        %v3653 = vld [vmem:[%s4] sm:$0xff]
        %v3654 = vld [vmem:[%s4 + $0x8] sm:$0xff]
        %v3655 = vld [vmem:[%s4 + $0x10] sm:$0xff]
        %v3656 = vld [vmem:[%s4 + $0x18] sm:$0xff]
        %3658 = vset.pattern.permute.xlu0 0
        %3659 = vperm.xlu0 %3658, %v3653
        %v3660 = vpop.permute.xlu0 %3659
        %3663 = vset.pattern.permute.xlu0 0
        %3664 = vperm.xlu0 %3663, %v3654
        %v3665 = vpop.permute.xlu0 %3664
        %3668 = vset.pattern.permute.xlu0 0
        %3669 = vperm.xlu0 %3668, %v3655
        %v3670 = vpop.permute.xlu0 %3669
        %3673 = vset.pattern.permute.xlu0 0
        %3674 = vperm.xlu0 %3673, %v3656
        %v3675 = vpop.permute.xlu0 %3674
        %v3681 = vunpack.c.l.b16 %v3649
        %v3682 = vunpack.c.l.b16 %v3650
        %v3683 = vunpack.c.l.b16 %v3651
        %v3684 = vunpack.c.l.b16 %v3652
        %v3685 = vpack.c.b16 %v3682, %v3681
        %v3686 = vpack.c.b16 %v3684, %v3683
        %vm3687 = vcmask 261120
        %v3689 = vsel %vm3687, %v3685, 0
        %v3692 = vsel %vm3687, %v3686, 0
        %3694 = vmatpush.bf16.msra.mxu0 0
        %3695 = vmatpush.bf16.msra.mxu0 0
        %3696 = vmatpush.bf16.msra.mxu0 0
        %3697 = vmatpush.bf16.msra.mxu0 0
        %3698 = vmatpush.bf16.msra.mxu0 0
        %3699 = vmatpush.bf16.msra.mxu0 0
        %3700 = vmatpush.bf16.msra.mxu0 %v3647
        %3701 = vmatpush.bf16.msra.mxu0 %v3641
        %3702 = vmatmul.bf16.gmra.mxu0 %v3689
        %v3703 = vpop.f32.mrf.mxu0
        %v3704 = vadd.f32 %v3660, %v3703
        %v3705 = vpop.f32.mrf.mxu0
        %v3706 = vadd.f32 %v3665, %v3705
        %3707 = vmatmul.bf16.gmra.mxu0 %v3692
        %v3708 = vpop.f32.mrf.mxu0
        %v3709 = vadd.f32 %v3670, %v3708
        %v3710 = vpop.f32.mrf.mxu0
        %v3711 = vadd.f32 %v3675, %v3710
        %3712 = vdwg.mxu0
        %3713 = vst [vmem:[%s292] sm:$0xff] %v3704
        %3714 = vst [vmem:[%s292 + $0x8] sm:$0xff] %v3706
        %3715 = vst [vmem:[%s292 + $0x10] sm:$0xff] %v3709
        %3716 = vst [vmem:[%s292 + $0x18] sm:$0xff] %v3711
        %s3717 = sand.u32 %s162, 1
        %s3718 = scalar_lea.sflag [#allocation5], %s3717
        %s3719 = sand.u32 %s162, 1
        %s3720 = smul.addr %s3719, 32
        %s3721 = scalar_lea.vmem [#allocation8], %s3720
        // Predicated region
        $region49: #{tpu_custom_call.1} parent=39 // pred_check
          %p3722 = pneg %p172
        $region50: #{tpu_custom_call.1} parent=39 // pred_check_branch
          %3724 = sbr.rel (%p3722) target = $region52
        $region51: #{tpu_custom_call.1} parent=39 // pred_region
          %3726 = vsyncadd %s3718, 0
          %s3727 = smul.addr %s27, 8
          %s3728 = sadd.s32 %s28, %s3727
          %s3729 = smul.addr %s3728, 8
          %s3730 = scalar_lea.hbm %s5, %s3729
          %s3731 = sshll.u32 %s3721, 4
          %s3732 = int_to_ptr.vmem [resolvable:$true] %s3731
          %s3733 = sshll.u32 %s3730, 4
          %s3734 = int_to_ptr.hbm [resolvable:$true] %s3733
          %3739 = dma.vmem_to_hbm [thread:$0]  %s3732, 512, %s3734, %s3718, 128, 256, 8
        $region52: #{tpu_custom_call.1} parent=39 // pred_fallthru
          _
      $region40: #{tpu_custom_call.1} parent=5 // pred_fallthru
        _
      %p3740 = scmp.le.s32.totalorder 2, %s18
      // Predicated region
      $region53: #{tpu_custom_call.1} parent=5 // pred_check
        %p3741 = pneg %p3740
      $region54: #{tpu_custom_call.1} parent=5 // pred_check_branch
        %3743 = sbr.rel (%p3741) target = $region56
      $region55: #{tpu_custom_call.1} parent=5 // pred_region
        %s3744 = ssub.s32 %s18, 2
        // Predicated region
        $region57: #{tpu_custom_call.1} parent=55 // pred_check
          %p3745 = pneg %p178
        $region58: #{tpu_custom_call.1} parent=55 // pred_check_branch
          %3747 = sbr.rel (%p3745) target = $region60
        $region59: #{tpu_custom_call.1} parent=55 // pred_region
          %s3748 = sand.u32 %s163, 1
          %s3749 = scalar_lea.sflag [#allocation5], %s3748
          %s3750 = sand.u32 %s163, 1
          %s3751 = smul.addr %s3750, 32
          %s3752 = scalar_lea.vmem [#allocation8], %s3751
          %3754 = dma.done %s3749, 512
        $region60: #{tpu_custom_call.1} parent=55 // pred_fallthru
          _
      $region56: #{tpu_custom_call.1} parent=5 // pred_fallthru
        _
    $region6: #{tpu_custom_call.1} parent=1 // loop_footer
      %s22 = sadd.s32 1, %s18
    $region7: #{tpu_custom_call.1} parent=1 // loop_footer_branch
      %17 = sbr.rel target = $region3
    $region8: #{tpu_custom_call.1} parent=1 // loop_exit
      _
    %3755 = vsyncpa [#allocation4], 1
    %s3756 = scalar_lea.sflag [#allocation4], 1
    %3757 = vsyncpa %s3756, 1
    %3758 = vsyncpa [#allocation7], 1
    %3759 = vsyncpa [#allocation5], 1
    %s3760 = scalar_lea.sflag [#allocation5], 1
    %3761 = vsyncpa %s3760, 1

</llo_original>
